<compile_context>
chip_gen: v5e
topology: v5e:2x2
jax: 0.10.0
libtpu: 0.0.40
codegen_flags: <defaults>
</compile_context>

<pallas_src>
import numpy as np
import jax
import jax.numpy as jnp
from jax import lax
from jax.experimental import pallas as pl
from jax.experimental.pallas import tpu as pltpu

K = 5
STRIDE = 2
BN_EPS = 1e-5
LRELU_SLOPE = 0.2


# ----------------------------- host-side helpers -----------------------------
def _im2col(x, k=K, s=STRIDE):
    """x: (N, C, H, W) -> patches (N*Ho*Wo, C*k*k), column order (cin, kh, kw)."""
    n, c, h, w = x.shape
    ho = (h - k) // s + 1
    wo = (w - k) // s + 1
    cols = []
    for i in range(k):
        for j in range(k):
            cols.append(x[:, :, i:i + s * ho:s, j:j + s * wo:s])      # (N, C, Ho, Wo)
    p = jnp.stack(cols, axis=2)                                        # (N, C, k*k, Ho, Wo)
    p = p.transpose(0, 3, 4, 1, 2).reshape(n * ho * wo, c * k * k)
    return p, ho, wo


def _conv_w_matmul(w):
    """PyTorch (Cout, Cin, K, K) -> (Cin*K*K, Cout); matches _im2col column order."""
    return w.reshape(w.shape[0], -1).T


def _conv_w_stack(w):
    """PyTorch (Cout, Cin, K, K) -> (K*K*Cin, Cout); row order (kh, kw, cin)."""
    return jnp.transpose(w, (2, 3, 1, 0)).reshape(-1, w.shape[0])


def _build_sel_stack(hi, wi, ho, wo, k=K, s=STRIDE):
    """Per-IMAGE 0/1 gather matrix, rows stacked (tap, out_pos):
         sel[p*ho*wo + (oh*wo+ow), (s*oh+kh)*wi + (s*ow+kw)] = 1,  p = kh*k + kw.
       Batch independent; vectorized build; shipped as bf16 (exact for 0/1)."""
    kh, kw = np.meshgrid(np.arange(k), np.arange(k), indexing="ij")        # (k, k)
    oh, ow = np.meshgrid(np.arange(ho), np.arange(wo), indexing="ij")      # (ho, wo)
    tgt = ((s * oh)[None, None] + kh[..., None, None]) * wi \
        + ((s * ow)[None, None] + kw[..., None, None])                     # (k,k,ho,wo)
    tgt = tgt.reshape(-1)
    sel = np.zeros((k * k * ho * wo, hi * wi), np.float32)
    sel[np.arange(sel.shape[0]), tgt] = 1.0
    return jnp.asarray(sel, jnp.bfloat16)


# --------------------------------- fused kernel ---------------------------------
def _dv_fused_kernel(p1_ref, w1_ref, g1_ref, b1_ref,
                     sel2_ref, w2_ref, g2_ref, b2_ref,
                     w3_ref, wl_ref, bl_ref,
                     o_ref, p2_ref, p3_ref):
    c1 = w1_ref.shape[1]                      # 12
    c2 = w2_ref.shape[1]                      # 24
    taps = w2_ref.shape[0] // c1              # 25
    hw1 = sel2_ref.shape[1]                   # 196  (layer-1 output spatial / image)
    out2 = sel2_ref.shape[0] // taps          # 25   (layer-2 output spatial / image)
    taps3 = w3_ref.shape[0] // c2             # 25   (== out2: full 5x5 receptive field)
    n_img = p1_ref.shape[0] // hw1            # batch N

    def bn_lrelu(y, g, b):
        # Train-mode BatchNorm (batch stats over rows = (n,h,w), biased variance,
        # two-pass centered variance), folded scale/shift, then LeakyReLU(0.2).
        mean = jnp.mean(y, axis=0, keepdims=True)
        d = y - mean
        var = jnp.mean(d * d, axis=0, keepdims=True)
        t = d * (g * lax.rsqrt(var + BN_EPS)) + b
        return jnp.where(t > 0, t, LRELU_SLOPE * t)

    # ---- layer 1: conv (host im2col) + BN + LeakyReLU -> (N*14*14, 12) ----
    y1 = jnp.dot(p1_ref[...], w1_ref[...], preferred_element_type=jnp.float32)
    y1 = bn_lrelu(y1, g1_ref[...], b1_ref[...])

    # ---- layer 2: ONE per-image gather dot, regroup (tap,out) rows -> (tap,cin)
    #      lanes through VMEM scratch, then ONE weight dot ----
    sel2 = sel2_ref[...].astype(jnp.float32)                     # exact 0/1
    for n in range(n_img):
        ps = jnp.dot(sel2, y1[n * hw1:(n + 1) * hw1, :],
                     preferred_element_type=jnp.float32)         # (taps*out2, c1)
        for p in range(taps):
            p2_ref[n * out2:(n + 1) * out2, p * c1:(p + 1) * c1] = \
                ps[p * out2:(p + 1) * out2, :]
    y2 = jnp.dot(p2_ref[...], w2_ref[...], preferred_element_type=jnp.float32)
    y2 = bn_lrelu(y2, g2_ref[...], b2_ref[...])                  # (N*25, 24)

    # ---- layer 3: 5x5 -> 1x1, gather is the identity; regroup each image's 25
    #      rows onto the lane axis, then ONE weight dot + tanh ----
    for n in range(n_img):
        for p in range(taps3):
            p3_ref[n:n + 1, p * c2:(p + 1) * c2] = \
                y2[n * out2 + p:n * out2 + p + 1, :]
    y3 = jnp.tanh(jnp.dot(p3_ref[...], w3_ref[...],
                          preferred_element_type=jnp.float32))   # (N, 48)

    # ---- linear + sigmoid ----
    logits = jnp.dot(y3, wl_ref[...], preferred_element_type=jnp.float32) + bl_ref[...]
    o_ref[...] = jax.nn.sigmoid(logits)


# ---------------------------------- Dv forward ----------------------------------
def dv_forward(x, kp):
    n = x.shape[0]
    p1, h1, _ = _im2col(x)            # only host-side glue: layer-1 patch extraction
    h2 = (h1 - K) // STRIDE + 1
    out2 = h2 * h2

    args = (p1, kp["w1"], kp["g1"], kp["b1"],
            kp["sel2"], kp["w2s"], kp["g2"], kp["b2"],
            kp["w3s"], kp["wl"], kp["bl"])
    vmem = pl.BlockSpec(memory_space=pltpu.MemorySpace.VMEM)
    out = pl.pallas_call(
        _dv_fused_kernel,
        out_shape=jax.ShapeDtypeStruct((n, 1), jnp.float32),
        in_specs=[vmem] * len(args),
        out_specs=vmem,
        scratch_shapes=[
            pltpu.VMEM((n * out2, kp["w2s"].shape[0]), jnp.float32),  # layer-2 patches
            pltpu.VMEM((n, kp["w3s"].shape[0]), jnp.float32),         # layer-3 patches
        ],
    )(*args)
    return out[:, 0]  # squeeze(1)


# ------------------------------ pure-JAX reference ------------------------------
def dv_reference(x, rp):
    n = x.shape[0]
    h = x
    for (w, g, b) in rp["conv_bn"]:
        p, ho, wo = _im2col(h)
        y = p @ w
        mean = y.mean(axis=0, keepdims=True)
        var = ((y - mean) ** 2).mean(axis=0, keepdims=True)
        y = (y - mean) / jnp.sqrt(var + BN_EPS) * g + b
        y = jnp.where(y > 0, y, LRELU_SLOPE * y)
        h = y.reshape(n, ho, wo, w.shape[1]).transpose(0, 3, 1, 2)
    p, ho, wo = _im2col(h)
    y = jnp.tanh(p @ rp["conv_final"])
    h = y.reshape(n, ho, wo, rp["conv_final"].shape[1]).transpose(0, 3, 1, 2)
    flat = h.reshape(n, -1)
    wl, bl = rp["linear"]
    return jax.nn.sigmoid(flat @ wl + bl)[:, 0]


# -------------------------------------- main --------------------------------------
if __name__ == "__main__":
    N, NC, ISIZE, NVF = 2, 3, 32, 12   # final flatten == 48 -> matches nn.Linear(48, 1)

    key = jax.random.PRNGKey(0)
    ks = jax.random.split(key, 10)

    # Raw PyTorch-shaped parameters.
    w1_t = 0.05 * jax.random.normal(ks[0], (NVF, NC, K, K), jnp.float32)
    w2_t = 0.05 * jax.random.normal(ks[1], (NVF * 2, NVF, K, K), jnp.float32)
    w3_t = 0.05 * jax.random.normal(ks[2], (NVF * 4, NVF * 2, K, K), jnp.float32)
    wl_t = 0.05 * jax.random.normal(ks[3], (1, 48), jnp.float32)   # nn.Linear weight
    bl_t = 0.1 * jax.random.normal(ks[9], (1,), jnp.float32)       # nn.Linear bias
    g1 = 1.0 + 0.1 * jax.random.normal(ks[5], (1, NVF), jnp.float32)
    b1 = 0.1 * jax.random.normal(ks[6], (1, NVF), jnp.float32)
    g2 = 1.0 + 0.1 * jax.random.normal(ks[7], (1, NVF * 2), jnp.float32)
    b2 = 0.1 * jax.random.normal(ks[8], (1, NVF * 2), jnp.float32)

    x = jax.random.normal(ks[4], (N, NC, ISIZE, ISIZE), jnp.float32)

    # Spatial pyramid: 32 -> 14 -> 5 -> 1.
    H1 = (ISIZE - K) // STRIDE + 1
    H2 = (H1 - K) // STRIDE + 1

    kernel_params = {
        "w1": _conv_w_matmul(w1_t), "g1": g1, "b1": b1,
        "sel2": _build_sel_stack(H1, H1, H2, H2),     # per-image, bf16, (625, 196)
        "w2s": _conv_w_stack(w2_t), "g2": g2, "b2": b2,
        "w3s": _conv_w_stack(w3_t),
        "wl": wl_t.T, "bl": bl_t.reshape(1, 1),
    }
    ref_params = {
        "conv_bn": [(_conv_w_matmul(w1_t), g1, b1),
                    (_conv_w_matmul(w2_t), g2, b2)],
        "conv_final": _conv_w_matmul(w3_t),
        "linear": (wl_t.T, bl_t.reshape(1, 1)),
    }

    fwd = jax.jit(dv_forward)
    out = jax.block_until_ready(fwd(x, kernel_params))
    ref = dv_reference(x, ref_params)

    assert out.shape == (N,), out.shape
    assert jnp.allclose(out, ref, atol=5e-3), (out, ref)
    print("KERNEL_OK")
</pallas_src>

<mosaic_0001>
module attributes {stable_mosaic.version = 11 : i64} {
  func.func @_dv_fused_kernel(%arg0: memref<392x75xf32, #tpu.memory_space<vmem>>, %arg1: memref<75x12xf32, #tpu.memory_space<vmem>>, %arg2: memref<1x12xf32, #tpu.memory_space<vmem>>, %arg3: memref<1x12xf32, #tpu.memory_space<vmem>>, %arg4: memref<625x196xbf16, #tpu.memory_space<vmem>>, %arg5: memref<300x24xf32, #tpu.memory_space<vmem>>, %arg6: memref<1x24xf32, #tpu.memory_space<vmem>>, %arg7: memref<1x24xf32, #tpu.memory_space<vmem>>, %arg8: memref<600x48xf32, #tpu.memory_space<vmem>>, %arg9: memref<48x1xf32, #tpu.memory_space<vmem>>, %arg10: memref<1x1xf32, #tpu.memory_space<vmem>>, %arg11: memref<2x1xf32, #tpu.memory_space<vmem>>, %arg12: memref<50x300xf32, #tpu.memory_space<vmem>>, %arg13: memref<2x600xf32, #tpu.memory_space<vmem>>) attributes {dimension_semantics = [], scalar_prefetch = 0 : i64, scratch_operands = 2 : i64, tpu.core_type = #tpu.core_type<tc>} {
    %c0 = arith.constant 0 : index
    %c0_0 = arith.constant 0 : index
    %0 = vector.load %arg0[%c0, %c0_0] : memref<392x75xf32, #tpu.memory_space<vmem>>, vector<392x75xf32>
    %c0_1 = arith.constant 0 : index
    %c0_2 = arith.constant 0 : index
    %1 = vector.load %arg1[%c0_1, %c0_2] : memref<75x12xf32, #tpu.memory_space<vmem>>, vector<75x12xf32>
    %cst = arith.constant dense<0.000000e+00> : vector<392x12xf32>
    %2 = tpu.matmul %0, %1, %cst {dimension_numbers = #tpu.dot_dimension_numbers<[1], [0], [0], [1], [0, 0, 1, 1], [], []>} : vector<392x75xf32>, vector<75x12xf32>, vector<392x12xf32> -> vector<392x12xf32>
    %c0_3 = arith.constant 0 : index
    %c0_4 = arith.constant 0 : index
    %3 = vector.load %arg2[%c0_3, %c0_4] : memref<1x12xf32, #tpu.memory_space<vmem>>, vector<1x12xf32>
    %c0_5 = arith.constant 0 : index
    %c0_6 = arith.constant 0 : index
    %4 = vector.load %arg3[%c0_5, %c0_6] : memref<1x12xf32, #tpu.memory_space<vmem>>, vector<1x12xf32>
    %cst_7 = arith.constant dense<0.000000e+00> : vector<12xf32>
    %5 = vector.multi_reduction <add>, %2, %cst_7 [0] : vector<392x12xf32> to vector<12xf32>
    %6 = vector.shape_cast %5 : vector<12xf32> to vector<1x12xf32>
    %cst_8 = arith.constant 3.920000e+02 : f32
    %7 = vector.broadcast %cst_8 : f32 to vector<1x12xf32>
    %8 = arith.divf %6, %7 : vector<1x12xf32>
    %9 = vector.broadcast %8 : vector<1x12xf32> to vector<392x12xf32>
    %10 = arith.subf %2, %9 : vector<392x12xf32>
    %11 = arith.mulf %10, %10 : vector<392x12xf32>
    %cst_9 = arith.constant dense<0.000000e+00> : vector<12xf32>
    %12 = vector.multi_reduction <add>, %11, %cst_9 [0] : vector<392x12xf32> to vector<12xf32>
    %13 = vector.shape_cast %12 : vector<12xf32> to vector<1x12xf32>
    %cst_10 = arith.constant 3.920000e+02 : f32
    %14 = vector.broadcast %cst_10 : f32 to vector<1x12xf32>
    %15 = arith.divf %13, %14 : vector<1x12xf32>
    %cst_11 = arith.constant 9.99999974E-6 : f32
    %16 = vector.broadcast %cst_11 : f32 to vector<1x12xf32>
    %17 = arith.addf %15, %16 : vector<1x12xf32>
    %18 = math.rsqrt %17 : vector<1x12xf32>
    %19 = arith.mulf %3, %18 : vector<1x12xf32>
    %20 = vector.broadcast %19 : vector<1x12xf32> to vector<392x12xf32>
    %21 = arith.mulf %10, %20 : vector<392x12xf32>
    %22 = vector.broadcast %4 : vector<1x12xf32> to vector<392x12xf32>
    %23 = arith.addf %21, %22 : vector<392x12xf32>
    %cst_12 = arith.constant 0.000000e+00 : f32
    %24 = vector.broadcast %cst_12 : f32 to vector<392x12xf32>
    %25 = arith.cmpf ogt, %23, %24 : vector<392x12xf32>
    %cst_13 = arith.constant 2.000000e-01 : f32
    %26 = vector.broadcast %cst_13 : f32 to vector<392x12xf32>
    %27 = arith.mulf %26, %23 : vector<392x12xf32>
    %28 = arith.select %25, %23, %27 : vector<392x12xi1>, vector<392x12xf32>
    %c0_14 = arith.constant 0 : index
    %c0_15 = arith.constant 0 : index
    %29 = vector.load %arg4[%c0_14, %c0_15] : memref<625x196xbf16, #tpu.memory_space<vmem>>, vector<625x196xbf16>
    %30 = arith.extf %29 : vector<625x196xbf16> to vector<625x196xf32>
    %31 = vector.extract_strided_slice %28 {offsets = [0, 0], sizes = [196, 12], strides = [1, 1]} : vector<392x12xf32> to vector<196x12xf32>
    %cst_16 = arith.constant dense<0.000000e+00> : vector<625x12xf32>
    %32 = tpu.matmul %30, %31, %cst_16 {dimension_numbers = #tpu.dot_dimension_numbers<[1], [0], [0], [1], [0, 0, 1, 1], [], []>} : vector<625x196xf32>, vector<196x12xf32>, vector<625x12xf32> -> vector<625x12xf32>
    %33 = vector.extract_strided_slice %32 {offsets = [0, 0], sizes = [25, 12], strides = [1, 1]} : vector<625x12xf32> to vector<25x12xf32>
    %c0_17 = arith.constant 0 : index
    %c0_18 = arith.constant 0 : index
    %34 = vector.load %arg12[%c0_17, %c0_18] : memref<50x300xf32, #tpu.memory_space<vmem>>, vector<25x12xf32>
    tpu.vector_store %arg12[%c0_17, %c0_18], %33 {strides = array<i32>} : memref<50x300xf32, #tpu.memory_space<vmem>>, vector<25x12xf32>,
    %35 = vector.extract_strided_slice %32 {offsets = [25, 0], sizes = [25, 12], strides = [1, 1]} : vector<625x12xf32> to vector<25x12xf32>
    %c0_19 = arith.constant 0 : index
    %c12 = arith.constant 12 : index
    %36 = vector.load %arg12[%c0_19, %c12] : memref<50x300xf32, #tpu.memory_space<vmem>>, vector<25x12xf32>
    tpu.vector_store %arg12[%c0_19, %c12], %35 {strides = array<i32>} : memref<50x300xf32, #tpu.memory_space<vmem>>, vector<25x12xf32>,
    %37 = vector.extract_strided_slice %32 {offsets = [50, 0], sizes = [25, 12], strides = [1, 1]} : vector<625x12xf32> to vector<25x12xf32>
    %c0_20 = arith.constant 0 : index
    %c24 = arith.constant 24 : index
    %38 = vector.load %arg12[%c0_20, %c24] : memref<50x300xf32, #tpu.memory_space<vmem>>, vector<25x12xf32>
    tpu.vector_store %arg12[%c0_20, %c24], %37 {strides = array<i32>} : memref<50x300xf32, #tpu.memory_space<vmem>>, vector<25x12xf32>,
    %39 = vector.extract_strided_slice %32 {offsets = [75, 0], sizes = [25, 12], strides = [1, 1]} : vector<625x12xf32> to vector<25x12xf32>
    %c0_21 = arith.constant 0 : index
    %c36 = arith.constant 36 : index
    %40 = vector.load %arg12[%c0_21, %c36] : memref<50x300xf32, #tpu.memory_space<vmem>>, vector<25x12xf32>
    tpu.vector_store %arg12[%c0_21, %c36], %39 {strides = array<i32>} : memref<50x300xf32, #tpu.memory_space<vmem>>, vector<25x12xf32>,
    %41 = vector.extract_strided_slice %32 {offsets = [100, 0], sizes = [25, 12], strides = [1, 1]} : vector<625x12xf32> to vector<25x12xf32>
    %c0_22 = arith.constant 0 : index
    %c48 = arith.constant 48 : index
    %42 = vector.load %arg12[%c0_22, %c48] : memref<50x300xf32, #tpu.memory_space<vmem>>, vector<25x12xf32>
    tpu.vector_store %arg12[%c0_22, %c48], %41 {strides = array<i32>} : memref<50x300xf32, #tpu.memory_space<vmem>>, vector<25x12xf32>,
    %43 = vector.extract_strided_slice %32 {offsets = [125, 0], sizes = [25, 12], strides = [1, 1]} : vector<625x12xf32> to vector<25x12xf32>
    %c0_23 = arith.constant 0 : index
    %c60 = arith.constant 60 : index
    %44 = vector.load %arg12[%c0_23, %c60] : memref<50x300xf32, #tpu.memory_space<vmem>>, vector<25x12xf32>
    tpu.vector_store %arg12[%c0_23, %c60], %43 {strides = array<i32>} : memref<50x300xf32, #tpu.memory_space<vmem>>, vector<25x12xf32>,
    %45 = vector.extract_strided_slice %32 {offsets = [150, 0], sizes = [25, 12], strides = [1, 1]} : vector<625x12xf32> to vector<25x12xf32>
    %c0_24 = arith.constant 0 : index
    %c72 = arith.constant 72 : index
    %46 = vector.load %arg12[%c0_24, %c72] : memref<50x300xf32, #tpu.memory_space<vmem>>, vector<25x12xf32>
    tpu.vector_store %arg12[%c0_24, %c72], %45 {strides = array<i32>} : memref<50x300xf32, #tpu.memory_space<vmem>>, vector<25x12xf32>,
    %47 = vector.extract_strided_slice %32 {offsets = [175, 0], sizes = [25, 12], strides = [1, 1]} : vector<625x12xf32> to vector<25x12xf32>
    %c0_25 = arith.constant 0 : index
    %c84 = arith.constant 84 : index
    %48 = vector.load %arg12[%c0_25, %c84] : memref<50x300xf32, #tpu.memory_space<vmem>>, vector<25x12xf32>
    tpu.vector_store %arg12[%c0_25, %c84], %47 {strides = array<i32>} : memref<50x300xf32, #tpu.memory_space<vmem>>, vector<25x12xf32>,
    %49 = vector.extract_strided_slice %32 {offsets = [200, 0], sizes = [25, 12], strides = [1, 1]} : vector<625x12xf32> to vector<25x12xf32>
    %c0_26 = arith.constant 0 : index
    %c96 = arith.constant 96 : index
    %50 = vector.load %arg12[%c0_26, %c96] : memref<50x300xf32, #tpu.memory_space<vmem>>, vector<25x12xf32>
    tpu.vector_store %arg12[%c0_26, %c96], %49 {strides = array<i32>} : memref<50x300xf32, #tpu.memory_space<vmem>>, vector<25x12xf32>,
    %51 = vector.extract_strided_slice %32 {offsets = [225, 0], sizes = [25, 12], strides = [1, 1]} : vector<625x12xf32> to vector<25x12xf32>
    %c0_27 = arith.constant 0 : index
    %c108 = arith.constant 108 : index
    %52 = vector.load %arg12[%c0_27, %c108] : memref<50x300xf32, #tpu.memory_space<vmem>>, vector<25x12xf32>
    tpu.vector_store %arg12[%c0_27, %c108], %51 {strides = array<i32>} : memref<50x300xf32, #tpu.memory_space<vmem>>, vector<25x12xf32>,
    %53 = vector.extract_strided_slice %32 {offsets = [250, 0], sizes = [25, 12], strides = [1, 1]} : vector<625x12xf32> to vector<25x12xf32>
    %c0_28 = arith.constant 0 : index
    %c120 = arith.constant 120 : index
    %54 = vector.load %arg12[%c0_28, %c120] : memref<50x300xf32, #tpu.memory_space<vmem>>, vector<25x12xf32>
    tpu.vector_store %arg12[%c0_28, %c120], %53 {strides = array<i32>} : memref<50x300xf32, #tpu.memory_space<vmem>>, vector<25x12xf32>,
    %55 = vector.extract_strided_slice %32 {offsets = [275, 0], sizes = [25, 12], strides = [1, 1]} : vector<625x12xf32> to vector<25x12xf32>
    %c0_29 = arith.constant 0 : index
    %c132 = arith.constant 132 : index
    %56 = vector.load %arg12[%c0_29, %c132] : memref<50x300xf32, #tpu.memory_space<vmem>>, vector<25x12xf32>
    tpu.vector_store %arg12[%c0_29, %c132], %55 {strides = array<i32>} : memref<50x300xf32, #tpu.memory_space<vmem>>, vector<25x12xf32>,
    %57 = vector.extract_strided_slice %32 {offsets = [300, 0], sizes = [25, 12], strides = [1, 1]} : vector<625x12xf32> to vector<25x12xf32>
    %c0_30 = arith.constant 0 : index
    %c144 = arith.constant 144 : index
    %58 = vector.load %arg12[%c0_30, %c144] : memref<50x300xf32, #tpu.memory_space<vmem>>, vector<25x12xf32>
    tpu.vector_store %arg12[%c0_30, %c144], %57 {strides = array<i32>} : memref<50x300xf32, #tpu.memory_space<vmem>>, vector<25x12xf32>,
    %59 = vector.extract_strided_slice %32 {offsets = [325, 0], sizes = [25, 12], strides = [1, 1]} : vector<625x12xf32> to vector<25x12xf32>
    %c0_31 = arith.constant 0 : index
    %c156 = arith.constant 156 : index
    %60 = vector.load %arg12[%c0_31, %c156] : memref<50x300xf32, #tpu.memory_space<vmem>>, vector<25x12xf32>
    tpu.vector_store %arg12[%c0_31, %c156], %59 {strides = array<i32>} : memref<50x300xf32, #tpu.memory_space<vmem>>, vector<25x12xf32>,
    %61 = vector.extract_strided_slice %32 {offsets = [350, 0], sizes = [25, 12], strides = [1, 1]} : vector<625x12xf32> to vector<25x12xf32>
    %c0_32 = arith.constant 0 : index
    %c168 = arith.constant 168 : index
    %62 = vector.load %arg12[%c0_32, %c168] : memref<50x300xf32, #tpu.memory_space<vmem>>, vector<25x12xf32>
    tpu.vector_store %arg12[%c0_32, %c168], %61 {strides = array<i32>} : memref<50x300xf32, #tpu.memory_space<vmem>>, vector<25x12xf32>,
    %63 = vector.extract_strided_slice %32 {offsets = [375, 0], sizes = [25, 12], strides = [1, 1]} : vector<625x12xf32> to vector<25x12xf32>
    %c0_33 = arith.constant 0 : index
    %c180 = arith.constant 180 : index
    %64 = vector.load %arg12[%c0_33, %c180] : memref<50x300xf32, #tpu.memory_space<vmem>>, vector<25x12xf32>
    tpu.vector_store %arg12[%c0_33, %c180], %63 {strides = array<i32>} : memref<50x300xf32, #tpu.memory_space<vmem>>, vector<25x12xf32>,
    %65 = vector.extract_strided_slice %32 {offsets = [400, 0], sizes = [25, 12], strides = [1, 1]} : vector<625x12xf32> to vector<25x12xf32>
    %c0_34 = arith.constant 0 : index
    %c192 = arith.constant 192 : index
    %66 = vector.load %arg12[%c0_34, %c192] : memref<50x300xf32, #tpu.memory_space<vmem>>, vector<25x12xf32>
    tpu.vector_store %arg12[%c0_34, %c192], %65 {strides = array<i32>} : memref<50x300xf32, #tpu.memory_space<vmem>>, vector<25x12xf32>,
    %67 = vector.extract_strided_slice %32 {offsets = [425, 0], sizes = [25, 12], strides = [1, 1]} : vector<625x12xf32> to vector<25x12xf32>
    %c0_35 = arith.constant 0 : index
    %c204 = arith.constant 204 : index
    %68 = vector.load %arg12[%c0_35, %c204] : memref<50x300xf32, #tpu.memory_space<vmem>>, vector<25x12xf32>
    tpu.vector_store %arg12[%c0_35, %c204], %67 {strides = array<i32>} : memref<50x300xf32, #tpu.memory_space<vmem>>, vector<25x12xf32>,
    %69 = vector.extract_strided_slice %32 {offsets = [450, 0], sizes = [25, 12], strides = [1, 1]} : vector<625x12xf32> to vector<25x12xf32>
    %c0_36 = arith.constant 0 : index
    %c216 = arith.constant 216 : index
    %70 = vector.load %arg12[%c0_36, %c216] : memref<50x300xf32, #tpu.memory_space<vmem>>, vector<25x12xf32>
    tpu.vector_store %arg12[%c0_36, %c216], %69 {strides = array<i32>} : memref<50x300xf32, #tpu.memory_space<vmem>>, vector<25x12xf32>,
    %71 = vector.extract_strided_slice %32 {offsets = [475, 0], sizes = [25, 12], strides = [1, 1]} : vector<625x12xf32> to vector<25x12xf32>
    %c0_37 = arith.constant 0 : index
    %c228 = arith.constant 228 : index
    %72 = vector.load %arg12[%c0_37, %c228] : memref<50x300xf32, #tpu.memory_space<vmem>>, vector<25x12xf32>
    tpu.vector_store %arg12[%c0_37, %c228], %71 {strides = array<i32>} : memref<50x300xf32, #tpu.memory_space<vmem>>, vector<25x12xf32>,
    %73 = vector.extract_strided_slice %32 {offsets = [500, 0], sizes = [25, 12], strides = [1, 1]} : vector<625x12xf32> to vector<25x12xf32>
    %c0_38 = arith.constant 0 : index
    %c240 = arith.constant 240 : index
    %74 = vector.load %arg12[%c0_38, %c240] : memref<50x300xf32, #tpu.memory_space<vmem>>, vector<25x12xf32>
    tpu.vector_store %arg12[%c0_38, %c240], %73 {strides = array<i32>} : memref<50x300xf32, #tpu.memory_space<vmem>>, vector<25x12xf32>,
    %75 = vector.extract_strided_slice %32 {offsets = [525, 0], sizes = [25, 12], strides = [1, 1]} : vector<625x12xf32> to vector<25x12xf32>
    %c0_39 = arith.constant 0 : index
    %c252 = arith.constant 252 : index
    %76 = vector.load %arg12[%c0_39, %c252] : memref<50x300xf32, #tpu.memory_space<vmem>>, vector<25x12xf32>
    tpu.vector_store %arg12[%c0_39, %c252], %75 {strides = array<i32>} : memref<50x300xf32, #tpu.memory_space<vmem>>, vector<25x12xf32>,
    %77 = vector.extract_strided_slice %32 {offsets = [550, 0], sizes = [25, 12], strides = [1, 1]} : vector<625x12xf32> to vector<25x12xf32>
    %c0_40 = arith.constant 0 : index
    %c264 = arith.constant 264 : index
    %78 = vector.load %arg12[%c0_40, %c264] : memref<50x300xf32, #tpu.memory_space<vmem>>, vector<25x12xf32>
    tpu.vector_store %arg12[%c0_40, %c264], %77 {strides = array<i32>} : memref<50x300xf32, #tpu.memory_space<vmem>>, vector<25x12xf32>,
    %79 = vector.extract_strided_slice %32 {offsets = [575, 0], sizes = [25, 12], strides = [1, 1]} : vector<625x12xf32> to vector<25x12xf32>
    %c0_41 = arith.constant 0 : index
    %c276 = arith.constant 276 : index
    %80 = vector.load %arg12[%c0_41, %c276] : memref<50x300xf32, #tpu.memory_space<vmem>>, vector<25x12xf32>
    tpu.vector_store %arg12[%c0_41, %c276], %79 {strides = array<i32>} : memref<50x300xf32, #tpu.memory_space<vmem>>, vector<25x12xf32>,
    %81 = vector.extract_strided_slice %32 {offsets = [600, 0], sizes = [25, 12], strides = [1, 1]} : vector<625x12xf32> to vector<25x12xf32>
    %c0_42 = arith.constant 0 : index
    %c288 = arith.constant 288 : index
    %82 = vector.load %arg12[%c0_42, %c288] : memref<50x300xf32, #tpu.memory_space<vmem>>, vector<25x12xf32>
    tpu.vector_store %arg12[%c0_42, %c288], %81 {strides = array<i32>} : memref<50x300xf32, #tpu.memory_space<vmem>>, vector<25x12xf32>,
    %83 = vector.extract_strided_slice %28 {offsets = [196, 0], sizes = [196, 12], strides = [1, 1]} : vector<392x12xf32> to vector<196x12xf32>
    %cst_43 = arith.constant dense<0.000000e+00> : vector<625x12xf32>
    %84 = tpu.matmul %30, %83, %cst_43 {dimension_numbers = #tpu.dot_dimension_numbers<[1], [0], [0], [1], [0, 0, 1, 1], [], []>} : vector<625x196xf32>, vector<196x12xf32>, vector<625x12xf32> -> vector<625x12xf32>
    %85 = vector.extract_strided_slice %84 {offsets = [0, 0], sizes = [25, 12], strides = [1, 1]} : vector<625x12xf32> to vector<25x12xf32>
    %c25 = arith.constant 25 : index
    %c0_44 = arith.constant 0 : index
    %86 = vector.load %arg12[%c25, %c0_44] : memref<50x300xf32, #tpu.memory_space<vmem>>, vector<25x12xf32>
    tpu.vector_store %arg12[%c25, %c0_44], %85 {strides = array<i32>} : memref<50x300xf32, #tpu.memory_space<vmem>>, vector<25x12xf32>,
    %87 = vector.extract_strided_slice %84 {offsets = [25, 0], sizes = [25, 12], strides = [1, 1]} : vector<625x12xf32> to vector<25x12xf32>
    %c25_45 = arith.constant 25 : index
    %c12_46 = arith.constant 12 : index
    %88 = vector.load %arg12[%c25_45, %c12_46] : memref<50x300xf32, #tpu.memory_space<vmem>>, vector<25x12xf32>
    tpu.vector_store %arg12[%c25_45, %c12_46], %87 {strides = array<i32>} : memref<50x300xf32, #tpu.memory_space<vmem>>, vector<25x12xf32>,
    %89 = vector.extract_strided_slice %84 {offsets = [50, 0], sizes = [25, 12], strides = [1, 1]} : vector<625x12xf32> to vector<25x12xf32>
    %c25_47 = arith.constant 25 : index
    %c24_48 = arith.constant 24 : index
    %90 = vector.load %arg12[%c25_47, %c24_48] : memref<50x300xf32, #tpu.memory_space<vmem>>, vector<25x12xf32>
    tpu.vector_store %arg12[%c25_47, %c24_48], %89 {strides = array<i32>} : memref<50x300xf32, #tpu.memory_space<vmem>>, vector<25x12xf32>,
    %91 = vector.extract_strided_slice %84 {offsets = [75, 0], sizes = [25, 12], strides = [1, 1]} : vector<625x12xf32> to vector<25x12xf32>
    %c25_49 = arith.constant 25 : index
    %c36_50 = arith.constant 36 : index
    %92 = vector.load %arg12[%c25_49, %c36_50] : memref<50x300xf32, #tpu.memory_space<vmem>>, vector<25x12xf32>
    tpu.vector_store %arg12[%c25_49, %c36_50], %91 {strides = array<i32>} : memref<50x300xf32, #tpu.memory_space<vmem>>, vector<25x12xf32>,
    %93 = vector.extract_strided_slice %84 {offsets = [100, 0], sizes = [25, 12], strides = [1, 1]} : vector<625x12xf32> to vector<25x12xf32>
    %c25_51 = arith.constant 25 : index
    %c48_52 = arith.constant 48 : index
    %94 = vector.load %arg12[%c25_51, %c48_52] : memref<50x300xf32, #tpu.memory_space<vmem>>, vector<25x12xf32>
    tpu.vector_store %arg12[%c25_51, %c48_52], %93 {strides = array<i32>} : memref<50x300xf32, #tpu.memory_space<vmem>>, vector<25x12xf32>,
    %95 = vector.extract_strided_slice %84 {offsets = [125, 0], sizes = [25, 12], strides = [1, 1]} : vector<625x12xf32> to vector<25x12xf32>
    %c25_53 = arith.constant 25 : index
    %c60_54 = arith.constant 60 : index
    %96 = vector.load %arg12[%c25_53, %c60_54] : memref<50x300xf32, #tpu.memory_space<vmem>>, vector<25x12xf32>
    tpu.vector_store %arg12[%c25_53, %c60_54], %95 {strides = array<i32>} : memref<50x300xf32, #tpu.memory_space<vmem>>, vector<25x12xf32>,
    %97 = vector.extract_strided_slice %84 {offsets = [150, 0], sizes = [25, 12], strides = [1, 1]} : vector<625x12xf32> to vector<25x12xf32>
    %c25_55 = arith.constant 25 : index
    %c72_56 = arith.constant 72 : index
    %98 = vector.load %arg12[%c25_55, %c72_56] : memref<50x300xf32, #tpu.memory_space<vmem>>, vector<25x12xf32>
    tpu.vector_store %arg12[%c25_55, %c72_56], %97 {strides = array<i32>} : memref<50x300xf32, #tpu.memory_space<vmem>>, vector<25x12xf32>,
    %99 = vector.extract_strided_slice %84 {offsets = [175, 0], sizes = [25, 12], strides = [1, 1]} : vector<625x12xf32> to vector<25x12xf32>
    %c25_57 = arith.constant 25 : index
    %c84_58 = arith.constant 84 : index
    %100 = vector.load %arg12[%c25_57, %c84_58] : memref<50x300xf32, #tpu.memory_space<vmem>>, vector<25x12xf32>
    tpu.vector_store %arg12[%c25_57, %c84_58], %99 {strides = array<i32>} : memref<50x300xf32, #tpu.memory_space<vmem>>, vector<25x12xf32>,
    %101 = vector.extract_strided_slice %84 {offsets = [200, 0], sizes = [25, 12], strides = [1, 1]} : vector<625x12xf32> to vector<25x12xf32>
    %c25_59 = arith.constant 25 : index
    %c96_60 = arith.constant 96 : index
    %102 = vector.load %arg12[%c25_59, %c96_60] : memref<50x300xf32, #tpu.memory_space<vmem>>, vector<25x12xf32>
    tpu.vector_store %arg12[%c25_59, %c96_60], %101 {strides = array<i32>} : memref<50x300xf32, #tpu.memory_space<vmem>>, vector<25x12xf32>,
    %103 = vector.extract_strided_slice %84 {offsets = [225, 0], sizes = [25, 12], strides = [1, 1]} : vector<625x12xf32> to vector<25x12xf32>
    %c25_61 = arith.constant 25 : index
    %c108_62 = arith.constant 108 : index
    %104 = vector.load %arg12[%c25_61, %c108_62] : memref<50x300xf32, #tpu.memory_space<vmem>>, vector<25x12xf32>
    tpu.vector_store %arg12[%c25_61, %c108_62], %103 {strides = array<i32>} : memref<50x300xf32, #tpu.memory_space<vmem>>, vector<25x12xf32>,
    %105 = vector.extract_strided_slice %84 {offsets = [250, 0], sizes = [25, 12], strides = [1, 1]} : vector<625x12xf32> to vector<25x12xf32>
    %c25_63 = arith.constant 25 : index
    %c120_64 = arith.constant 120 : index
    %106 = vector.load %arg12[%c25_63, %c120_64] : memref<50x300xf32, #tpu.memory_space<vmem>>, vector<25x12xf32>
    tpu.vector_store %arg12[%c25_63, %c120_64], %105 {strides = array<i32>} : memref<50x300xf32, #tpu.memory_space<vmem>>, vector<25x12xf32>,
    %107 = vector.extract_strided_slice %84 {offsets = [275, 0], sizes = [25, 12], strides = [1, 1]} : vector<625x12xf32> to vector<25x12xf32>
    %c25_65 = arith.constant 25 : index
    %c132_66 = arith.constant 132 : index
    %108 = vector.load %arg12[%c25_65, %c132_66] : memref<50x300xf32, #tpu.memory_space<vmem>>, vector<25x12xf32>
    tpu.vector_store %arg12[%c25_65, %c132_66], %107 {strides = array<i32>} : memref<50x300xf32, #tpu.memory_space<vmem>>, vector<25x12xf32>,
    %109 = vector.extract_strided_slice %84 {offsets = [300, 0], sizes = [25, 12], strides = [1, 1]} : vector<625x12xf32> to vector<25x12xf32>
    %c25_67 = arith.constant 25 : index
    %c144_68 = arith.constant 144 : index
    %110 = vector.load %arg12[%c25_67, %c144_68] : memref<50x300xf32, #tpu.memory_space<vmem>>, vector<25x12xf32>
    tpu.vector_store %arg12[%c25_67, %c144_68], %109 {strides = array<i32>} : memref<50x300xf32, #tpu.memory_space<vmem>>, vector<25x12xf32>,
    %111 = vector.extract_strided_slice %84 {offsets = [325, 0], sizes = [25, 12], strides = [1, 1]} : vector<625x12xf32> to vector<25x12xf32>
    %c25_69 = arith.constant 25 : index
    %c156_70 = arith.constant 156 : index
    %112 = vector.load %arg12[%c25_69, %c156_70] : memref<50x300xf32, #tpu.memory_space<vmem>>, vector<25x12xf32>
    tpu.vector_store %arg12[%c25_69, %c156_70], %111 {strides = array<i32>} : memref<50x300xf32, #tpu.memory_space<vmem>>, vector<25x12xf32>,
    %113 = vector.extract_strided_slice %84 {offsets = [350, 0], sizes = [25, 12], strides = [1, 1]} : vector<625x12xf32> to vector<25x12xf32>
    %c25_71 = arith.constant 25 : index
    %c168_72 = arith.constant 168 : index
    %114 = vector.load %arg12[%c25_71, %c168_72] : memref<50x300xf32, #tpu.memory_space<vmem>>, vector<25x12xf32>
    tpu.vector_store %arg12[%c25_71, %c168_72], %113 {strides = array<i32>} : memref<50x300xf32, #tpu.memory_space<vmem>>, vector<25x12xf32>,
    %115 = vector.extract_strided_slice %84 {offsets = [375, 0], sizes = [25, 12], strides = [1, 1]} : vector<625x12xf32> to vector<25x12xf32>
    %c25_73 = arith.constant 25 : index
    %c180_74 = arith.constant 180 : index
    %116 = vector.load %arg12[%c25_73, %c180_74] : memref<50x300xf32, #tpu.memory_space<vmem>>, vector<25x12xf32>
    tpu.vector_store %arg12[%c25_73, %c180_74], %115 {strides = array<i32>} : memref<50x300xf32, #tpu.memory_space<vmem>>, vector<25x12xf32>,
    %117 = vector.extract_strided_slice %84 {offsets = [400, 0], sizes = [25, 12], strides = [1, 1]} : vector<625x12xf32> to vector<25x12xf32>
    %c25_75 = arith.constant 25 : index
    %c192_76 = arith.constant 192 : index
    %118 = vector.load %arg12[%c25_75, %c192_76] : memref<50x300xf32, #tpu.memory_space<vmem>>, vector<25x12xf32>
    tpu.vector_store %arg12[%c25_75, %c192_76], %117 {strides = array<i32>} : memref<50x300xf32, #tpu.memory_space<vmem>>, vector<25x12xf32>,
    %119 = vector.extract_strided_slice %84 {offsets = [425, 0], sizes = [25, 12], strides = [1, 1]} : vector<625x12xf32> to vector<25x12xf32>
    %c25_77 = arith.constant 25 : index
    %c204_78 = arith.constant 204 : index
    %120 = vector.load %arg12[%c25_77, %c204_78] : memref<50x300xf32, #tpu.memory_space<vmem>>, vector<25x12xf32>
    tpu.vector_store %arg12[%c25_77, %c204_78], %119 {strides = array<i32>} : memref<50x300xf32, #tpu.memory_space<vmem>>, vector<25x12xf32>,
    %121 = vector.extract_strided_slice %84 {offsets = [450, 0], sizes = [25, 12], strides = [1, 1]} : vector<625x12xf32> to vector<25x12xf32>
    %c25_79 = arith.constant 25 : index
    %c216_80 = arith.constant 216 : index
    %122 = vector.load %arg12[%c25_79, %c216_80] : memref<50x300xf32, #tpu.memory_space<vmem>>, vector<25x12xf32>
    tpu.vector_store %arg12[%c25_79, %c216_80], %121 {strides = array<i32>} : memref<50x300xf32, #tpu.memory_space<vmem>>, vector<25x12xf32>,
    %123 = vector.extract_strided_slice %84 {offsets = [475, 0], sizes = [25, 12], strides = [1, 1]} : vector<625x12xf32> to vector<25x12xf32>
    %c25_81 = arith.constant 25 : index
    %c228_82 = arith.constant 228 : index
    %124 = vector.load %arg12[%c25_81, %c228_82] : memref<50x300xf32, #tpu.memory_space<vmem>>, vector<25x12xf32>
    tpu.vector_store %arg12[%c25_81, %c228_82], %123 {strides = array<i32>} : memref<50x300xf32, #tpu.memory_space<vmem>>, vector<25x12xf32>,
    %125 = vector.extract_strided_slice %84 {offsets = [500, 0], sizes = [25, 12], strides = [1, 1]} : vector<625x12xf32> to vector<25x12xf32>
    %c25_83 = arith.constant 25 : index
    %c240_84 = arith.constant 240 : index
    %126 = vector.load %arg12[%c25_83, %c240_84] : memref<50x300xf32, #tpu.memory_space<vmem>>, vector<25x12xf32>
    tpu.vector_store %arg12[%c25_83, %c240_84], %125 {strides = array<i32>} : memref<50x300xf32, #tpu.memory_space<vmem>>, vector<25x12xf32>,
    %127 = vector.extract_strided_slice %84 {offsets = [525, 0], sizes = [25, 12], strides = [1, 1]} : vector<625x12xf32> to vector<25x12xf32>
    %c25_85 = arith.constant 25 : index
    %c252_86 = arith.constant 252 : index
    %128 = vector.load %arg12[%c25_85, %c252_86] : memref<50x300xf32, #tpu.memory_space<vmem>>, vector<25x12xf32>
    tpu.vector_store %arg12[%c25_85, %c252_86], %127 {strides = array<i32>} : memref<50x300xf32, #tpu.memory_space<vmem>>, vector<25x12xf32>,
    %129 = vector.extract_strided_slice %84 {offsets = [550, 0], sizes = [25, 12], strides = [1, 1]} : vector<625x12xf32> to vector<25x12xf32>
    %c25_87 = arith.constant 25 : index
    %c264_88 = arith.constant 264 : index
    %130 = vector.load %arg12[%c25_87, %c264_88] : memref<50x300xf32, #tpu.memory_space<vmem>>, vector<25x12xf32>
    tpu.vector_store %arg12[%c25_87, %c264_88], %129 {strides = array<i32>} : memref<50x300xf32, #tpu.memory_space<vmem>>, vector<25x12xf32>,
    %131 = vector.extract_strided_slice %84 {offsets = [575, 0], sizes = [25, 12], strides = [1, 1]} : vector<625x12xf32> to vector<25x12xf32>
    %c25_89 = arith.constant 25 : index
    %c276_90 = arith.constant 276 : index
    %132 = vector.load %arg12[%c25_89, %c276_90] : memref<50x300xf32, #tpu.memory_space<vmem>>, vector<25x12xf32>
    tpu.vector_store %arg12[%c25_89, %c276_90], %131 {strides = array<i32>} : memref<50x300xf32, #tpu.memory_space<vmem>>, vector<25x12xf32>,
    %133 = vector.extract_strided_slice %84 {offsets = [600, 0], sizes = [25, 12], strides = [1, 1]} : vector<625x12xf32> to vector<25x12xf32>
    %c25_91 = arith.constant 25 : index
    %c288_92 = arith.constant 288 : index
    %134 = vector.load %arg12[%c25_91, %c288_92] : memref<50x300xf32, #tpu.memory_space<vmem>>, vector<25x12xf32>
    tpu.vector_store %arg12[%c25_91, %c288_92], %133 {strides = array<i32>} : memref<50x300xf32, #tpu.memory_space<vmem>>, vector<25x12xf32>,
    %c0_93 = arith.constant 0 : index
    %c0_94 = arith.constant 0 : index
    %135 = vector.load %arg12[%c0_93, %c0_94] : memref<50x300xf32, #tpu.memory_space<vmem>>, vector<50x300xf32>
    %c0_95 = arith.constant 0 : index
    %c0_96 = arith.constant 0 : index
    %136 = vector.load %arg5[%c0_95, %c0_96] : memref<300x24xf32, #tpu.memory_space<vmem>>, vector<300x24xf32>
    %cst_97 = arith.constant dense<0.000000e+00> : vector<50x24xf32>
    %137 = tpu.matmul %135, %136, %cst_97 {dimension_numbers = #tpu.dot_dimension_numbers<[1], [0], [0], [1], [0, 0, 1, 1], [], []>} : vector<50x300xf32>, vector<300x24xf32>, vector<50x24xf32> -> vector<50x24xf32>
    %c0_98 = arith.constant 0 : index
    %c0_99 = arith.constant 0 : index
    %138 = vector.load %arg6[%c0_98, %c0_99] : memref<1x24xf32, #tpu.memory_space<vmem>>, vector<1x24xf32>
    %c0_100 = arith.constant 0 : index
    %c0_101 = arith.constant 0 : index
    %139 = vector.load %arg7[%c0_100, %c0_101] : memref<1x24xf32, #tpu.memory_space<vmem>>, vector<1x24xf32>
    %cst_102 = arith.constant dense<0.000000e+00> : vector<24xf32>
    %140 = vector.multi_reduction <add>, %137, %cst_102 [0] : vector<50x24xf32> to vector<24xf32>
    %141 = vector.shape_cast %140 : vector<24xf32> to vector<1x24xf32>
    %cst_103 = arith.constant 5.000000e+01 : f32
    %142 = vector.broadcast %cst_103 : f32 to vector<1x24xf32>
    %143 = arith.divf %141, %142 : vector<1x24xf32>
    %144 = vector.broadcast %143 : vector<1x24xf32> to vector<50x24xf32>
    %145 = arith.subf %137, %144 : vector<50x24xf32>
    %146 = arith.mulf %145, %145 : vector<50x24xf32>
    %cst_104 = arith.constant dense<0.000000e+00> : vector<24xf32>
    %147 = vector.multi_reduction <add>, %146, %cst_104 [0] : vector<50x24xf32> to vector<24xf32>
    %148 = vector.shape_cast %147 : vector<24xf32> to vector<1x24xf32>
    %cst_105 = arith.constant 5.000000e+01 : f32
    %149 = vector.broadcast %cst_105 : f32 to vector<1x24xf32>
    %150 = arith.divf %148, %149 : vector<1x24xf32>
    %cst_106 = arith.constant 9.99999974E-6 : f32
    %151 = vector.broadcast %cst_106 : f32 to vector<1x24xf32>
    %152 = arith.addf %150, %151 : vector<1x24xf32>
    %153 = math.rsqrt %152 : vector<1x24xf32>
    %154 = arith.mulf %138, %153 : vector<1x24xf32>
    %155 = vector.broadcast %154 : vector<1x24xf32> to vector<50x24xf32>
    %156 = arith.mulf %145, %155 : vector<50x24xf32>
    %157 = vector.broadcast %139 : vector<1x24xf32> to vector<50x24xf32>
    %158 = arith.addf %156, %157 : vector<50x24xf32>
    %cst_107 = arith.constant 0.000000e+00 : f32
    %159 = vector.broadcast %cst_107 : f32 to vector<50x24xf32>
    %160 = arith.cmpf ogt, %158, %159 : vector<50x24xf32>
    %cst_108 = arith.constant 2.000000e-01 : f32
    %161 = vector.broadcast %cst_108 : f32 to vector<50x24xf32>
    %162 = arith.mulf %161, %158 : vector<50x24xf32>
    %163 = arith.select %160, %158, %162 : vector<50x24xi1>, vector<50x24xf32>
    %164 = vector.extract_strided_slice %163 {offsets = [0, 0], sizes = [1, 24], strides = [1, 1]} : vector<50x24xf32> to vector<1x24xf32>
    %c0_109 = arith.constant 0 : index
    %c0_110 = arith.constant 0 : index
    %165 = vector.load %arg13[%c0_109, %c0_110] : memref<2x600xf32, #tpu.memory_space<vmem>>, vector<1x24xf32>
    tpu.vector_store %arg13[%c0_109, %c0_110], %164 {strides = array<i32>} : memref<2x600xf32, #tpu.memory_space<vmem>>, vector<1x24xf32>,
    %166 = vector.extract_strided_slice %163 {offsets = [1, 0], sizes = [1, 24], strides = [1, 1]} : vector<50x24xf32> to vector<1x24xf32>
    %c0_111 = arith.constant 0 : index
    %c24_112 = arith.constant 24 : index
    %167 = vector.load %arg13[%c0_111, %c24_112] : memref<2x600xf32, #tpu.memory_space<vmem>>, vector<1x24xf32>
    tpu.vector_store %arg13[%c0_111, %c24_112], %166 {strides = array<i32>} : memref<2x600xf32, #tpu.memory_space<vmem>>, vector<1x24xf32>,
    %168 = vector.extract_strided_slice %163 {offsets = [2, 0], sizes = [1, 24], strides = [1, 1]} : vector<50x24xf32> to vector<1x24xf32>
    %c0_113 = arith.constant 0 : index
    %c48_114 = arith.constant 48 : index
    %169 = vector.load %arg13[%c0_113, %c48_114] : memref<2x600xf32, #tpu.memory_space<vmem>>, vector<1x24xf32>
    tpu.vector_store %arg13[%c0_113, %c48_114], %168 {strides = array<i32>} : memref<2x600xf32, #tpu.memory_space<vmem>>, vector<1x24xf32>,
    %170 = vector.extract_strided_slice %163 {offsets = [3, 0], sizes = [1, 24], strides = [1, 1]} : vector<50x24xf32> to vector<1x24xf32>
    %c0_115 = arith.constant 0 : index
    %c72_116 = arith.constant 72 : index
    %171 = vector.load %arg13[%c0_115, %c72_116] : memref<2x600xf32, #tpu.memory_space<vmem>>, vector<1x24xf32>
    tpu.vector_store %arg13[%c0_115, %c72_116], %170 {strides = array<i32>} : memref<2x600xf32, #tpu.memory_space<vmem>>, vector<1x24xf32>,
    %172 = vector.extract_strided_slice %163 {offsets = [4, 0], sizes = [1, 24], strides = [1, 1]} : vector<50x24xf32> to vector<1x24xf32>
    %c0_117 = arith.constant 0 : index
    %c96_118 = arith.constant 96 : index
    %173 = vector.load %arg13[%c0_117, %c96_118] : memref<2x600xf32, #tpu.memory_space<vmem>>, vector<1x24xf32>
    tpu.vector_store %arg13[%c0_117, %c96_118], %172 {strides = array<i32>} : memref<2x600xf32, #tpu.memory_space<vmem>>, vector<1x24xf32>,
    %174 = vector.extract_strided_slice %163 {offsets = [5, 0], sizes = [1, 24], strides = [1, 1]} : vector<50x24xf32> to vector<1x24xf32>
    %c0_119 = arith.constant 0 : index
    %c120_120 = arith.constant 120 : index
    %175 = vector.load %arg13[%c0_119, %c120_120] : memref<2x600xf32, #tpu.memory_space<vmem>>, vector<1x24xf32>
    tpu.vector_store %arg13[%c0_119, %c120_120], %174 {strides = array<i32>} : memref<2x600xf32, #tpu.memory_space<vmem>>, vector<1x24xf32>,
    %176 = vector.extract_strided_slice %163 {offsets = [6, 0], sizes = [1, 24], strides = [1, 1]} : vector<50x24xf32> to vector<1x24xf32>
    %c0_121 = arith.constant 0 : index
    %c144_122 = arith.constant 144 : index
    %177 = vector.load %arg13[%c0_121, %c144_122] : memref<2x600xf32, #tpu.memory_space<vmem>>, vector<1x24xf32>
    tpu.vector_store %arg13[%c0_121, %c144_122], %176 {strides = array<i32>} : memref<2x600xf32, #tpu.memory_space<vmem>>, vector<1x24xf32>,
    %178 = vector.extract_strided_slice %163 {offsets = [7, 0], sizes = [1, 24], strides = [1, 1]} : vector<50x24xf32> to vector<1x24xf32>
    %c0_123 = arith.constant 0 : index
    %c168_124 = arith.constant 168 : index
    %179 = vector.load %arg13[%c0_123, %c168_124] : memref<2x600xf32, #tpu.memory_space<vmem>>, vector<1x24xf32>
    tpu.vector_store %arg13[%c0_123, %c168_124], %178 {strides = array<i32>} : memref<2x600xf32, #tpu.memory_space<vmem>>, vector<1x24xf32>,
    %180 = vector.extract_strided_slice %163 {offsets = [8, 0], sizes = [1, 24], strides = [1, 1]} : vector<50x24xf32> to vector<1x24xf32>
    %c0_125 = arith.constant 0 : index
    %c192_126 = arith.constant 192 : index
    %181 = vector.load %arg13[%c0_125, %c192_126] : memref<2x600xf32, #tpu.memory_space<vmem>>, vector<1x24xf32>
    tpu.vector_store %arg13[%c0_125, %c192_126], %180 {strides = array<i32>} : memref<2x600xf32, #tpu.memory_space<vmem>>, vector<1x24xf32>,
    %182 = vector.extract_strided_slice %163 {offsets = [9, 0], sizes = [1, 24], strides = [1, 1]} : vector<50x24xf32> to vector<1x24xf32>
    %c0_127 = arith.constant 0 : index
    %c216_128 = arith.constant 216 : index
    %183 = vector.load %arg13[%c0_127, %c216_128] : memref<2x600xf32, #tpu.memory_space<vmem>>, vector<1x24xf32>
    tpu.vector_store %arg13[%c0_127, %c216_128], %182 {strides = array<i32>} : memref<2x600xf32, #tpu.memory_space<vmem>>, vector<1x24xf32>,
    %184 = vector.extract_strided_slice %163 {offsets = [10, 0], sizes = [1, 24], strides = [1, 1]} : vector<50x24xf32> to vector<1x24xf32>
    %c0_129 = arith.constant 0 : index
    %c240_130 = arith.constant 240 : index
    %185 = vector.load %arg13[%c0_129, %c240_130] : memref<2x600xf32, #tpu.memory_space<vmem>>, vector<1x24xf32>
    tpu.vector_store %arg13[%c0_129, %c240_130], %184 {strides = array<i32>} : memref<2x600xf32, #tpu.memory_space<vmem>>, vector<1x24xf32>,
    %186 = vector.extract_strided_slice %163 {offsets = [11, 0], sizes = [1, 24], strides = [1, 1]} : vector<50x24xf32> to vector<1x24xf32>
    %c0_131 = arith.constant 0 : index
    %c264_132 = arith.constant 264 : index
    %187 = vector.load %arg13[%c0_131, %c264_132] : memref<2x600xf32, #tpu.memory_space<vmem>>, vector<1x24xf32>
    tpu.vector_store %arg13[%c0_131, %c264_132], %186 {strides = array<i32>} : memref<2x600xf32, #tpu.memory_space<vmem>>, vector<1x24xf32>,
    %188 = vector.extract_strided_slice %163 {offsets = [12, 0], sizes = [1, 24], strides = [1, 1]} : vector<50x24xf32> to vector<1x24xf32>
    %c0_133 = arith.constant 0 : index
    %c288_134 = arith.constant 288 : index
    %189 = vector.load %arg13[%c0_133, %c288_134] : memref<2x600xf32, #tpu.memory_space<vmem>>, vector<1x24xf32>
    tpu.vector_store %arg13[%c0_133, %c288_134], %188 {strides = array<i32>} : memref<2x600xf32, #tpu.memory_space<vmem>>, vector<1x24xf32>,
    %190 = vector.extract_strided_slice %163 {offsets = [13, 0], sizes = [1, 24], strides = [1, 1]} : vector<50x24xf32> to vector<1x24xf32>
    %c0_135 = arith.constant 0 : index
    %c312 = arith.constant 312 : index
    %191 = vector.load %arg13[%c0_135, %c312] : memref<2x600xf32, #tpu.memory_space<vmem>>, vector<1x24xf32>
    tpu.vector_store %arg13[%c0_135, %c312], %190 {strides = array<i32>} : memref<2x600xf32, #tpu.memory_space<vmem>>, vector<1x24xf32>,
    %192 = vector.extract_strided_slice %163 {offsets = [14, 0], sizes = [1, 24], strides = [1, 1]} : vector<50x24xf32> to vector<1x24xf32>
    %c0_136 = arith.constant 0 : index
    %c336 = arith.constant 336 : index
    %193 = vector.load %arg13[%c0_136, %c336] : memref<2x600xf32, #tpu.memory_space<vmem>>, vector<1x24xf32>
    tpu.vector_store %arg13[%c0_136, %c336], %192 {strides = array<i32>} : memref<2x600xf32, #tpu.memory_space<vmem>>, vector<1x24xf32>,
    %194 = vector.extract_strided_slice %163 {offsets = [15, 0], sizes = [1, 24], strides = [1, 1]} : vector<50x24xf32> to vector<1x24xf32>
    %c0_137 = arith.constant 0 : index
    %c360 = arith.constant 360 : index
    %195 = vector.load %arg13[%c0_137, %c360] : memref<2x600xf32, #tpu.memory_space<vmem>>, vector<1x24xf32>
    tpu.vector_store %arg13[%c0_137, %c360], %194 {strides = array<i32>} : memref<2x600xf32, #tpu.memory_space<vmem>>, vector<1x24xf32>,
    %196 = vector.extract_strided_slice %163 {offsets = [16, 0], sizes = [1, 24], strides = [1, 1]} : vector<50x24xf32> to vector<1x24xf32>
    %c0_138 = arith.constant 0 : index
    %c384 = arith.constant 384 : index
    %197 = vector.load %arg13[%c0_138, %c384] : memref<2x600xf32, #tpu.memory_space<vmem>>, vector<1x24xf32>
    tpu.vector_store %arg13[%c0_138, %c384], %196 {strides = array<i32>} : memref<2x600xf32, #tpu.memory_space<vmem>>, vector<1x24xf32>,
    %198 = vector.extract_strided_slice %163 {offsets = [17, 0], sizes = [1, 24], strides = [1, 1]} : vector<50x24xf32> to vector<1x24xf32>
    %c0_139 = arith.constant 0 : index
    %c408 = arith.constant 408 : index
    %199 = vector.load %arg13[%c0_139, %c408] : memref<2x600xf32, #tpu.memory_space<vmem>>, vector<1x24xf32>
    tpu.vector_store %arg13[%c0_139, %c408], %198 {strides = array<i32>} : memref<2x600xf32, #tpu.memory_space<vmem>>, vector<1x24xf32>,
    %200 = vector.extract_strided_slice %163 {offsets = [18, 0], sizes = [1, 24], strides = [1, 1]} : vector<50x24xf32> to vector<1x24xf32>
    %c0_140 = arith.constant 0 : index
    %c432 = arith.constant 432 : index
    %201 = vector.load %arg13[%c0_140, %c432] : memref<2x600xf32, #tpu.memory_space<vmem>>, vector<1x24xf32>
    tpu.vector_store %arg13[%c0_140, %c432], %200 {strides = array<i32>} : memref<2x600xf32, #tpu.memory_space<vmem>>, vector<1x24xf32>,
    %202 = vector.extract_strided_slice %163 {offsets = [19, 0], sizes = [1, 24], strides = [1, 1]} : vector<50x24xf32> to vector<1x24xf32>
    %c0_141 = arith.constant 0 : index
    %c456 = arith.constant 456 : index
    %203 = vector.load %arg13[%c0_141, %c456] : memref<2x600xf32, #tpu.memory_space<vmem>>, vector<1x24xf32>
    tpu.vector_store %arg13[%c0_141, %c456], %202 {strides = array<i32>} : memref<2x600xf32, #tpu.memory_space<vmem>>, vector<1x24xf32>,
    %204 = vector.extract_strided_slice %163 {offsets = [20, 0], sizes = [1, 24], strides = [1, 1]} : vector<50x24xf32> to vector<1x24xf32>
    %c0_142 = arith.constant 0 : index
    %c480 = arith.constant 480 : index
    %205 = vector.load %arg13[%c0_142, %c480] : memref<2x600xf32, #tpu.memory_space<vmem>>, vector<1x24xf32>
    tpu.vector_store %arg13[%c0_142, %c480], %204 {strides = array<i32>} : memref<2x600xf32, #tpu.memory_space<vmem>>, vector<1x24xf32>,
    %206 = vector.extract_strided_slice %163 {offsets = [21, 0], sizes = [1, 24], strides = [1, 1]} : vector<50x24xf32> to vector<1x24xf32>
    %c0_143 = arith.constant 0 : index
    %c504 = arith.constant 504 : index
    %207 = vector.load %arg13[%c0_143, %c504] : memref<2x600xf32, #tpu.memory_space<vmem>>, vector<1x24xf32>
    tpu.vector_store %arg13[%c0_143, %c504], %206 {strides = array<i32>} : memref<2x600xf32, #tpu.memory_space<vmem>>, vector<1x24xf32>,
    %208 = vector.extract_strided_slice %163 {offsets = [22, 0], sizes = [1, 24], strides = [1, 1]} : vector<50x24xf32> to vector<1x24xf32>
    %c0_144 = arith.constant 0 : index
    %c528 = arith.constant 528 : index
    %209 = vector.load %arg13[%c0_144, %c528] : memref<2x600xf32, #tpu.memory_space<vmem>>, vector<1x24xf32>
    tpu.vector_store %arg13[%c0_144, %c528], %208 {strides = array<i32>} : memref<2x600xf32, #tpu.memory_space<vmem>>, vector<1x24xf32>,
    %210 = vector.extract_strided_slice %163 {offsets = [23, 0], sizes = [1, 24], strides = [1, 1]} : vector<50x24xf32> to vector<1x24xf32>
    %c0_145 = arith.constant 0 : index
    %c552 = arith.constant 552 : index
    %211 = vector.load %arg13[%c0_145, %c552] : memref<2x600xf32, #tpu.memory_space<vmem>>, vector<1x24xf32>
    tpu.vector_store %arg13[%c0_145, %c552], %210 {strides = array<i32>} : memref<2x600xf32, #tpu.memory_space<vmem>>, vector<1x24xf32>,
    %212 = vector.extract_strided_slice %163 {offsets = [24, 0], sizes = [1, 24], strides = [1, 1]} : vector<50x24xf32> to vector<1x24xf32>
    %c0_146 = arith.constant 0 : index
    %c576 = arith.constant 576 : index
    %213 = vector.load %arg13[%c0_146, %c576] : memref<2x600xf32, #tpu.memory_space<vmem>>, vector<1x24xf32>
    tpu.vector_store %arg13[%c0_146, %c576], %212 {strides = array<i32>} : memref<2x600xf32, #tpu.memory_space<vmem>>, vector<1x24xf32>,
    %214 = vector.extract_strided_slice %163 {offsets = [25, 0], sizes = [1, 24], strides = [1, 1]} : vector<50x24xf32> to vector<1x24xf32>
    %c1 = arith.constant 1 : index
    %c0_147 = arith.constant 0 : index
    %215 = vector.load %arg13[%c1, %c0_147] : memref<2x600xf32, #tpu.memory_space<vmem>>, vector<1x24xf32>
    tpu.vector_store %arg13[%c1, %c0_147], %214 {strides = array<i32>} : memref<2x600xf32, #tpu.memory_space<vmem>>, vector<1x24xf32>,
    %216 = vector.extract_strided_slice %163 {offsets = [26, 0], sizes = [1, 24], strides = [1, 1]} : vector<50x24xf32> to vector<1x24xf32>
    %c1_148 = arith.constant 1 : index
    %c24_149 = arith.constant 24 : index
    %217 = vector.load %arg13[%c1_148, %c24_149] : memref<2x600xf32, #tpu.memory_space<vmem>>, vector<1x24xf32>
    tpu.vector_store %arg13[%c1_148, %c24_149], %216 {strides = array<i32>} : memref<2x600xf32, #tpu.memory_space<vmem>>, vector<1x24xf32>,
    %218 = vector.extract_strided_slice %163 {offsets = [27, 0], sizes = [1, 24], strides = [1, 1]} : vector<50x24xf32> to vector<1x24xf32>
    %c1_150 = arith.constant 1 : index
    %c48_151 = arith.constant 48 : index
    %219 = vector.load %arg13[%c1_150, %c48_151] : memref<2x600xf32, #tpu.memory_space<vmem>>, vector<1x24xf32>
    tpu.vector_store %arg13[%c1_150, %c48_151], %218 {strides = array<i32>} : memref<2x600xf32, #tpu.memory_space<vmem>>, vector<1x24xf32>,
    %220 = vector.extract_strided_slice %163 {offsets = [28, 0], sizes = [1, 24], strides = [1, 1]} : vector<50x24xf32> to vector<1x24xf32>
    %c1_152 = arith.constant 1 : index
    %c72_153 = arith.constant 72 : index
    %221 = vector.load %arg13[%c1_152, %c72_153] : memref<2x600xf32, #tpu.memory_space<vmem>>, vector<1x24xf32>
    tpu.vector_store %arg13[%c1_152, %c72_153], %220 {strides = array<i32>} : memref<2x600xf32, #tpu.memory_space<vmem>>, vector<1x24xf32>,
    %222 = vector.extract_strided_slice %163 {offsets = [29, 0], sizes = [1, 24], strides = [1, 1]} : vector<50x24xf32> to vector<1x24xf32>
    %c1_154 = arith.constant 1 : index
    %c96_155 = arith.constant 96 : index
    %223 = vector.load %arg13[%c1_154, %c96_155] : memref<2x600xf32, #tpu.memory_space<vmem>>, vector<1x24xf32>
    tpu.vector_store %arg13[%c1_154, %c96_155], %222 {strides = array<i32>} : memref<2x600xf32, #tpu.memory_space<vmem>>, vector<1x24xf32>,
    %224 = vector.extract_strided_slice %163 {offsets = [30, 0], sizes = [1, 24], strides = [1, 1]} : vector<50x24xf32> to vector<1x24xf32>
    %c1_156 = arith.constant 1 : index
    %c120_157 = arith.constant 120 : index
    %225 = vector.load %arg13[%c1_156, %c120_157] : memref<2x600xf32, #tpu.memory_space<vmem>>, vector<1x24xf32>
    tpu.vector_store %arg13[%c1_156, %c120_157], %224 {strides = array<i32>} : memref<2x600xf32, #tpu.memory_space<vmem>>, vector<1x24xf32>,
    %226 = vector.extract_strided_slice %163 {offsets = [31, 0], sizes = [1, 24], strides = [1, 1]} : vector<50x24xf32> to vector<1x24xf32>
    %c1_158 = arith.constant 1 : index
    %c144_159 = arith.constant 144 : index
    %227 = vector.load %arg13[%c1_158, %c144_159] : memref<2x600xf32, #tpu.memory_space<vmem>>, vector<1x24xf32>
    tpu.vector_store %arg13[%c1_158, %c144_159], %226 {strides = array<i32>} : memref<2x600xf32, #tpu.memory_space<vmem>>, vector<1x24xf32>,
    %228 = vector.extract_strided_slice %163 {offsets = [32, 0], sizes = [1, 24], strides = [1, 1]} : vector<50x24xf32> to vector<1x24xf32>
    %c1_160 = arith.constant 1 : index
    %c168_161 = arith.constant 168 : index
    %229 = vector.load %arg13[%c1_160, %c168_161] : memref<2x600xf32, #tpu.memory_space<vmem>>, vector<1x24xf32>
    tpu.vector_store %arg13[%c1_160, %c168_161], %228 {strides = array<i32>} : memref<2x600xf32, #tpu.memory_space<vmem>>, vector<1x24xf32>,
    %230 = vector.extract_strided_slice %163 {offsets = [33, 0], sizes = [1, 24], strides = [1, 1]} : vector<50x24xf32> to vector<1x24xf32>
    %c1_162 = arith.constant 1 : index
    %c192_163 = arith.constant 192 : index
    %231 = vector.load %arg13[%c1_162, %c192_163] : memref<2x600xf32, #tpu.memory_space<vmem>>, vector<1x24xf32>
    tpu.vector_store %arg13[%c1_162, %c192_163], %230 {strides = array<i32>} : memref<2x600xf32, #tpu.memory_space<vmem>>, vector<1x24xf32>,
    %232 = vector.extract_strided_slice %163 {offsets = [34, 0], sizes = [1, 24], strides = [1, 1]} : vector<50x24xf32> to vector<1x24xf32>
    %c1_164 = arith.constant 1 : index
    %c216_165 = arith.constant 216 : index
    %233 = vector.load %arg13[%c1_164, %c216_165] : memref<2x600xf32, #tpu.memory_space<vmem>>, vector<1x24xf32>
    tpu.vector_store %arg13[%c1_164, %c216_165], %232 {strides = array<i32>} : memref<2x600xf32, #tpu.memory_space<vmem>>, vector<1x24xf32>,
    %234 = vector.extract_strided_slice %163 {offsets = [35, 0], sizes = [1, 24], strides = [1, 1]} : vector<50x24xf32> to vector<1x24xf32>
    %c1_166 = arith.constant 1 : index
    %c240_167 = arith.constant 240 : index
    %235 = vector.load %arg13[%c1_166, %c240_167] : memref<2x600xf32, #tpu.memory_space<vmem>>, vector<1x24xf32>
    tpu.vector_store %arg13[%c1_166, %c240_167], %234 {strides = array<i32>} : memref<2x600xf32, #tpu.memory_space<vmem>>, vector<1x24xf32>,
    %236 = vector.extract_strided_slice %163 {offsets = [36, 0], sizes = [1, 24], strides = [1, 1]} : vector<50x24xf32> to vector<1x24xf32>
    %c1_168 = arith.constant 1 : index
    %c264_169 = arith.constant 264 : index
    %237 = vector.load %arg13[%c1_168, %c264_169] : memref<2x600xf32, #tpu.memory_space<vmem>>, vector<1x24xf32>
    tpu.vector_store %arg13[%c1_168, %c264_169], %236 {strides = array<i32>} : memref<2x600xf32, #tpu.memory_space<vmem>>, vector<1x24xf32>,
    %238 = vector.extract_strided_slice %163 {offsets = [37, 0], sizes = [1, 24], strides = [1, 1]} : vector<50x24xf32> to vector<1x24xf32>
    %c1_170 = arith.constant 1 : index
    %c288_171 = arith.constant 288 : index
    %239 = vector.load %arg13[%c1_170, %c288_171] : memref<2x600xf32, #tpu.memory_space<vmem>>, vector<1x24xf32>
    tpu.vector_store %arg13[%c1_170, %c288_171], %238 {strides = array<i32>} : memref<2x600xf32, #tpu.memory_space<vmem>>, vector<1x24xf32>,
    %240 = vector.extract_strided_slice %163 {offsets = [38, 0], sizes = [1, 24], strides = [1, 1]} : vector<50x24xf32> to vector<1x24xf32>
    %c1_172 = arith.constant 1 : index
    %c312_173 = arith.constant 312 : index
    %241 = vector.load %arg13[%c1_172, %c312_173] : memref<2x600xf32, #tpu.memory_space<vmem>>, vector<1x24xf32>
    tpu.vector_store %arg13[%c1_172, %c312_173], %240 {strides = array<i32>} : memref<2x600xf32, #tpu.memory_space<vmem>>, vector<1x24xf32>,
    %242 = vector.extract_strided_slice %163 {offsets = [39, 0], sizes = [1, 24], strides = [1, 1]} : vector<50x24xf32> to vector<1x24xf32>
    %c1_174 = arith.constant 1 : index
    %c336_175 = arith.constant 336 : index
    %243 = vector.load %arg13[%c1_174, %c336_175] : memref<2x600xf32, #tpu.memory_space<vmem>>, vector<1x24xf32>
    tpu.vector_store %arg13[%c1_174, %c336_175], %242 {strides = array<i32>} : memref<2x600xf32, #tpu.memory_space<vmem>>, vector<1x24xf32>,
    %244 = vector.extract_strided_slice %163 {offsets = [40, 0], sizes = [1, 24], strides = [1, 1]} : vector<50x24xf32> to vector<1x24xf32>
    %c1_176 = arith.constant 1 : index
    %c360_177 = arith.constant 360 : index
    %245 = vector.load %arg13[%c1_176, %c360_177] : memref<2x600xf32, #tpu.memory_space<vmem>>, vector<1x24xf32>
    tpu.vector_store %arg13[%c1_176, %c360_177], %244 {strides = array<i32>} : memref<2x600xf32, #tpu.memory_space<vmem>>, vector<1x24xf32>,
    %246 = vector.extract_strided_slice %163 {offsets = [41, 0], sizes = [1, 24], strides = [1, 1]} : vector<50x24xf32> to vector<1x24xf32>
    %c1_178 = arith.constant 1 : index
    %c384_179 = arith.constant 384 : index
    %247 = vector.load %arg13[%c1_178, %c384_179] : memref<2x600xf32, #tpu.memory_space<vmem>>, vector<1x24xf32>
    tpu.vector_store %arg13[%c1_178, %c384_179], %246 {strides = array<i32>} : memref<2x600xf32, #tpu.memory_space<vmem>>, vector<1x24xf32>,
    %248 = vector.extract_strided_slice %163 {offsets = [42, 0], sizes = [1, 24], strides = [1, 1]} : vector<50x24xf32> to vector<1x24xf32>
    %c1_180 = arith.constant 1 : index
    %c408_181 = arith.constant 408 : index
    %249 = vector.load %arg13[%c1_180, %c408_181] : memref<2x600xf32, #tpu.memory_space<vmem>>, vector<1x24xf32>
    tpu.vector_store %arg13[%c1_180, %c408_181], %248 {strides = array<i32>} : memref<2x600xf32, #tpu.memory_space<vmem>>, vector<1x24xf32>,
    %250 = vector.extract_strided_slice %163 {offsets = [43, 0], sizes = [1, 24], strides = [1, 1]} : vector<50x24xf32> to vector<1x24xf32>
    %c1_182 = arith.constant 1 : index
    %c432_183 = arith.constant 432 : index
    %251 = vector.load %arg13[%c1_182, %c432_183] : memref<2x600xf32, #tpu.memory_space<vmem>>, vector<1x24xf32>
    tpu.vector_store %arg13[%c1_182, %c432_183], %250 {strides = array<i32>} : memref<2x600xf32, #tpu.memory_space<vmem>>, vector<1x24xf32>,
    %252 = vector.extract_strided_slice %163 {offsets = [44, 0], sizes = [1, 24], strides = [1, 1]} : vector<50x24xf32> to vector<1x24xf32>
    %c1_184 = arith.constant 1 : index
    %c456_185 = arith.constant 456 : index
    %253 = vector.load %arg13[%c1_184, %c456_185] : memref<2x600xf32, #tpu.memory_space<vmem>>, vector<1x24xf32>
    tpu.vector_store %arg13[%c1_184, %c456_185], %252 {strides = array<i32>} : memref<2x600xf32, #tpu.memory_space<vmem>>, vector<1x24xf32>,
    %254 = vector.extract_strided_slice %163 {offsets = [45, 0], sizes = [1, 24], strides = [1, 1]} : vector<50x24xf32> to vector<1x24xf32>
    %c1_186 = arith.constant 1 : index
    %c480_187 = arith.constant 480 : index
    %255 = vector.load %arg13[%c1_186, %c480_187] : memref<2x600xf32, #tpu.memory_space<vmem>>, vector<1x24xf32>
    tpu.vector_store %arg13[%c1_186, %c480_187], %254 {strides = array<i32>} : memref<2x600xf32, #tpu.memory_space<vmem>>, vector<1x24xf32>,
    %256 = vector.extract_strided_slice %163 {offsets = [46, 0], sizes = [1, 24], strides = [1, 1]} : vector<50x24xf32> to vector<1x24xf32>
    %c1_188 = arith.constant 1 : index
    %c504_189 = arith.constant 504 : index
    %257 = vector.load %arg13[%c1_188, %c504_189] : memref<2x600xf32, #tpu.memory_space<vmem>>, vector<1x24xf32>
    tpu.vector_store %arg13[%c1_188, %c504_189], %256 {strides = array<i32>} : memref<2x600xf32, #tpu.memory_space<vmem>>, vector<1x24xf32>,
    %258 = vector.extract_strided_slice %163 {offsets = [47, 0], sizes = [1, 24], strides = [1, 1]} : vector<50x24xf32> to vector<1x24xf32>
    %c1_190 = arith.constant 1 : index
    %c528_191 = arith.constant 528 : index
    %259 = vector.load %arg13[%c1_190, %c528_191] : memref<2x600xf32, #tpu.memory_space<vmem>>, vector<1x24xf32>
    tpu.vector_store %arg13[%c1_190, %c528_191], %258 {strides = array<i32>} : memref<2x600xf32, #tpu.memory_space<vmem>>, vector<1x24xf32>,
    %260 = vector.extract_strided_slice %163 {offsets = [48, 0], sizes = [1, 24], strides = [1, 1]} : vector<50x24xf32> to vector<1x24xf32>
    %c1_192 = arith.constant 1 : index
    %c552_193 = arith.constant 552 : index
    %261 = vector.load %arg13[%c1_192, %c552_193] : memref<2x600xf32, #tpu.memory_space<vmem>>, vector<1x24xf32>
    tpu.vector_store %arg13[%c1_192, %c552_193], %260 {strides = array<i32>} : memref<2x600xf32, #tpu.memory_space<vmem>>, vector<1x24xf32>,
    %262 = vector.extract_strided_slice %163 {offsets = [49, 0], sizes = [1, 24], strides = [1, 1]} : vector<50x24xf32> to vector<1x24xf32>
    %c1_194 = arith.constant 1 : index
    %c576_195 = arith.constant 576 : index
    %263 = vector.load %arg13[%c1_194, %c576_195] : memref<2x600xf32, #tpu.memory_space<vmem>>, vector<1x24xf32>
    tpu.vector_store %arg13[%c1_194, %c576_195], %262 {strides = array<i32>} : memref<2x600xf32, #tpu.memory_space<vmem>>, vector<1x24xf32>,
    %c0_196 = arith.constant 0 : index
    %c0_197 = arith.constant 0 : index
    %264 = vector.load %arg13[%c0_196, %c0_197] : memref<2x600xf32, #tpu.memory_space<vmem>>, vector<2x600xf32>
    %c0_198 = arith.constant 0 : index
    %c0_199 = arith.constant 0 : index
    %265 = vector.load %arg8[%c0_198, %c0_199] : memref<600x48xf32, #tpu.memory_space<vmem>>, vector<600x48xf32>
    %cst_200 = arith.constant dense<0.000000e+00> : vector<2x48xf32>
    %266 = tpu.matmul %264, %265, %cst_200 {dimension_numbers = #tpu.dot_dimension_numbers<[1], [0], [0], [1], [0, 0, 1, 1], [], []>} : vector<2x600xf32>, vector<600x48xf32>, vector<2x48xf32> -> vector<2x48xf32>
    %267 = math.tanh %266 : vector<2x48xf32>
    %c0_201 = arith.constant 0 : index
    %c0_202 = arith.constant 0 : index
    %268 = vector.load %arg9[%c0_201, %c0_202] : memref<48x1xf32, #tpu.memory_space<vmem>>, vector<48x1xf32>
    %cst_203 = arith.constant dense<0.000000e+00> : vector<2x1xf32>
    %269 = tpu.matmul %267, %268, %cst_203 {dimension_numbers = #tpu.dot_dimension_numbers<[1], [0], [0], [1], [0, 0, 1, 1], [], []>} : vector<2x48xf32>, vector<48x1xf32>, vector<2x1xf32> -> vector<2x1xf32>
    %c0_204 = arith.constant 0 : index
    %c0_205 = arith.constant 0 : index
    %270 = vector.load %arg10[%c0_204, %c0_205] : memref<1x1xf32, #tpu.memory_space<vmem>>, vector<1x1xf32>
    %271 = vector.broadcast %270 : vector<1x1xf32> to vector<2x1xf32>
    %272 = arith.addf %269, %271 : vector<2x1xf32>
    %273 = arith.negf %272 : vector<2x1xf32>
    %274 = math.exp %273 : vector<2x1xf32>
    %cst_206 = arith.constant 1.000000e+00 : f32
    %275 = vector.broadcast %cst_206 : f32 to vector<2x1xf32>
    %276 = arith.addf %275, %274 : vector<2x1xf32>
    %277 = arith.divf %275, %276 : vector<2x1xf32>
    %c0_207 = arith.constant 0 : index
    %c0_208 = arith.constant 0 : index
    %278 = vector.load %arg11[%c0_207, %c0_208] : memref<2x1xf32, #tpu.memory_space<vmem>>, vector<2x1xf32>
    tpu.vector_store %arg11[%c0_207, %c0_208], %277 {strides = array<i32>} : memref<2x1xf32, #tpu.memory_space<vmem>>, vector<2x1xf32>,
    return
  }
}

</mosaic_0001>

<llo_original>
// kernel: dv_forward.1
$region0: #{dv_forward.1}
  #allocation0 [shape = 'u32[]', space=smem, size = 0x4, offset = 0x4, fixed_abs, tag = 'smem constant byte address 0x4 - core index']
  #allocation1 [shape = 'u32[72,128]{1,0:T(1,128)}', space=vmem, size = 0x9000, scoped, tag = 'internal scratch']
  #allocation2 [shape = 'f32[50,300]{1,0:T(8,128)}', space=vmem, size = 0x15000, scoped, tag = 'scratch operand']
  #allocation3 [shape = 'f32[2,600]{1,0:T(2,128)}', space=vmem, size = 0x1400, scoped, tag = 'scratch operand']
  #allocation4 [shape = 'f32[1,1]{1,0:T(1,128)S(1)}', space=vmem, size = 0x200, scoped, tag = 'scoped memory for dv_forward.1']
  %s0 = inlined_call_operand.vmem [shape: f32[392,75], index: 0, kind: input, shape index: {}]
  %s1 = inlined_call_operand.vmem [shape: f32[75,12], index: 1, kind: input, shape index: {}]
  %s2 = inlined_call_operand.vmem [shape: f32[1,12], index: 2, kind: input, shape index: {}]
  %s3 = inlined_call_operand.vmem [shape: f32[1,12], index: 3, kind: input, shape index: {}]
  %s4 = inlined_call_operand.vmem [shape: bf16[625,196], index: 4, kind: input, shape index: {}]
  %s5 = inlined_call_operand.vmem [shape: f32[300,24], index: 5, kind: input, shape index: {}]
  %s6 = inlined_call_operand.vmem [shape: f32[1,24], index: 6, kind: input, shape index: {}]
  %s7 = inlined_call_operand.vmem [shape: f32[1,24], index: 7, kind: input, shape index: {}]
  %s8 = inlined_call_operand.vmem [shape: f32[600,48], index: 8, kind: input, shape index: {}]
  %s9 = inlined_call_operand.vmem [shape: f32[48,1], index: 9, kind: input, shape index: {}]
  %s10 = inlined_call_operand.<no memory space> [shape: f32[1,1], index: 10, kind: input, shape index: {}]
  %s11 = inlined_call_operand.vmem [shape: f32[2,1], index: 11, kind: output, shape index: {}]
  %s12 = sld [smem:[#allocation0]]
  $region54: #{dv_forward.1} parent=0
    _
  %s14 = ssub.s32 1, %s12
  %s15 = scalar_select 0, %s14, %s12
  %v16 = vstv %s10
  %17 = vst [vmem:[#allocation4] sm:$0x1] %v16
  // Predicated region
  $region2: #{dv_forward.1} parent=0 // pred_check
    _
  $region3: #{dv_forward.1} parent=0 // pred_check_branch
    %19 = sbr.rel (0) target = $region5
  $region4: #{dv_forward.1} parent=0 // pred_region
    _
  $region5: #{dv_forward.1} parent=0 // pred_fallthru
    _
  // Predicated region
  $region6: #{dv_forward.1} parent=0 // pred_check
    _
  $region7: #{dv_forward.1} parent=0 // pred_check_branch
    %21 = sbr.rel (0) target = $region9
  $region8: #{dv_forward.1} parent=0 // pred_region
    _
  $region9: #{dv_forward.1} parent=0 // pred_fallthru
    _
  // Predicated region
  $region10: #{dv_forward.1} parent=0 // pred_check
    _
  $region11: #{dv_forward.1} parent=0 // pred_check_branch
    %23 = sbr.rel (0) target = $region13
  $region12: #{dv_forward.1} parent=0 // pred_region
    _
  $region13: #{dv_forward.1} parent=0 // pred_fallthru
    _
  // Predicated region
  $region14: #{dv_forward.1} parent=0 // pred_check
    _
  $region15: #{dv_forward.1} parent=0 // pred_check_branch
    %25 = sbr.rel (0) target = $region17
  $region16: #{dv_forward.1} parent=0 // pred_region
    _
  $region17: #{dv_forward.1} parent=0 // pred_fallthru
    _
  // Predicated region
  $region18: #{dv_forward.1} parent=0 // pred_check
    _
  $region19: #{dv_forward.1} parent=0 // pred_check_branch
    %27 = sbr.rel (0) target = $region21
  $region20: #{dv_forward.1} parent=0 // pred_region
    _
  $region21: #{dv_forward.1} parent=0 // pred_fallthru
    _
  // Predicated region
  $region22: #{dv_forward.1} parent=0 // pred_check
    _
  $region23: #{dv_forward.1} parent=0 // pred_check_branch
    %29 = sbr.rel (0) target = $region25
  $region24: #{dv_forward.1} parent=0 // pred_region
    _
  $region25: #{dv_forward.1} parent=0 // pred_fallthru
    _
  // Predicated region
  $region26: #{dv_forward.1} parent=0 // pred_check
    _
  $region27: #{dv_forward.1} parent=0 // pred_check_branch
    %31 = sbr.rel (0) target = $region29
  $region28: #{dv_forward.1} parent=0 // pred_region
    _
  $region29: #{dv_forward.1} parent=0 // pred_fallthru
    _
  // Predicated region
  $region30: #{dv_forward.1} parent=0 // pred_check
    _
  $region31: #{dv_forward.1} parent=0 // pred_check_branch
    %33 = sbr.rel (0) target = $region33
  $region32: #{dv_forward.1} parent=0 // pred_region
    _
  $region33: #{dv_forward.1} parent=0 // pred_fallthru
    _
  // Predicated region
  $region34: #{dv_forward.1} parent=0 // pred_check
    _
  $region35: #{dv_forward.1} parent=0 // pred_check_branch
    %35 = sbr.rel (0) target = $region37
  $region36: #{dv_forward.1} parent=0 // pred_region
    _
  $region37: #{dv_forward.1} parent=0 // pred_fallthru
    _
  // Predicated region
  $region38: #{dv_forward.1} parent=0 // pred_check
    _
  $region39: #{dv_forward.1} parent=0 // pred_check_branch
    %37 = sbr.rel (0) target = $region41
  $region40: #{dv_forward.1} parent=0 // pred_region
    _
  $region41: #{dv_forward.1} parent=0 // pred_fallthru
    _
  // Predicated region
  $region42: #{dv_forward.1} parent=0 // pred_check
    _
  $region43: #{dv_forward.1} parent=0 // pred_check_branch
    %39 = sbr.rel (0) target = $region45
  $region44: #{dv_forward.1} parent=0 // pred_region
    _
  $region45: #{dv_forward.1} parent=0 // pred_fallthru
    _
  %v40 = vld [vmem:[%s0] sm:$0xff]
  %v41 = vld [vmem:[%s0 + $0x8] sm:$0xff]
  %v42 = vld [vmem:[%s0 + $0x10] sm:$0xff]
  %v43 = vld [vmem:[%s0 + $0x18] sm:$0xff]
  %v44 = vld [vmem:[%s0 + $0x20] sm:$0xff]
  %v45 = vld [vmem:[%s0 + $0x28] sm:$0xff]
  %v46 = vld [vmem:[%s0 + $0x30] sm:$0xff]
  %v47 = vld [vmem:[%s0 + $0x38] sm:$0xff]
  %v48 = vld [vmem:[%s0 + $0x40] sm:$0xff]
  %v49 = vld [vmem:[%s0 + $0x48] sm:$0xff]
  %v50 = vld [vmem:[%s0 + $0x50] sm:$0xff]
  %v51 = vld [vmem:[%s0 + $0x58] sm:$0xff]
  %v52 = vld [vmem:[%s0 + $0x60] sm:$0xff]
  %v53 = vld [vmem:[%s0 + $0x68] sm:$0xff]
  %v54 = vld [vmem:[%s0 + $0x70] sm:$0xff]
  %v55 = vld [vmem:[%s0 + $0x78] sm:$0xff]
  %v56 = vld [vmem:[%s0 + $0x80] sm:$0xff]
  %v57 = vld [vmem:[%s0 + $0x88] sm:$0xff]
  %v58 = vld [vmem:[%s0 + $0x90] sm:$0xff]
  %v59 = vld [vmem:[%s0 + $0x98] sm:$0xff]
  %v60 = vld [vmem:[%s0 + $0xa0] sm:$0xff]
  %v61 = vld [vmem:[%s0 + $0xa8] sm:$0xff]
  %v62 = vld [vmem:[%s0 + $0xb0] sm:$0xff]
  %v63 = vld [vmem:[%s0 + $0xb8] sm:$0xff]
  %v64 = vld [vmem:[%s0 + $0xc0] sm:$0xff]
  %v65 = vld [vmem:[%s0 + $0xc8] sm:$0xff]
  %v66 = vld [vmem:[%s0 + $0xd0] sm:$0xff]
  %v67 = vld [vmem:[%s0 + $0xd8] sm:$0xff]
  %v68 = vld [vmem:[%s0 + $0xe0] sm:$0xff]
  %v69 = vld [vmem:[%s0 + $0xe8] sm:$0xff]
  %v70 = vld [vmem:[%s0 + $0xf0] sm:$0xff]
  %v71 = vld [vmem:[%s0 + $0xf8] sm:$0xff]
  %v72 = vld [vmem:[%s0 + $0x100] sm:$0xff]
  %v73 = vld [vmem:[%s0 + $0x108] sm:$0xff]
  %v74 = vld [vmem:[%s0 + $0x110] sm:$0xff]
  %v75 = vld [vmem:[%s0 + $0x118] sm:$0xff]
  %v76 = vld [vmem:[%s0 + $0x120] sm:$0xff]
  %v77 = vld [vmem:[%s0 + $0x128] sm:$0xff]
  %v78 = vld [vmem:[%s0 + $0x130] sm:$0xff]
  %v79 = vld [vmem:[%s0 + $0x138] sm:$0xff]
  %v80 = vld [vmem:[%s0 + $0x140] sm:$0xff]
  %v81 = vld [vmem:[%s0 + $0x148] sm:$0xff]
  %v82 = vld [vmem:[%s0 + $0x150] sm:$0xff]
  %v83 = vld [vmem:[%s0 + $0x158] sm:$0xff]
  %v84 = vld [vmem:[%s0 + $0x160] sm:$0xff]
  %v85 = vld [vmem:[%s0 + $0x168] sm:$0xff]
  %v86 = vld [vmem:[%s0 + $0x170] sm:$0xff]
  %v87 = vld [vmem:[%s0 + $0x178] sm:$0xff]
  %v88 = vld [vmem:[%s0 + $0x180] sm:$0xff]
  %v89 = vld [vmem:[%s1] sm:$0xff]
  %v90 = vld [vmem:[%s1 + $0x8] sm:$0xff]
  %v91 = vld [vmem:[%s1 + $0x10] sm:$0xff]
  %v92 = vld [vmem:[%s1 + $0x18] sm:$0xff]
  %v93 = vld [vmem:[%s1 + $0x20] sm:$0xff]
  %v94 = vld [vmem:[%s1 + $0x28] sm:$0xff]
  %v95 = vld [vmem:[%s1 + $0x30] sm:$0xff]
  %v96 = vld [vmem:[%s1 + $0x38] sm:$0xff]
  %v97 = vld [vmem:[%s1 + $0x40] sm:$0xff]
  %v98 = vld [vmem:[%s1 + $0x48] sm:$0x7]
  %vm99 = vcmask 613376
  %v101 = vsel %vm99, %v40, 0
  %v104 = vsel %vm99, %v41, 0
  %v107 = vsel %vm99, %v42, 0
  %v110 = vsel %vm99, %v43, 0
  %v113 = vsel %vm99, %v44, 0
  %v116 = vsel %vm99, %v45, 0
  %v119 = vsel %vm99, %v46, 0
  %v122 = vsel %vm99, %v47, 0
  %v125 = vsel %vm99, %v48, 0
  %v128 = vsel %vm99, %v49, 0
  %v131 = vsel %vm99, %v50, 0
  %v134 = vsel %vm99, %v51, 0
  %v137 = vsel %vm99, %v52, 0
  %v140 = vsel %vm99, %v53, 0
  %v143 = vsel %vm99, %v54, 0
  %v146 = vsel %vm99, %v55, 0
  %v149 = vsel %vm99, %v56, 0
  %v152 = vsel %vm99, %v57, 0
  %v155 = vsel %vm99, %v58, 0
  %v158 = vsel %vm99, %v59, 0
  %v161 = vsel %vm99, %v60, 0
  %v164 = vsel %vm99, %v61, 0
  %v167 = vsel %vm99, %v62, 0
  %v170 = vsel %vm99, %v63, 0
  %v173 = vsel %vm99, %v64, 0
  %v176 = vsel %vm99, %v65, 0
  %v179 = vsel %vm99, %v66, 0
  %v182 = vsel %vm99, %v67, 0
  %v185 = vsel %vm99, %v68, 0
  %v188 = vsel %vm99, %v69, 0
  %v191 = vsel %vm99, %v70, 0
  %v194 = vsel %vm99, %v71, 0
  %v197 = vsel %vm99, %v72, 0
  %v200 = vsel %vm99, %v73, 0
  %v203 = vsel %vm99, %v74, 0
  %v206 = vsel %vm99, %v75, 0
  %v209 = vsel %vm99, %v76, 0
  %v212 = vsel %vm99, %v77, 0
  %v215 = vsel %vm99, %v78, 0
  %v218 = vsel %vm99, %v79, 0
  %v221 = vsel %vm99, %v80, 0
  %v224 = vsel %vm99, %v81, 0
  %v227 = vsel %vm99, %v82, 0
  %v230 = vsel %vm99, %v83, 0
  %v233 = vsel %vm99, %v84, 0
  %v236 = vsel %vm99, %v85, 0
  %v239 = vsel %vm99, %v86, 0
  %v242 = vsel %vm99, %v87, 0
  %v245 = vsel %vm99, %v88, 0
  %vm247 = vcmask 1042432
  %v249 = vsel %vm247, %v98, 0
  %251 = vmatpush.msra.mxu0 0.0
  %252 = vmatpush.msra.mxu0 0.0
  %253 = vmatpush.msra.mxu0 0.0
  %254 = vmatpush.msra.mxu0 0.0
  %255 = vmatpush.msra.mxu0 0.0
  %256 = vmatpush.msra.mxu0 0.0
  %257 = vmatpush.msra.mxu0 %v249
  %258 = vmatpush.msra.mxu0 %v97
  %259 = vmatpush.msra.mxu0 %v96
  %260 = vmatpush.msra.mxu0 %v95
  %261 = vmatpush.msra.mxu0 %v94
  %262 = vmatpush.msra.mxu0 %v93
  %263 = vmatpush.msra.mxu0 %v92
  %264 = vmatpush.msra.mxu0 %v91
  %265 = vmatpush.msra.mxu0 %v90
  %266 = vmatpush.msra.mxu0 %v89
  %267 = vmatmul.f32.gmra.mxu0 %v101
  %v268 = vpop.f32.mrf.mxu0
  %v269 = vadd.f32 0.0, %v268
  %270 = vmatmul.f32.gmra.mxu0 %v104
  %v271 = vpop.f32.mrf.mxu0
  %v272 = vadd.f32 0.0, %v271
  %273 = vmatmul.f32.gmra.mxu0 %v107
  %v274 = vpop.f32.mrf.mxu0
  %v275 = vadd.f32 0.0, %v274
  %276 = vmatmul.f32.gmra.mxu0 %v110
  %v277 = vpop.f32.mrf.mxu0
  %v278 = vadd.f32 0.0, %v277
  %279 = vmatmul.f32.gmra.mxu0 %v113
  %v280 = vpop.f32.mrf.mxu0
  %v281 = vadd.f32 0.0, %v280
  %282 = vmatmul.f32.gmra.mxu0 %v116
  %v283 = vpop.f32.mrf.mxu0
  %v284 = vadd.f32 0.0, %v283
  %285 = vmatmul.f32.gmra.mxu0 %v119
  %v286 = vpop.f32.mrf.mxu0
  %v287 = vadd.f32 0.0, %v286
  %288 = vmatmul.f32.gmra.mxu0 %v122
  %v289 = vpop.f32.mrf.mxu0
  %v290 = vadd.f32 0.0, %v289
  %291 = vmatmul.f32.gmra.mxu0 %v125
  %v292 = vpop.f32.mrf.mxu0
  %v293 = vadd.f32 0.0, %v292
  %294 = vmatmul.f32.gmra.mxu0 %v128
  %v295 = vpop.f32.mrf.mxu0
  %v296 = vadd.f32 0.0, %v295
  %297 = vmatmul.f32.gmra.mxu0 %v131
  %v298 = vpop.f32.mrf.mxu0
  %v299 = vadd.f32 0.0, %v298
  %300 = vmatmul.f32.gmra.mxu0 %v134
  %v301 = vpop.f32.mrf.mxu0
  %v302 = vadd.f32 0.0, %v301
  %303 = vmatmul.f32.gmra.mxu0 %v137
  %v304 = vpop.f32.mrf.mxu0
  %v305 = vadd.f32 0.0, %v304
  %306 = vmatmul.f32.gmra.mxu0 %v140
  %v307 = vpop.f32.mrf.mxu0
  %v308 = vadd.f32 0.0, %v307
  %309 = vmatmul.f32.gmra.mxu0 %v143
  %v310 = vpop.f32.mrf.mxu0
  %v311 = vadd.f32 0.0, %v310
  %312 = vmatmul.f32.gmra.mxu0 %v146
  %v313 = vpop.f32.mrf.mxu0
  %v314 = vadd.f32 0.0, %v313
  %315 = vmatmul.f32.gmra.mxu0 %v149
  %v316 = vpop.f32.mrf.mxu0
  %v317 = vadd.f32 0.0, %v316
  %318 = vmatmul.f32.gmra.mxu0 %v152
  %v319 = vpop.f32.mrf.mxu0
  %v320 = vadd.f32 0.0, %v319
  %321 = vmatmul.f32.gmra.mxu0 %v155
  %v322 = vpop.f32.mrf.mxu0
  %v323 = vadd.f32 0.0, %v322
  %324 = vmatmul.f32.gmra.mxu0 %v158
  %v325 = vpop.f32.mrf.mxu0
  %v326 = vadd.f32 0.0, %v325
  %327 = vmatmul.f32.gmra.mxu0 %v161
  %v328 = vpop.f32.mrf.mxu0
  %v329 = vadd.f32 0.0, %v328
  %330 = vmatmul.f32.gmra.mxu0 %v164
  %v331 = vpop.f32.mrf.mxu0
  %v332 = vadd.f32 0.0, %v331
  %333 = vmatmul.f32.gmra.mxu0 %v167
  %v334 = vpop.f32.mrf.mxu0
  %v335 = vadd.f32 0.0, %v334
  %336 = vmatmul.f32.gmra.mxu0 %v170
  %v337 = vpop.f32.mrf.mxu0
  %v338 = vadd.f32 0.0, %v337
  %339 = vmatmul.f32.gmra.mxu0 %v173
  %v340 = vpop.f32.mrf.mxu0
  %v341 = vadd.f32 0.0, %v340
  %342 = vmatmul.f32.gmra.mxu0 %v176
  %v343 = vpop.f32.mrf.mxu0
  %v344 = vadd.f32 0.0, %v343
  %345 = vmatmul.f32.gmra.mxu0 %v179
  %v346 = vpop.f32.mrf.mxu0
  %v347 = vadd.f32 0.0, %v346
  %348 = vmatmul.f32.gmra.mxu0 %v182
  %v349 = vpop.f32.mrf.mxu0
  %v350 = vadd.f32 0.0, %v349
  %351 = vmatmul.f32.gmra.mxu0 %v185
  %v352 = vpop.f32.mrf.mxu0
  %v353 = vadd.f32 0.0, %v352
  %354 = vmatmul.f32.gmra.mxu0 %v188
  %v355 = vpop.f32.mrf.mxu0
  %v356 = vadd.f32 0.0, %v355
  %357 = vmatmul.f32.gmra.mxu0 %v191
  %v358 = vpop.f32.mrf.mxu0
  %v359 = vadd.f32 0.0, %v358
  %360 = vmatmul.f32.gmra.mxu0 %v194
  %v361 = vpop.f32.mrf.mxu0
  %v362 = vadd.f32 0.0, %v361
  %363 = vmatmul.f32.gmra.mxu0 %v197
  %v364 = vpop.f32.mrf.mxu0
  %v365 = vadd.f32 0.0, %v364
  %366 = vmatmul.f32.gmra.mxu0 %v200
  %v367 = vpop.f32.mrf.mxu0
  %v368 = vadd.f32 0.0, %v367
  %369 = vmatmul.f32.gmra.mxu0 %v203
  %v370 = vpop.f32.mrf.mxu0
  %v371 = vadd.f32 0.0, %v370
  %372 = vmatmul.f32.gmra.mxu0 %v206
  %v373 = vpop.f32.mrf.mxu0
  %v374 = vadd.f32 0.0, %v373
  %375 = vmatmul.f32.gmra.mxu0 %v209
  %v376 = vpop.f32.mrf.mxu0
  %v377 = vadd.f32 0.0, %v376
  %378 = vmatmul.f32.gmra.mxu0 %v212
  %v379 = vpop.f32.mrf.mxu0
  %v380 = vadd.f32 0.0, %v379
  %381 = vmatmul.f32.gmra.mxu0 %v215
  %v382 = vpop.f32.mrf.mxu0
  %v383 = vadd.f32 0.0, %v382
  %384 = vmatmul.f32.gmra.mxu0 %v218
  %v385 = vpop.f32.mrf.mxu0
  %v386 = vadd.f32 0.0, %v385
  %387 = vmatmul.f32.gmra.mxu0 %v221
  %v388 = vpop.f32.mrf.mxu0
  %v389 = vadd.f32 0.0, %v388
  %390 = vmatmul.f32.gmra.mxu0 %v224
  %v391 = vpop.f32.mrf.mxu0
  %v392 = vadd.f32 0.0, %v391
  %393 = vmatmul.f32.gmra.mxu0 %v227
  %v394 = vpop.f32.mrf.mxu0
  %v395 = vadd.f32 0.0, %v394
  %396 = vmatmul.f32.gmra.mxu0 %v230
  %v397 = vpop.f32.mrf.mxu0
  %v398 = vadd.f32 0.0, %v397
  %399 = vmatmul.f32.gmra.mxu0 %v233
  %v400 = vpop.f32.mrf.mxu0
  %v401 = vadd.f32 0.0, %v400
  %402 = vmatmul.f32.gmra.mxu0 %v236
  %v403 = vpop.f32.mrf.mxu0
  %v404 = vadd.f32 0.0, %v403
  %405 = vmatmul.f32.gmra.mxu0 %v239
  %v406 = vpop.f32.mrf.mxu0
  %v407 = vadd.f32 0.0, %v406
  %408 = vmatmul.f32.gmra.mxu0 %v242
  %v409 = vpop.f32.mrf.mxu0
  %v410 = vadd.f32 0.0, %v409
  %411 = vmatmul.f32.gmra.mxu0 %v245
  %v412 = vpop.f32.mrf.mxu0
  %v413 = vadd.f32 0.0, %v412
  %414 = vdwg.mxu0
  %v415 = vld [vmem:[%s2] sm:$0x1]
  %v416 = vld [vmem:[%s3] sm:$0x1]
  %vm417 = vcmask 97280
  %v418 = vsel %vm417, %v269, 0.0
  %v419 = vsel %vm417, %v272, 0.0
  %v420 = vadd.f32 %v418, %v419
  %v421 = vsel %vm417, %v275, 0.0
  %v422 = vadd.f32 %v420, %v421
  %v423 = vsel %vm417, %v278, 0.0
  %v424 = vadd.f32 %v422, %v423
  %v425 = vsel %vm417, %v281, 0.0
  %v426 = vadd.f32 %v424, %v425
  %v427 = vsel %vm417, %v284, 0.0
  %v428 = vadd.f32 %v426, %v427
  %v429 = vsel %vm417, %v287, 0.0
  %v430 = vadd.f32 %v428, %v429
  %v431 = vsel %vm417, %v290, 0.0
  %v432 = vadd.f32 %v430, %v431
  %v433 = vsel %vm417, %v293, 0.0
  %v434 = vadd.f32 %v432, %v433
  %v435 = vsel %vm417, %v296, 0.0
  %v436 = vadd.f32 %v434, %v435
  %v437 = vsel %vm417, %v299, 0.0
  %v438 = vadd.f32 %v436, %v437
  %v439 = vsel %vm417, %v302, 0.0
  %v440 = vadd.f32 %v438, %v439
  %v441 = vsel %vm417, %v305, 0.0
  %v442 = vadd.f32 %v440, %v441
  %v443 = vsel %vm417, %v308, 0.0
  %v444 = vadd.f32 %v442, %v443
  %v445 = vsel %vm417, %v311, 0.0
  %v446 = vadd.f32 %v444, %v445
  %v447 = vsel %vm417, %v314, 0.0
  %v448 = vadd.f32 %v446, %v447
  %v449 = vsel %vm417, %v317, 0.0
  %v450 = vadd.f32 %v448, %v449
  %v451 = vsel %vm417, %v320, 0.0
  %v452 = vadd.f32 %v450, %v451
  %v453 = vsel %vm417, %v323, 0.0
  %v454 = vadd.f32 %v452, %v453
  %v455 = vsel %vm417, %v326, 0.0
  %v456 = vadd.f32 %v454, %v455
  %v457 = vsel %vm417, %v329, 0.0
  %v458 = vadd.f32 %v456, %v457
  %v459 = vsel %vm417, %v332, 0.0
  %v460 = vadd.f32 %v458, %v459
  %v461 = vsel %vm417, %v335, 0.0
  %v462 = vadd.f32 %v460, %v461
  %v463 = vsel %vm417, %v338, 0.0
  %v464 = vadd.f32 %v462, %v463
  %v465 = vsel %vm417, %v341, 0.0
  %v466 = vadd.f32 %v464, %v465
  %v467 = vsel %vm417, %v344, 0.0
  %v468 = vadd.f32 %v466, %v467
  %v469 = vsel %vm417, %v347, 0.0
  %v470 = vadd.f32 %v468, %v469
  %v471 = vsel %vm417, %v350, 0.0
  %v472 = vadd.f32 %v470, %v471
  %v473 = vsel %vm417, %v353, 0.0
  %v474 = vadd.f32 %v472, %v473
  %v475 = vsel %vm417, %v356, 0.0
  %v476 = vadd.f32 %v474, %v475
  %v477 = vsel %vm417, %v359, 0.0
  %v478 = vadd.f32 %v476, %v477
  %v479 = vsel %vm417, %v362, 0.0
  %v480 = vadd.f32 %v478, %v479
  %v481 = vsel %vm417, %v365, 0.0
  %v482 = vadd.f32 %v480, %v481
  %v483 = vsel %vm417, %v368, 0.0
  %v484 = vadd.f32 %v482, %v483
  %v485 = vsel %vm417, %v371, 0.0
  %v486 = vadd.f32 %v484, %v485
  %v487 = vsel %vm417, %v374, 0.0
  %v488 = vadd.f32 %v486, %v487
  %v489 = vsel %vm417, %v377, 0.0
  %v490 = vadd.f32 %v488, %v489
  %v491 = vsel %vm417, %v380, 0.0
  %v492 = vadd.f32 %v490, %v491
  %v493 = vsel %vm417, %v383, 0.0
  %v494 = vadd.f32 %v492, %v493
  %v495 = vsel %vm417, %v386, 0.0
  %v496 = vadd.f32 %v494, %v495
  %v497 = vsel %vm417, %v389, 0.0
  %v498 = vadd.f32 %v496, %v497
  %v499 = vsel %vm417, %v392, 0.0
  %v500 = vadd.f32 %v498, %v499
  %v501 = vsel %vm417, %v395, 0.0
  %v502 = vadd.f32 %v500, %v501
  %v503 = vsel %vm417, %v398, 0.0
  %v504 = vadd.f32 %v502, %v503
  %v505 = vsel %vm417, %v401, 0.0
  %v506 = vadd.f32 %v504, %v505
  %v507 = vsel %vm417, %v404, 0.0
  %v508 = vadd.f32 %v506, %v507
  %v509 = vsel %vm417, %v407, 0.0
  %v510 = vadd.f32 %v508, %v509
  %v511 = vsel %vm417, %v410, 0.0
  %v512 = vadd.f32 %v510, %v511
  %v513 = vsel %vm417, %v413, 0.0
  %v514 = vadd.f32 %v512, %v513
  %v515 = vrot.slane %v514, 4
  %v516 = vadd.f32 %v514, %v515
  %v517 = vrot.slane %v516, 2
  %v518 = vadd.f32 %v516, %v517
  %v519 = vrot.slane %v518, 1
  %v520 = vadd.f32 %v518, %v519
  %v521 = vrcp.pop 392.0
  %v522 = vmul.f32 392.0, %v521
  %v523 = vsub.f32 1.0, %v522
  %v524 = vmul.f32 %v521, %v523
  %v525 = vadd.f32 %v521, %v524
  %vm526 = vweird.f32 %v521
  %v527 = vsel %vm526, %v521, %v525
  %v528 = vmul.f32 %v520, %v527
  %v529 = vsub.f32 %v269, %v528
  %v530 = vsub.f32 %v272, %v528
  %v531 = vsub.f32 %v275, %v528
  %v532 = vsub.f32 %v278, %v528
  %v533 = vsub.f32 %v281, %v528
  %v534 = vsub.f32 %v284, %v528
  %v535 = vsub.f32 %v287, %v528
  %v536 = vsub.f32 %v290, %v528
  %v537 = vsub.f32 %v293, %v528
  %v538 = vsub.f32 %v296, %v528
  %v539 = vsub.f32 %v299, %v528
  %v540 = vsub.f32 %v302, %v528
  %v541 = vsub.f32 %v305, %v528
  %v542 = vsub.f32 %v308, %v528
  %v543 = vsub.f32 %v311, %v528
  %v544 = vsub.f32 %v314, %v528
  %v545 = vsub.f32 %v317, %v528
  %v546 = vsub.f32 %v320, %v528
  %v547 = vsub.f32 %v323, %v528
  %v548 = vsub.f32 %v326, %v528
  %v549 = vsub.f32 %v329, %v528
  %v550 = vsub.f32 %v332, %v528
  %v551 = vsub.f32 %v335, %v528
  %v552 = vsub.f32 %v338, %v528
  %v553 = vsub.f32 %v341, %v528
  %v554 = vsub.f32 %v344, %v528
  %v555 = vsub.f32 %v347, %v528
  %v556 = vsub.f32 %v350, %v528
  %v557 = vsub.f32 %v353, %v528
  %v558 = vsub.f32 %v356, %v528
  %v559 = vsub.f32 %v359, %v528
  %v560 = vsub.f32 %v362, %v528
  %v561 = vsub.f32 %v365, %v528
  %v562 = vsub.f32 %v368, %v528
  %v563 = vsub.f32 %v371, %v528
  %v564 = vsub.f32 %v374, %v528
  %v565 = vsub.f32 %v377, %v528
  %v566 = vsub.f32 %v380, %v528
  %v567 = vsub.f32 %v383, %v528
  %v568 = vsub.f32 %v386, %v528
  %v569 = vsub.f32 %v389, %v528
  %v570 = vsub.f32 %v392, %v528
  %v571 = vsub.f32 %v395, %v528
  %v572 = vsub.f32 %v398, %v528
  %v573 = vsub.f32 %v401, %v528
  %v574 = vsub.f32 %v404, %v528
  %v575 = vsub.f32 %v407, %v528
  %v576 = vsub.f32 %v410, %v528
  %v577 = vsub.f32 %v413, %v528
  %v578 = vmul.f32 %v529, %v529
  %v579 = vmul.f32 %v530, %v530
  %v580 = vmul.f32 %v531, %v531
  %v581 = vmul.f32 %v532, %v532
  %v582 = vmul.f32 %v533, %v533
  %v583 = vmul.f32 %v534, %v534
  %v584 = vmul.f32 %v535, %v535
  %v585 = vmul.f32 %v536, %v536
  %v586 = vmul.f32 %v537, %v537
  %v587 = vmul.f32 %v538, %v538
  %v588 = vmul.f32 %v539, %v539
  %v589 = vmul.f32 %v540, %v540
  %v590 = vmul.f32 %v541, %v541
  %v591 = vmul.f32 %v542, %v542
  %v592 = vmul.f32 %v543, %v543
  %v593 = vmul.f32 %v544, %v544
  %v594 = vmul.f32 %v545, %v545
  %v595 = vmul.f32 %v546, %v546
  %v596 = vmul.f32 %v547, %v547
  %v597 = vmul.f32 %v548, %v548
  %v598 = vmul.f32 %v549, %v549
  %v599 = vmul.f32 %v550, %v550
  %v600 = vmul.f32 %v551, %v551
  %v601 = vmul.f32 %v552, %v552
  %v602 = vmul.f32 %v553, %v553
  %v603 = vmul.f32 %v554, %v554
  %v604 = vmul.f32 %v555, %v555
  %v605 = vmul.f32 %v556, %v556
  %v606 = vmul.f32 %v557, %v557
  %v607 = vmul.f32 %v558, %v558
  %v608 = vmul.f32 %v559, %v559
  %v609 = vmul.f32 %v560, %v560
  %v610 = vmul.f32 %v561, %v561
  %v611 = vmul.f32 %v562, %v562
  %v612 = vmul.f32 %v563, %v563
  %v613 = vmul.f32 %v564, %v564
  %v614 = vmul.f32 %v565, %v565
  %v615 = vmul.f32 %v566, %v566
  %v616 = vmul.f32 %v567, %v567
  %v617 = vmul.f32 %v568, %v568
  %v618 = vmul.f32 %v569, %v569
  %v619 = vmul.f32 %v570, %v570
  %v620 = vmul.f32 %v571, %v571
  %v621 = vmul.f32 %v572, %v572
  %v622 = vmul.f32 %v573, %v573
  %v623 = vmul.f32 %v574, %v574
  %v624 = vmul.f32 %v575, %v575
  %v625 = vmul.f32 %v576, %v576
  %v626 = vmul.f32 %v577, %v577
  %v627 = vsel %vm417, %v578, 0.0
  %v628 = vsel %vm417, %v579, 0.0
  %v629 = vadd.f32 %v627, %v628
  %v630 = vsel %vm417, %v580, 0.0
  %v631 = vadd.f32 %v629, %v630
  %v632 = vsel %vm417, %v581, 0.0
  %v633 = vadd.f32 %v631, %v632
  %v634 = vsel %vm417, %v582, 0.0
  %v635 = vadd.f32 %v633, %v634
  %v636 = vsel %vm417, %v583, 0.0
  %v637 = vadd.f32 %v635, %v636
  %v638 = vsel %vm417, %v584, 0.0
  %v639 = vadd.f32 %v637, %v638
  %v640 = vsel %vm417, %v585, 0.0
  %v641 = vadd.f32 %v639, %v640
  %v642 = vsel %vm417, %v586, 0.0
  %v643 = vadd.f32 %v641, %v642
  %v644 = vsel %vm417, %v587, 0.0
  %v645 = vadd.f32 %v643, %v644
  %v646 = vsel %vm417, %v588, 0.0
  %v647 = vadd.f32 %v645, %v646
  %v648 = vsel %vm417, %v589, 0.0
  %v649 = vadd.f32 %v647, %v648
  %v650 = vsel %vm417, %v590, 0.0
  %v651 = vadd.f32 %v649, %v650
  %v652 = vsel %vm417, %v591, 0.0
  %v653 = vadd.f32 %v651, %v652
  %v654 = vsel %vm417, %v592, 0.0
  %v655 = vadd.f32 %v653, %v654
  %v656 = vsel %vm417, %v593, 0.0
  %v657 = vadd.f32 %v655, %v656
  %v658 = vsel %vm417, %v594, 0.0
  %v659 = vadd.f32 %v657, %v658
  %v660 = vsel %vm417, %v595, 0.0
  %v661 = vadd.f32 %v659, %v660
  %v662 = vsel %vm417, %v596, 0.0
  %v663 = vadd.f32 %v661, %v662
  %v664 = vsel %vm417, %v597, 0.0
  %v665 = vadd.f32 %v663, %v664
  %v666 = vsel %vm417, %v598, 0.0
  %v667 = vadd.f32 %v665, %v666
  %v668 = vsel %vm417, %v599, 0.0
  %v669 = vadd.f32 %v667, %v668
  %v670 = vsel %vm417, %v600, 0.0
  %v671 = vadd.f32 %v669, %v670
  %v672 = vsel %vm417, %v601, 0.0
  %v673 = vadd.f32 %v671, %v672
  %v674 = vsel %vm417, %v602, 0.0
  %v675 = vadd.f32 %v673, %v674
  %v676 = vsel %vm417, %v603, 0.0
  %v677 = vadd.f32 %v675, %v676
  %v678 = vsel %vm417, %v604, 0.0
  %v679 = vadd.f32 %v677, %v678
  %v680 = vsel %vm417, %v605, 0.0
  %v681 = vadd.f32 %v679, %v680
  %v682 = vsel %vm417, %v606, 0.0
  %v683 = vadd.f32 %v681, %v682
  %v684 = vsel %vm417, %v607, 0.0
  %v685 = vadd.f32 %v683, %v684
  %v686 = vsel %vm417, %v608, 0.0
  %v687 = vadd.f32 %v685, %v686
  %v688 = vsel %vm417, %v609, 0.0
  %v689 = vadd.f32 %v687, %v688
  %v690 = vsel %vm417, %v610, 0.0
  %v691 = vadd.f32 %v689, %v690
  %v692 = vsel %vm417, %v611, 0.0
  %v693 = vadd.f32 %v691, %v692
  %v694 = vsel %vm417, %v612, 0.0
  %v695 = vadd.f32 %v693, %v694
  %v696 = vsel %vm417, %v613, 0.0
  %v697 = vadd.f32 %v695, %v696
  %v698 = vsel %vm417, %v614, 0.0
  %v699 = vadd.f32 %v697, %v698
  %v700 = vsel %vm417, %v615, 0.0
  %v701 = vadd.f32 %v699, %v700
  %v702 = vsel %vm417, %v616, 0.0
  %v703 = vadd.f32 %v701, %v702
  %v704 = vsel %vm417, %v617, 0.0
  %v705 = vadd.f32 %v703, %v704
  %v706 = vsel %vm417, %v618, 0.0
  %v707 = vadd.f32 %v705, %v706
  %v708 = vsel %vm417, %v619, 0.0
  %v709 = vadd.f32 %v707, %v708
  %v710 = vsel %vm417, %v620, 0.0
  %v711 = vadd.f32 %v709, %v710
  %v712 = vsel %vm417, %v621, 0.0
  %v713 = vadd.f32 %v711, %v712
  %v714 = vsel %vm417, %v622, 0.0
  %v715 = vadd.f32 %v713, %v714
  %v716 = vsel %vm417, %v623, 0.0
  %v717 = vadd.f32 %v715, %v716
  %v718 = vsel %vm417, %v624, 0.0
  %v719 = vadd.f32 %v717, %v718
  %v720 = vsel %vm417, %v625, 0.0
  %v721 = vadd.f32 %v719, %v720
  %v722 = vsel %vm417, %v626, 0.0
  %v723 = vadd.f32 %v721, %v722
  %v724 = vrot.slane %v723, 4
  %v725 = vadd.f32 %v723, %v724
  %v726 = vrot.slane %v725, 2
  %v727 = vadd.f32 %v725, %v726
  %v728 = vrot.slane %v727, 1
  %v729 = vadd.f32 %v727, %v728
  %v730 = vmul.f32 %v729, %v527
  %v731 = vadd.f32 %v730, 1e-05
  %v732 = vrsqrt.pop %v731
  %v733 = vmul.f32 %v732, %v731
  %v734 = vmul.f32 %v733, %v732
  %v735 = vmul.f32 0.5, %v734
  %v736 = vsub.f32 1.5, %v735
  %v737 = vmul.f32 %v732, %v736
  %vm738 = vweird.f32 %v731
  %vm739 = vweird.f32 %v732
  %vm740 = vmor %vm738, %vm739
  %v741 = vsel %vm740, %v732, %v737
  %v742 = vmul.f32 %v415, %v741
  %v744 = vperm.slane %v742, 0
  %v746 = vmul.f32 %v529, %v744
  %v747 = vmul.f32 %v530, %v744
  %v748 = vmul.f32 %v531, %v744
  %v749 = vmul.f32 %v532, %v744
  %v750 = vmul.f32 %v533, %v744
  %v751 = vmul.f32 %v534, %v744
  %v752 = vmul.f32 %v535, %v744
  %v753 = vmul.f32 %v536, %v744
  %v754 = vmul.f32 %v537, %v744
  %v755 = vmul.f32 %v538, %v744
  %v756 = vmul.f32 %v539, %v744
  %v757 = vmul.f32 %v540, %v744
  %v758 = vmul.f32 %v541, %v744
  %v759 = vmul.f32 %v542, %v744
  %v760 = vmul.f32 %v543, %v744
  %v761 = vmul.f32 %v544, %v744
  %v762 = vmul.f32 %v545, %v744
  %v763 = vmul.f32 %v546, %v744
  %v764 = vmul.f32 %v547, %v744
  %v765 = vmul.f32 %v548, %v744
  %v766 = vmul.f32 %v549, %v744
  %v767 = vmul.f32 %v550, %v744
  %v768 = vmul.f32 %v551, %v744
  %v769 = vmul.f32 %v552, %v744
  %v770 = vmul.f32 %v553, %v744
  %v771 = vmul.f32 %v554, %v744
  %v772 = vmul.f32 %v555, %v744
  %v773 = vmul.f32 %v556, %v744
  %v774 = vmul.f32 %v557, %v744
  %v775 = vmul.f32 %v558, %v744
  %v776 = vmul.f32 %v559, %v744
  %v777 = vmul.f32 %v560, %v744
  %v778 = vmul.f32 %v561, %v744
  %v779 = vmul.f32 %v562, %v744
  %v780 = vmul.f32 %v563, %v744
  %v781 = vmul.f32 %v564, %v744
  %v782 = vmul.f32 %v565, %v744
  %v783 = vmul.f32 %v566, %v744
  %v784 = vmul.f32 %v567, %v744
  %v785 = vmul.f32 %v568, %v744
  %v786 = vmul.f32 %v569, %v744
  %v787 = vmul.f32 %v570, %v744
  %v788 = vmul.f32 %v571, %v744
  %v789 = vmul.f32 %v572, %v744
  %v790 = vmul.f32 %v573, %v744
  %v791 = vmul.f32 %v574, %v744
  %v792 = vmul.f32 %v575, %v744
  %v793 = vmul.f32 %v576, %v744
  %v794 = vmul.f32 %v577, %v744
  %v796 = vperm.slane %v416, 0
  %v798 = vadd.f32 %v746, %v796
  %v799 = vadd.f32 %v747, %v796
  %v800 = vadd.f32 %v748, %v796
  %v801 = vadd.f32 %v749, %v796
  %v802 = vadd.f32 %v750, %v796
  %v803 = vadd.f32 %v751, %v796
  %v804 = vadd.f32 %v752, %v796
  %v805 = vadd.f32 %v753, %v796
  %v806 = vadd.f32 %v754, %v796
  %v807 = vadd.f32 %v755, %v796
  %v808 = vadd.f32 %v756, %v796
  %v809 = vadd.f32 %v757, %v796
  %v810 = vadd.f32 %v758, %v796
  %v811 = vadd.f32 %v759, %v796
  %v812 = vadd.f32 %v760, %v796
  %v813 = vadd.f32 %v761, %v796
  %v814 = vadd.f32 %v762, %v796
  %v815 = vadd.f32 %v763, %v796
  %v816 = vadd.f32 %v764, %v796
  %v817 = vadd.f32 %v765, %v796
  %v818 = vadd.f32 %v766, %v796
  %v819 = vadd.f32 %v767, %v796
  %v820 = vadd.f32 %v768, %v796
  %v821 = vadd.f32 %v769, %v796
  %v822 = vadd.f32 %v770, %v796
  %v823 = vadd.f32 %v771, %v796
  %v824 = vadd.f32 %v772, %v796
  %v825 = vadd.f32 %v773, %v796
  %v826 = vadd.f32 %v774, %v796
  %v827 = vadd.f32 %v775, %v796
  %v828 = vadd.f32 %v776, %v796
  %v829 = vadd.f32 %v777, %v796
  %v830 = vadd.f32 %v778, %v796
  %v831 = vadd.f32 %v779, %v796
  %v832 = vadd.f32 %v780, %v796
  %v833 = vadd.f32 %v781, %v796
  %v834 = vadd.f32 %v782, %v796
  %v835 = vadd.f32 %v783, %v796
  %v836 = vadd.f32 %v784, %v796
  %v837 = vadd.f32 %v785, %v796
  %v838 = vadd.f32 %v786, %v796
  %v839 = vadd.f32 %v787, %v796
  %v840 = vadd.f32 %v788, %v796
  %v841 = vadd.f32 %v789, %v796
  %v842 = vadd.f32 %v790, %v796
  %v843 = vadd.f32 %v791, %v796
  %v844 = vadd.f32 %v792, %v796
  %v845 = vadd.f32 %v793, %v796
  %v846 = vadd.f32 %v794, %v796
  %vm847 = vcmp.gt.f32.partialorder %v798, 0.0
  %vm848 = vcmp.gt.f32.partialorder %v799, 0.0
  %vm849 = vcmp.gt.f32.partialorder %v800, 0.0
  %vm850 = vcmp.gt.f32.partialorder %v801, 0.0
  %vm851 = vcmp.gt.f32.partialorder %v802, 0.0
  %vm852 = vcmp.gt.f32.partialorder %v803, 0.0
  %vm853 = vcmp.gt.f32.partialorder %v804, 0.0
  %vm854 = vcmp.gt.f32.partialorder %v805, 0.0
  %vm855 = vcmp.gt.f32.partialorder %v806, 0.0
  %vm856 = vcmp.gt.f32.partialorder %v807, 0.0
  %vm857 = vcmp.gt.f32.partialorder %v808, 0.0
  %vm858 = vcmp.gt.f32.partialorder %v809, 0.0
  %vm859 = vcmp.gt.f32.partialorder %v810, 0.0
  %vm860 = vcmp.gt.f32.partialorder %v811, 0.0
  %vm861 = vcmp.gt.f32.partialorder %v812, 0.0
  %vm862 = vcmp.gt.f32.partialorder %v813, 0.0
  %vm863 = vcmp.gt.f32.partialorder %v814, 0.0
  %vm864 = vcmp.gt.f32.partialorder %v815, 0.0
  %vm865 = vcmp.gt.f32.partialorder %v816, 0.0
  %vm866 = vcmp.gt.f32.partialorder %v817, 0.0
  %vm867 = vcmp.gt.f32.partialorder %v818, 0.0
  %vm868 = vcmp.gt.f32.partialorder %v819, 0.0
  %vm869 = vcmp.gt.f32.partialorder %v820, 0.0
  %vm870 = vcmp.gt.f32.partialorder %v821, 0.0
  %vm871 = vcmp.gt.f32.partialorder %v822, 0.0
  %vm872 = vcmp.gt.f32.partialorder %v823, 0.0
  %vm873 = vcmp.gt.f32.partialorder %v824, 0.0
  %vm874 = vcmp.gt.f32.partialorder %v825, 0.0
  %vm875 = vcmp.gt.f32.partialorder %v826, 0.0
  %vm876 = vcmp.gt.f32.partialorder %v827, 0.0
  %vm877 = vcmp.gt.f32.partialorder %v828, 0.0
  %vm878 = vcmp.gt.f32.partialorder %v829, 0.0
  %vm879 = vcmp.gt.f32.partialorder %v830, 0.0
  %vm880 = vcmp.gt.f32.partialorder %v831, 0.0
  %vm881 = vcmp.gt.f32.partialorder %v832, 0.0
  %vm882 = vcmp.gt.f32.partialorder %v833, 0.0
  %vm883 = vcmp.gt.f32.partialorder %v834, 0.0
  %vm884 = vcmp.gt.f32.partialorder %v835, 0.0
  %vm885 = vcmp.gt.f32.partialorder %v836, 0.0
  %vm886 = vcmp.gt.f32.partialorder %v837, 0.0
  %vm887 = vcmp.gt.f32.partialorder %v838, 0.0
  %vm888 = vcmp.gt.f32.partialorder %v839, 0.0
  %vm889 = vcmp.gt.f32.partialorder %v840, 0.0
  %vm890 = vcmp.gt.f32.partialorder %v841, 0.0
  %vm891 = vcmp.gt.f32.partialorder %v842, 0.0
  %vm892 = vcmp.gt.f32.partialorder %v843, 0.0
  %vm893 = vcmp.gt.f32.partialorder %v844, 0.0
  %vm894 = vcmp.gt.f32.partialorder %v845, 0.0
  %vm895 = vcmp.gt.f32.partialorder %v846, 0.0
  %v896 = vmul.f32 %v798, 0.2
  %v897 = vmul.f32 %v799, 0.2
  %v898 = vmul.f32 %v800, 0.2
  %v899 = vmul.f32 %v801, 0.2
  %v900 = vmul.f32 %v802, 0.2
  %v901 = vmul.f32 %v803, 0.2
  %v902 = vmul.f32 %v804, 0.2
  %v903 = vmul.f32 %v805, 0.2
  %v904 = vmul.f32 %v806, 0.2
  %v905 = vmul.f32 %v807, 0.2
  %v906 = vmul.f32 %v808, 0.2
  %v907 = vmul.f32 %v809, 0.2
  %v908 = vmul.f32 %v810, 0.2
  %v909 = vmul.f32 %v811, 0.2
  %v910 = vmul.f32 %v812, 0.2
  %v911 = vmul.f32 %v813, 0.2
  %v912 = vmul.f32 %v814, 0.2
  %v913 = vmul.f32 %v815, 0.2
  %v914 = vmul.f32 %v816, 0.2
  %v915 = vmul.f32 %v817, 0.2
  %v916 = vmul.f32 %v818, 0.2
  %v917 = vmul.f32 %v819, 0.2
  %v918 = vmul.f32 %v820, 0.2
  %v919 = vmul.f32 %v821, 0.2
  %v920 = vmul.f32 %v822, 0.2
  %v921 = vmul.f32 %v823, 0.2
  %v922 = vmul.f32 %v824, 0.2
  %v923 = vmul.f32 %v825, 0.2
  %v924 = vmul.f32 %v826, 0.2
  %v925 = vmul.f32 %v827, 0.2
  %v926 = vmul.f32 %v828, 0.2
  %v927 = vmul.f32 %v829, 0.2
  %v928 = vmul.f32 %v830, 0.2
  %v929 = vmul.f32 %v831, 0.2
  %v930 = vmul.f32 %v832, 0.2
  %v931 = vmul.f32 %v833, 0.2
  %v932 = vmul.f32 %v834, 0.2
  %v933 = vmul.f32 %v835, 0.2
  %v934 = vmul.f32 %v836, 0.2
  %v935 = vmul.f32 %v837, 0.2
  %v936 = vmul.f32 %v838, 0.2
  %v937 = vmul.f32 %v839, 0.2
  %v938 = vmul.f32 %v840, 0.2
  %v939 = vmul.f32 %v841, 0.2
  %v940 = vmul.f32 %v842, 0.2
  %v941 = vmul.f32 %v843, 0.2
  %v942 = vmul.f32 %v844, 0.2
  %v943 = vmul.f32 %v845, 0.2
  %v944 = vmul.f32 %v846, 0.2
  %v945 = vsel %vm847, %v798, %v896
  %v946 = vsel %vm848, %v799, %v897
  %v947 = vsel %vm849, %v800, %v898
  %v948 = vsel %vm850, %v801, %v899
  %v949 = vsel %vm851, %v802, %v900
  %v950 = vsel %vm852, %v803, %v901
  %v951 = vsel %vm853, %v804, %v902
  %v952 = vsel %vm854, %v805, %v903
  %v953 = vsel %vm855, %v806, %v904
  %v954 = vsel %vm856, %v807, %v905
  %v955 = vsel %vm857, %v808, %v906
  %v956 = vsel %vm858, %v809, %v907
  %v957 = vsel %vm859, %v810, %v908
  %v958 = vsel %vm860, %v811, %v909
  %v959 = vsel %vm861, %v812, %v910
  %v960 = vsel %vm862, %v813, %v911
  %v961 = vsel %vm863, %v814, %v912
  %v962 = vsel %vm864, %v815, %v913
  %v963 = vsel %vm865, %v816, %v914
  %v964 = vsel %vm866, %v817, %v915
  %v965 = vsel %vm867, %v818, %v916
  %v966 = vsel %vm868, %v819, %v917
  %v967 = vsel %vm869, %v820, %v918
  %v968 = vsel %vm870, %v821, %v919
  %v969 = vsel %vm871, %v822, %v920
  %v970 = vsel %vm872, %v823, %v921
  %v971 = vsel %vm873, %v824, %v922
  %v972 = vsel %vm874, %v825, %v923
  %v973 = vsel %vm875, %v826, %v924
  %v974 = vsel %vm876, %v827, %v925
  %v975 = vsel %vm877, %v828, %v926
  %v976 = vsel %vm878, %v829, %v927
  %v977 = vsel %vm879, %v830, %v928
  %v978 = vsel %vm880, %v831, %v929
  %v979 = vsel %vm881, %v832, %v930
  %v980 = vsel %vm882, %v833, %v931
  %v981 = vsel %vm883, %v834, %v932
  %v982 = vsel %vm884, %v835, %v933
  %v983 = vsel %vm885, %v836, %v934
  %v984 = vsel %vm886, %v837, %v935
  %v985 = vsel %vm887, %v838, %v936
  %v986 = vsel %vm888, %v839, %v937
  %v987 = vsel %vm889, %v840, %v938
  %v988 = vsel %vm890, %v841, %v939
  %v989 = vsel %vm891, %v842, %v940
  %v990 = vsel %vm892, %v843, %v941
  %v991 = vsel %vm893, %v844, %v942
  %v992 = vsel %vm894, %v845, %v943
  %v993 = vsel %vm895, %v846, %v944
  %v994 = vld [vmem:[%s4] sm:$0xff]
  %v995 = vld [vmem:[%s4 + $0x8] sm:$0xff]
  %v996 = vld [vmem:[%s4 + $0x10] sm:$0xff]
  %v997 = vld [vmem:[%s4 + $0x18] sm:$0xff]
  %v998 = vld [vmem:[%s4 + $0x20] sm:$0xff]
  %v999 = vld [vmem:[%s4 + $0x28] sm:$0xff]
  %v1000 = vld [vmem:[%s4 + $0x30] sm:$0xff]
  %v1001 = vld [vmem:[%s4 + $0x38] sm:$0xff]
  %v1002 = vld [vmem:[%s4 + $0x40] sm:$0xff]
  %v1003 = vld [vmem:[%s4 + $0x48] sm:$0xff]
  %v1004 = vld [vmem:[%s4 + $0x50] sm:$0xff]
  %v1005 = vld [vmem:[%s4 + $0x58] sm:$0xff]
  %v1006 = vld [vmem:[%s4 + $0x60] sm:$0xff]
  %v1007 = vld [vmem:[%s4 + $0x68] sm:$0xff]
  %v1008 = vld [vmem:[%s4 + $0x70] sm:$0xff]
  %v1009 = vld [vmem:[%s4 + $0x78] sm:$0xff]
  %v1010 = vld [vmem:[%s4 + $0x80] sm:$0xff]
  %v1011 = vld [vmem:[%s4 + $0x88] sm:$0xff]
  %v1012 = vld [vmem:[%s4 + $0x90] sm:$0xff]
  %v1013 = vld [vmem:[%s4 + $0x98] sm:$0xff]
  %v1014 = vld [vmem:[%s4 + $0xa0] sm:$0xff]
  %v1015 = vld [vmem:[%s4 + $0xa8] sm:$0xff]
  %v1016 = vld [vmem:[%s4 + $0xb0] sm:$0xff]
  %v1017 = vld [vmem:[%s4 + $0xb8] sm:$0xff]
  %v1018 = vld [vmem:[%s4 + $0xc0] sm:$0xff]
  %v1019 = vld [vmem:[%s4 + $0xc8] sm:$0xff]
  %v1020 = vld [vmem:[%s4 + $0xd0] sm:$0xff]
  %v1021 = vld [vmem:[%s4 + $0xd8] sm:$0xff]
  %v1022 = vld [vmem:[%s4 + $0xe0] sm:$0xff]
  %v1023 = vld [vmem:[%s4 + $0xe8] sm:$0xff]
  %v1024 = vld [vmem:[%s4 + $0xf0] sm:$0xff]
  %v1025 = vld [vmem:[%s4 + $0xf8] sm:$0xff]
  %v1026 = vld [vmem:[%s4 + $0x100] sm:$0xff]
  %v1027 = vld [vmem:[%s4 + $0x108] sm:$0xff]
  %v1028 = vld [vmem:[%s4 + $0x110] sm:$0xff]
  %v1029 = vld [vmem:[%s4 + $0x118] sm:$0xff]
  %v1030 = vld [vmem:[%s4 + $0x120] sm:$0xff]
  %v1031 = vld [vmem:[%s4 + $0x128] sm:$0xff]
  %v1032 = vld [vmem:[%s4 + $0x130] sm:$0xff]
  %v1033 = vld [vmem:[%s4 + $0x138] sm:$0xff]
  %v1034 = vld [vmem:[%s4 + $0x140] sm:$0xff]
  %v1035 = vld [vmem:[%s4 + $0x148] sm:$0xff]
  %v1036 = vld [vmem:[%s4 + $0x150] sm:$0xff]
  %v1037 = vld [vmem:[%s4 + $0x158] sm:$0xff]
  %v1038 = vld [vmem:[%s4 + $0x160] sm:$0xff]
  %v1039 = vld [vmem:[%s4 + $0x168] sm:$0xff]
  %v1040 = vld [vmem:[%s4 + $0x170] sm:$0xff]
  %v1041 = vld [vmem:[%s4 + $0x178] sm:$0xff]
  %v1042 = vld [vmem:[%s4 + $0x180] sm:$0xff]
  %v1043 = vld [vmem:[%s4 + $0x188] sm:$0xff]
  %v1044 = vld [vmem:[%s4 + $0x190] sm:$0xff]
  %v1045 = vld [vmem:[%s4 + $0x198] sm:$0xff]
  %v1046 = vld [vmem:[%s4 + $0x1a0] sm:$0xff]
  %v1047 = vld [vmem:[%s4 + $0x1a8] sm:$0xff]
  %v1048 = vld [vmem:[%s4 + $0x1b0] sm:$0xff]
  %v1049 = vld [vmem:[%s4 + $0x1b8] sm:$0xff]
  %v1050 = vld [vmem:[%s4 + $0x1c0] sm:$0xff]
  %v1051 = vld [vmem:[%s4 + $0x1c8] sm:$0xff]
  %v1052 = vld [vmem:[%s4 + $0x1d0] sm:$0xff]
  %v1053 = vld [vmem:[%s4 + $0x1d8] sm:$0xff]
  %v1054 = vld [vmem:[%s4 + $0x1e0] sm:$0xff]
  %v1055 = vld [vmem:[%s4 + $0x1e8] sm:$0xff]
  %v1056 = vld [vmem:[%s4 + $0x1f0] sm:$0xff]
  %v1057 = vld [vmem:[%s4 + $0x1f8] sm:$0xff]
  %v1058 = vld [vmem:[%s4 + $0x200] sm:$0xff]
  %v1059 = vld [vmem:[%s4 + $0x208] sm:$0xff]
  %v1060 = vld [vmem:[%s4 + $0x210] sm:$0xff]
  %v1061 = vld [vmem:[%s4 + $0x218] sm:$0xff]
  %v1062 = vld [vmem:[%s4 + $0x220] sm:$0xff]
  %v1063 = vld [vmem:[%s4 + $0x228] sm:$0xff]
  %v1064 = vld [vmem:[%s4 + $0x230] sm:$0xff]
  %v1065 = vld [vmem:[%s4 + $0x238] sm:$0xff]
  %v1066 = vld [vmem:[%s4 + $0x240] sm:$0xff]
  %v1067 = vld [vmem:[%s4 + $0x248] sm:$0xff]
  %v1068 = vld [vmem:[%s4 + $0x250] sm:$0xff]
  %v1069 = vld [vmem:[%s4 + $0x258] sm:$0xff]
  %v1070 = vld [vmem:[%s4 + $0x260] sm:$0xff]
  %v1071 = vld [vmem:[%s4 + $0x268] sm:$0xff]
  %v1072 = vld [vmem:[%s4 + $0x270] sm:$0x11]
  %v1073 = vunpack.c.l.bf16 %v994
  %v1074 = vunpack.c.h.bf16 %v994
  %v1075 = vunpack.c.l.bf16 %v995
  %v1076 = vunpack.c.h.bf16 %v995
  %v1077 = vunpack.c.l.bf16 %v996
  %v1078 = vunpack.c.h.bf16 %v996
  %v1079 = vunpack.c.l.bf16 %v997
  %v1080 = vunpack.c.h.bf16 %v997
  %v1081 = vunpack.c.l.bf16 %v998
  %v1082 = vunpack.c.h.bf16 %v998
  %v1083 = vunpack.c.l.bf16 %v999
  %v1084 = vunpack.c.h.bf16 %v999
  %v1085 = vunpack.c.l.bf16 %v1000
  %v1086 = vunpack.c.h.bf16 %v1000
  %v1087 = vunpack.c.l.bf16 %v1001
  %v1088 = vunpack.c.h.bf16 %v1001
  %v1089 = vunpack.c.l.bf16 %v1002
  %v1090 = vunpack.c.h.bf16 %v1002
  %v1091 = vunpack.c.l.bf16 %v1003
  %v1092 = vunpack.c.h.bf16 %v1003
  %v1093 = vunpack.c.l.bf16 %v1004
  %v1094 = vunpack.c.h.bf16 %v1004
  %v1095 = vunpack.c.l.bf16 %v1005
  %v1096 = vunpack.c.h.bf16 %v1005
  %v1097 = vunpack.c.l.bf16 %v1006
  %v1098 = vunpack.c.h.bf16 %v1006
  %v1099 = vunpack.c.l.bf16 %v1007
  %v1100 = vunpack.c.h.bf16 %v1007
  %v1101 = vunpack.c.l.bf16 %v1008
  %v1102 = vunpack.c.h.bf16 %v1008
  %v1103 = vunpack.c.l.bf16 %v1009
  %v1104 = vunpack.c.h.bf16 %v1009
  %v1105 = vunpack.c.l.bf16 %v1010
  %v1106 = vunpack.c.h.bf16 %v1010
  %v1107 = vunpack.c.l.bf16 %v1011
  %v1108 = vunpack.c.h.bf16 %v1011
  %v1109 = vunpack.c.l.bf16 %v1012
  %v1110 = vunpack.c.h.bf16 %v1012
  %v1111 = vunpack.c.l.bf16 %v1013
  %v1112 = vunpack.c.h.bf16 %v1013
  %v1113 = vunpack.c.l.bf16 %v1014
  %v1114 = vunpack.c.h.bf16 %v1014
  %v1115 = vunpack.c.l.bf16 %v1015
  %v1116 = vunpack.c.h.bf16 %v1015
  %v1117 = vunpack.c.l.bf16 %v1016
  %v1118 = vunpack.c.h.bf16 %v1016
  %v1119 = vunpack.c.l.bf16 %v1017
  %v1120 = vunpack.c.h.bf16 %v1017
  %v1121 = vunpack.c.l.bf16 %v1018
  %v1122 = vunpack.c.h.bf16 %v1018
  %v1123 = vunpack.c.l.bf16 %v1019
  %v1124 = vunpack.c.h.bf16 %v1019
  %v1125 = vunpack.c.l.bf16 %v1020
  %v1126 = vunpack.c.h.bf16 %v1020
  %v1127 = vunpack.c.l.bf16 %v1021
  %v1128 = vunpack.c.h.bf16 %v1021
  %v1129 = vunpack.c.l.bf16 %v1022
  %v1130 = vunpack.c.h.bf16 %v1022
  %v1131 = vunpack.c.l.bf16 %v1023
  %v1132 = vunpack.c.h.bf16 %v1023
  %v1133 = vunpack.c.l.bf16 %v1024
  %v1134 = vunpack.c.h.bf16 %v1024
  %v1135 = vunpack.c.l.bf16 %v1025
  %v1136 = vunpack.c.h.bf16 %v1025
  %v1137 = vunpack.c.l.bf16 %v1026
  %v1138 = vunpack.c.h.bf16 %v1026
  %v1139 = vunpack.c.l.bf16 %v1027
  %v1140 = vunpack.c.h.bf16 %v1027
  %v1141 = vunpack.c.l.bf16 %v1028
  %v1142 = vunpack.c.h.bf16 %v1028
  %v1143 = vunpack.c.l.bf16 %v1029
  %v1144 = vunpack.c.h.bf16 %v1029
  %v1145 = vunpack.c.l.bf16 %v1030
  %v1146 = vunpack.c.h.bf16 %v1030
  %v1147 = vunpack.c.l.bf16 %v1031
  %v1148 = vunpack.c.h.bf16 %v1031
  %v1149 = vunpack.c.l.bf16 %v1032
  %v1150 = vunpack.c.h.bf16 %v1032
  %v1151 = vunpack.c.l.bf16 %v1033
  %v1152 = vunpack.c.h.bf16 %v1033
  %v1153 = vunpack.c.l.bf16 %v1034
  %v1154 = vunpack.c.h.bf16 %v1034
  %v1155 = vunpack.c.l.bf16 %v1035
  %v1156 = vunpack.c.h.bf16 %v1035
  %v1157 = vunpack.c.l.bf16 %v1036
  %v1158 = vunpack.c.h.bf16 %v1036
  %v1159 = vunpack.c.l.bf16 %v1037
  %v1160 = vunpack.c.h.bf16 %v1037
  %v1161 = vunpack.c.l.bf16 %v1038
  %v1162 = vunpack.c.h.bf16 %v1038
  %v1163 = vunpack.c.l.bf16 %v1039
  %v1164 = vunpack.c.h.bf16 %v1039
  %v1165 = vunpack.c.l.bf16 %v1040
  %v1166 = vunpack.c.h.bf16 %v1040
  %v1167 = vunpack.c.l.bf16 %v1041
  %v1168 = vunpack.c.h.bf16 %v1041
  %v1169 = vunpack.c.l.bf16 %v1042
  %v1170 = vunpack.c.h.bf16 %v1042
  %v1171 = vunpack.c.l.bf16 %v1043
  %v1172 = vunpack.c.h.bf16 %v1043
  %v1173 = vunpack.c.l.bf16 %v1044
  %v1174 = vunpack.c.h.bf16 %v1044
  %v1175 = vunpack.c.l.bf16 %v1045
  %v1176 = vunpack.c.h.bf16 %v1045
  %v1177 = vunpack.c.l.bf16 %v1046
  %v1178 = vunpack.c.h.bf16 %v1046
  %v1179 = vunpack.c.l.bf16 %v1047
  %v1180 = vunpack.c.h.bf16 %v1047
  %v1181 = vunpack.c.l.bf16 %v1048
  %v1182 = vunpack.c.h.bf16 %v1048
  %v1183 = vunpack.c.l.bf16 %v1049
  %v1184 = vunpack.c.h.bf16 %v1049
  %v1185 = vunpack.c.l.bf16 %v1050
  %v1186 = vunpack.c.h.bf16 %v1050
  %v1187 = vunpack.c.l.bf16 %v1051
  %v1188 = vunpack.c.h.bf16 %v1051
  %v1189 = vunpack.c.l.bf16 %v1052
  %v1190 = vunpack.c.h.bf16 %v1052
  %v1191 = vunpack.c.l.bf16 %v1053
  %v1192 = vunpack.c.h.bf16 %v1053
  %v1193 = vunpack.c.l.bf16 %v1054
  %v1194 = vunpack.c.h.bf16 %v1054
  %v1195 = vunpack.c.l.bf16 %v1055
  %v1196 = vunpack.c.h.bf16 %v1055
  %v1197 = vunpack.c.l.bf16 %v1056
  %v1198 = vunpack.c.h.bf16 %v1056
  %v1199 = vunpack.c.l.bf16 %v1057
  %v1200 = vunpack.c.h.bf16 %v1057
  %v1201 = vunpack.c.l.bf16 %v1058
  %v1202 = vunpack.c.h.bf16 %v1058
  %v1203 = vunpack.c.l.bf16 %v1059
  %v1204 = vunpack.c.h.bf16 %v1059
  %v1205 = vunpack.c.l.bf16 %v1060
  %v1206 = vunpack.c.h.bf16 %v1060
  %v1207 = vunpack.c.l.bf16 %v1061
  %v1208 = vunpack.c.h.bf16 %v1061
  %v1209 = vunpack.c.l.bf16 %v1062
  %v1210 = vunpack.c.h.bf16 %v1062
  %v1211 = vunpack.c.l.bf16 %v1063
  %v1212 = vunpack.c.h.bf16 %v1063
  %v1213 = vunpack.c.l.bf16 %v1064
  %v1214 = vunpack.c.h.bf16 %v1064
  %v1215 = vunpack.c.l.bf16 %v1065
  %v1216 = vunpack.c.h.bf16 %v1065
  %v1217 = vunpack.c.l.bf16 %v1066
  %v1218 = vunpack.c.h.bf16 %v1066
  %v1219 = vunpack.c.l.bf16 %v1067
  %v1220 = vunpack.c.h.bf16 %v1067
  %v1221 = vunpack.c.l.bf16 %v1068
  %v1222 = vunpack.c.h.bf16 %v1068
  %v1223 = vunpack.c.l.bf16 %v1069
  %v1224 = vunpack.c.h.bf16 %v1069
  %v1225 = vunpack.c.l.bf16 %v1070
  %v1226 = vunpack.c.h.bf16 %v1070
  %v1227 = vunpack.c.l.bf16 %v1071
  %v1228 = vunpack.c.h.bf16 %v1071
  %v1229 = vunpack.c.l.bf16 %v1072
  %v1230 = vunpack.c.h.bf16 %v1072
  %vm1231 = vcmask 556032
  %v1233 = vsel %vm1231, %v1074, 0
  %v1236 = vsel %vm1231, %v1076, 0
  %v1239 = vsel %vm1231, %v1078, 0
  %v1242 = vsel %vm1231, %v1080, 0
  %v1245 = vsel %vm1231, %v1082, 0
  %v1248 = vsel %vm1231, %v1084, 0
  %v1251 = vsel %vm1231, %v1086, 0
  %v1254 = vsel %vm1231, %v1088, 0
  %v1257 = vsel %vm1231, %v1090, 0
  %v1260 = vsel %vm1231, %v1092, 0
  %v1263 = vsel %vm1231, %v1094, 0
  %v1266 = vsel %vm1231, %v1096, 0
  %v1269 = vsel %vm1231, %v1098, 0
  %v1272 = vsel %vm1231, %v1100, 0
  %v1275 = vsel %vm1231, %v1102, 0
  %v1278 = vsel %vm1231, %v1104, 0
  %v1281 = vsel %vm1231, %v1106, 0
  %v1284 = vsel %vm1231, %v1108, 0
  %v1287 = vsel %vm1231, %v1110, 0
  %v1290 = vsel %vm1231, %v1112, 0
  %v1293 = vsel %vm1231, %v1114, 0
  %v1296 = vsel %vm1231, %v1116, 0
  %v1299 = vsel %vm1231, %v1118, 0
  %v1302 = vsel %vm1231, %v1120, 0
  %v1305 = vsel %vm1231, %v1122, 0
  %v1308 = vsel %vm1231, %v1124, 0
  %v1311 = vsel %vm1231, %v1126, 0
  %v1314 = vsel %vm1231, %v1128, 0
  %v1317 = vsel %vm1231, %v1130, 0
  %v1320 = vsel %vm1231, %v1132, 0
  %v1323 = vsel %vm1231, %v1134, 0
  %v1326 = vsel %vm1231, %v1136, 0
  %v1329 = vsel %vm1231, %v1138, 0
  %v1332 = vsel %vm1231, %v1140, 0
  %v1335 = vsel %vm1231, %v1142, 0
  %v1338 = vsel %vm1231, %v1144, 0
  %v1341 = vsel %vm1231, %v1146, 0
  %v1344 = vsel %vm1231, %v1148, 0
  %v1347 = vsel %vm1231, %v1150, 0
  %v1350 = vsel %vm1231, %v1152, 0
  %v1353 = vsel %vm1231, %v1154, 0
  %v1356 = vsel %vm1231, %v1156, 0
  %v1359 = vsel %vm1231, %v1158, 0
  %v1362 = vsel %vm1231, %v1160, 0
  %v1365 = vsel %vm1231, %v1162, 0
  %v1368 = vsel %vm1231, %v1164, 0
  %v1371 = vsel %vm1231, %v1166, 0
  %v1374 = vsel %vm1231, %v1168, 0
  %v1377 = vsel %vm1231, %v1170, 0
  %v1380 = vsel %vm1231, %v1172, 0
  %v1383 = vsel %vm1231, %v1174, 0
  %v1386 = vsel %vm1231, %v1176, 0
  %v1389 = vsel %vm1231, %v1178, 0
  %v1392 = vsel %vm1231, %v1180, 0
  %v1395 = vsel %vm1231, %v1182, 0
  %v1398 = vsel %vm1231, %v1184, 0
  %v1401 = vsel %vm1231, %v1186, 0
  %v1404 = vsel %vm1231, %v1188, 0
  %v1407 = vsel %vm1231, %v1190, 0
  %v1410 = vsel %vm1231, %v1192, 0
  %v1413 = vsel %vm1231, %v1194, 0
  %v1416 = vsel %vm1231, %v1196, 0
  %v1419 = vsel %vm1231, %v1198, 0
  %v1422 = vsel %vm1231, %v1200, 0
  %v1425 = vsel %vm1231, %v1202, 0
  %v1428 = vsel %vm1231, %v1204, 0
  %v1431 = vsel %vm1231, %v1206, 0
  %v1434 = vsel %vm1231, %v1208, 0
  %v1437 = vsel %vm1231, %v1210, 0
  %v1440 = vsel %vm1231, %v1212, 0
  %v1443 = vsel %vm1231, %v1214, 0
  %v1446 = vsel %vm1231, %v1216, 0
  %v1449 = vsel %vm1231, %v1218, 0
  %v1452 = vsel %vm1231, %v1220, 0
  %v1455 = vsel %vm1231, %v1222, 0
  %v1458 = vsel %vm1231, %v1224, 0
  %v1461 = vsel %vm1231, %v1226, 0
  %v1464 = vsel %vm1231, %v1228, 0
  %v1467 = vsel %vm1231, %v1230, 0
  %vm1469 = vcmask 1043456
  %v1471 = vsel %vm1469, %v969, 0
  %1473 = vmatpush.msra.mxu0 %v960
  %1474 = vmatpush.msra.mxu0 %v959
  %1475 = vmatpush.msra.mxu0 %v958
  %1476 = vmatpush.msra.mxu0 %v957
  %1477 = vmatpush.msra.mxu0 %v956
  %1478 = vmatpush.msra.mxu0 %v955
  %1479 = vmatpush.msra.mxu0 %v954
  %1480 = vmatpush.msra.mxu0 %v953
  %1481 = vmatpush.msra.mxu0 %v952
  %1482 = vmatpush.msra.mxu0 %v951
  %1483 = vmatpush.msra.mxu0 %v950
  %1484 = vmatpush.msra.mxu0 %v949
  %1485 = vmatpush.msra.mxu0 %v948
  %1486 = vmatpush.msra.mxu0 %v947
  %1487 = vmatpush.msra.mxu0 %v946
  %1488 = vmatpush.msra.mxu0 %v945
  %1489 = vmatmul.f32.gmra.mxu0 %v1073
  %v1490 = vpop.f32.mrf.mxu0
  %v1491 = vadd.f32 0.0, %v1490
  %1492 = vmatmul.f32.gmra.mxu0 %v1075
  %v1493 = vpop.f32.mrf.mxu0
  %v1494 = vadd.f32 0.0, %v1493
  %1495 = vmatmul.f32.gmra.mxu0 %v1077
  %v1496 = vpop.f32.mrf.mxu0
  %v1497 = vadd.f32 0.0, %v1496
  %1498 = vmatmul.f32.gmra.mxu0 %v1079
  %v1499 = vpop.f32.mrf.mxu0
  %v1500 = vadd.f32 0.0, %v1499
  %1501 = vmatmul.f32.gmra.mxu0 %v1081
  %v1502 = vpop.f32.mrf.mxu0
  %v1503 = vadd.f32 0.0, %v1502
  %1504 = vmatmul.f32.gmra.mxu0 %v1083
  %v1505 = vpop.f32.mrf.mxu0
  %v1506 = vadd.f32 0.0, %v1505
  %1507 = vmatmul.f32.gmra.mxu0 %v1085
  %v1508 = vpop.f32.mrf.mxu0
  %v1509 = vadd.f32 0.0, %v1508
  %1510 = vmatmul.f32.gmra.mxu0 %v1087
  %v1511 = vpop.f32.mrf.mxu0
  %v1512 = vadd.f32 0.0, %v1511
  %1513 = vmatmul.f32.gmra.mxu0 %v1089
  %v1514 = vpop.f32.mrf.mxu0
  %v1515 = vadd.f32 0.0, %v1514
  %1516 = vmatmul.f32.gmra.mxu0 %v1091
  %v1517 = vpop.f32.mrf.mxu0
  %v1518 = vadd.f32 0.0, %v1517
  %1519 = vmatmul.f32.gmra.mxu0 %v1093
  %v1520 = vpop.f32.mrf.mxu0
  %v1521 = vadd.f32 0.0, %v1520
  %1522 = vmatmul.f32.gmra.mxu0 %v1095
  %v1523 = vpop.f32.mrf.mxu0
  %v1524 = vadd.f32 0.0, %v1523
  %1525 = vmatmul.f32.gmra.mxu0 %v1097
  %v1526 = vpop.f32.mrf.mxu0
  %v1527 = vadd.f32 0.0, %v1526
  %1528 = vmatmul.f32.gmra.mxu0 %v1099
  %v1529 = vpop.f32.mrf.mxu0
  %v1530 = vadd.f32 0.0, %v1529
  %1531 = vmatmul.f32.gmra.mxu0 %v1101
  %v1532 = vpop.f32.mrf.mxu0
  %v1533 = vadd.f32 0.0, %v1532
  %1534 = vmatmul.f32.gmra.mxu0 %v1103
  %v1535 = vpop.f32.mrf.mxu0
  %v1536 = vadd.f32 0.0, %v1535
  %1537 = vmatmul.f32.gmra.mxu0 %v1105
  %v1538 = vpop.f32.mrf.mxu0
  %v1539 = vadd.f32 0.0, %v1538
  %1540 = vmatmul.f32.gmra.mxu0 %v1107
  %v1541 = vpop.f32.mrf.mxu0
  %v1542 = vadd.f32 0.0, %v1541
  %1543 = vmatmul.f32.gmra.mxu0 %v1109
  %v1544 = vpop.f32.mrf.mxu0
  %v1545 = vadd.f32 0.0, %v1544
  %1546 = vmatmul.f32.gmra.mxu0 %v1111
  %v1547 = vpop.f32.mrf.mxu0
  %v1548 = vadd.f32 0.0, %v1547
  %1549 = vmatmul.f32.gmra.mxu0 %v1113
  %v1550 = vpop.f32.mrf.mxu0
  %v1551 = vadd.f32 0.0, %v1550
  %1552 = vmatmul.f32.gmra.mxu0 %v1115
  %v1553 = vpop.f32.mrf.mxu0
  %v1554 = vadd.f32 0.0, %v1553
  %1555 = vmatmul.f32.gmra.mxu0 %v1117
  %v1556 = vpop.f32.mrf.mxu0
  %v1557 = vadd.f32 0.0, %v1556
  %1558 = vmatmul.f32.gmra.mxu0 %v1119
  %v1559 = vpop.f32.mrf.mxu0
  %v1560 = vadd.f32 0.0, %v1559
  %1561 = vmatmul.f32.gmra.mxu0 %v1121
  %v1562 = vpop.f32.mrf.mxu0
  %v1563 = vadd.f32 0.0, %v1562
  %1564 = vmatmul.f32.gmra.mxu0 %v1123
  %v1565 = vpop.f32.mrf.mxu0
  %v1566 = vadd.f32 0.0, %v1565
  %1567 = vmatmul.f32.gmra.mxu0 %v1125
  %v1568 = vpop.f32.mrf.mxu0
  %v1569 = vadd.f32 0.0, %v1568
  %1570 = vmatmul.f32.gmra.mxu0 %v1127
  %v1571 = vpop.f32.mrf.mxu0
  %v1572 = vadd.f32 0.0, %v1571
  %1573 = vmatmul.f32.gmra.mxu0 %v1129
  %v1574 = vpop.f32.mrf.mxu0
  %v1575 = vadd.f32 0.0, %v1574
  %1576 = vmatmul.f32.gmra.mxu0 %v1131
  %v1577 = vpop.f32.mrf.mxu0
  %v1578 = vadd.f32 0.0, %v1577
  %1579 = vmatmul.f32.gmra.mxu0 %v1133
  %v1580 = vpop.f32.mrf.mxu0
  %v1581 = vadd.f32 0.0, %v1580
  %1582 = vmatmul.f32.gmra.mxu0 %v1135
  %v1583 = vpop.f32.mrf.mxu0
  %v1584 = vadd.f32 0.0, %v1583
  %1585 = vmatmul.f32.gmra.mxu0 %v1137
  %v1586 = vpop.f32.mrf.mxu0
  %v1587 = vadd.f32 0.0, %v1586
  %1588 = vmatmul.f32.gmra.mxu0 %v1139
  %v1589 = vpop.f32.mrf.mxu0
  %v1590 = vadd.f32 0.0, %v1589
  %1591 = vmatmul.f32.gmra.mxu0 %v1141
  %v1592 = vpop.f32.mrf.mxu0
  %v1593 = vadd.f32 0.0, %v1592
  %1594 = vmatmul.f32.gmra.mxu0 %v1143
  %v1595 = vpop.f32.mrf.mxu0
  %v1596 = vadd.f32 0.0, %v1595
  %1597 = vmatmul.f32.gmra.mxu0 %v1145
  %v1598 = vpop.f32.mrf.mxu0
  %v1599 = vadd.f32 0.0, %v1598
  %1600 = vmatmul.f32.gmra.mxu0 %v1147
  %v1601 = vpop.f32.mrf.mxu0
  %v1602 = vadd.f32 0.0, %v1601
  %1603 = vmatmul.f32.gmra.mxu0 %v1149
  %v1604 = vpop.f32.mrf.mxu0
  %v1605 = vadd.f32 0.0, %v1604
  %1606 = vmatmul.f32.gmra.mxu0 %v1151
  %v1607 = vpop.f32.mrf.mxu0
  %v1608 = vadd.f32 0.0, %v1607
  %1609 = vmatmul.f32.gmra.mxu0 %v1153
  %v1610 = vpop.f32.mrf.mxu0
  %v1611 = vadd.f32 0.0, %v1610
  %1612 = vmatmul.f32.gmra.mxu0 %v1155
  %v1613 = vpop.f32.mrf.mxu0
  %v1614 = vadd.f32 0.0, %v1613
  %1615 = vmatmul.f32.gmra.mxu0 %v1157
  %v1616 = vpop.f32.mrf.mxu0
  %v1617 = vadd.f32 0.0, %v1616
  %1618 = vmatmul.f32.gmra.mxu0 %v1159
  %v1619 = vpop.f32.mrf.mxu0
  %v1620 = vadd.f32 0.0, %v1619
  %1621 = vmatmul.f32.gmra.mxu0 %v1161
  %v1622 = vpop.f32.mrf.mxu0
  %v1623 = vadd.f32 0.0, %v1622
  %1624 = vmatmul.f32.gmra.mxu0 %v1163
  %v1625 = vpop.f32.mrf.mxu0
  %v1626 = vadd.f32 0.0, %v1625
  %1627 = vmatmul.f32.gmra.mxu0 %v1165
  %v1628 = vpop.f32.mrf.mxu0
  %v1629 = vadd.f32 0.0, %v1628
  %1630 = vmatmul.f32.gmra.mxu0 %v1167
  %v1631 = vpop.f32.mrf.mxu0
  %v1632 = vadd.f32 0.0, %v1631
  %1633 = vmatmul.f32.gmra.mxu0 %v1169
  %v1634 = vpop.f32.mrf.mxu0
  %v1635 = vadd.f32 0.0, %v1634
  %1636 = vmatmul.f32.gmra.mxu0 %v1171
  %v1637 = vpop.f32.mrf.mxu0
  %v1638 = vadd.f32 0.0, %v1637
  %1639 = vmatmul.f32.gmra.mxu0 %v1173
  %v1640 = vpop.f32.mrf.mxu0
  %v1641 = vadd.f32 0.0, %v1640
  %1642 = vmatmul.f32.gmra.mxu0 %v1175
  %v1643 = vpop.f32.mrf.mxu0
  %v1644 = vadd.f32 0.0, %v1643
  %1645 = vmatmul.f32.gmra.mxu0 %v1177
  %v1646 = vpop.f32.mrf.mxu0
  %v1647 = vadd.f32 0.0, %v1646
  %1648 = vmatmul.f32.gmra.mxu0 %v1179
  %v1649 = vpop.f32.mrf.mxu0
  %v1650 = vadd.f32 0.0, %v1649
  %1651 = vmatmul.f32.gmra.mxu0 %v1181
  %v1652 = vpop.f32.mrf.mxu0
  %v1653 = vadd.f32 0.0, %v1652
  %1654 = vmatmul.f32.gmra.mxu0 %v1183
  %v1655 = vpop.f32.mrf.mxu0
  %v1656 = vadd.f32 0.0, %v1655
  %1657 = vmatmul.f32.gmra.mxu0 %v1185
  %v1658 = vpop.f32.mrf.mxu0
  %v1659 = vadd.f32 0.0, %v1658
  %1660 = vmatmul.f32.gmra.mxu0 %v1187
  %v1661 = vpop.f32.mrf.mxu0
  %v1662 = vadd.f32 0.0, %v1661
  %1663 = vmatmul.f32.gmra.mxu0 %v1189
  %v1664 = vpop.f32.mrf.mxu0
  %v1665 = vadd.f32 0.0, %v1664
  %1666 = vmatmul.f32.gmra.mxu0 %v1191
  %v1667 = vpop.f32.mrf.mxu0
  %v1668 = vadd.f32 0.0, %v1667
  %1669 = vmatmul.f32.gmra.mxu0 %v1193
  %v1670 = vpop.f32.mrf.mxu0
  %v1671 = vadd.f32 0.0, %v1670
  %1672 = vmatmul.f32.gmra.mxu0 %v1195
  %v1673 = vpop.f32.mrf.mxu0
  %v1674 = vadd.f32 0.0, %v1673
  %1675 = vmatmul.f32.gmra.mxu0 %v1197
  %v1676 = vpop.f32.mrf.mxu0
  %v1677 = vadd.f32 0.0, %v1676
  %1678 = vmatmul.f32.gmra.mxu0 %v1199
  %v1679 = vpop.f32.mrf.mxu0
  %v1680 = vadd.f32 0.0, %v1679
  %1681 = vmatmul.f32.gmra.mxu0 %v1201
  %v1682 = vpop.f32.mrf.mxu0
  %v1683 = vadd.f32 0.0, %v1682
  %1684 = vmatmul.f32.gmra.mxu0 %v1203
  %v1685 = vpop.f32.mrf.mxu0
  %v1686 = vadd.f32 0.0, %v1685
  %1687 = vmatmul.f32.gmra.mxu0 %v1205
  %v1688 = vpop.f32.mrf.mxu0
  %v1689 = vadd.f32 0.0, %v1688
  %1690 = vmatmul.f32.gmra.mxu0 %v1207
  %v1691 = vpop.f32.mrf.mxu0
  %v1692 = vadd.f32 0.0, %v1691
  %1693 = vmatmul.f32.gmra.mxu0 %v1209
  %v1694 = vpop.f32.mrf.mxu0
  %v1695 = vadd.f32 0.0, %v1694
  %1696 = vmatmul.f32.gmra.mxu0 %v1211
  %v1697 = vpop.f32.mrf.mxu0
  %v1698 = vadd.f32 0.0, %v1697
  %1699 = vmatmul.f32.gmra.mxu0 %v1213
  %v1700 = vpop.f32.mrf.mxu0
  %v1701 = vadd.f32 0.0, %v1700
  %1702 = vmatmul.f32.gmra.mxu0 %v1215
  %v1703 = vpop.f32.mrf.mxu0
  %v1704 = vadd.f32 0.0, %v1703
  %1705 = vmatmul.f32.gmra.mxu0 %v1217
  %v1706 = vpop.f32.mrf.mxu0
  %v1707 = vadd.f32 0.0, %v1706
  %1708 = vmatmul.f32.gmra.mxu0 %v1219
  %v1709 = vpop.f32.mrf.mxu0
  %v1710 = vadd.f32 0.0, %v1709
  %1711 = vmatmul.f32.gmra.mxu0 %v1221
  %v1712 = vpop.f32.mrf.mxu0
  %v1713 = vadd.f32 0.0, %v1712
  %1714 = vmatmul.f32.gmra.mxu0 %v1223
  %v1715 = vpop.f32.mrf.mxu0
  %v1716 = vadd.f32 0.0, %v1715
  %1717 = vmatmul.f32.gmra.mxu0 %v1225
  %v1718 = vpop.f32.mrf.mxu0
  %v1719 = vadd.f32 0.0, %v1718
  %1720 = vmatmul.f32.gmra.mxu0 %v1227
  %v1721 = vpop.f32.mrf.mxu0
  %v1722 = vadd.f32 0.0, %v1721
  %1723 = vmatmul.f32.gmra.mxu0 %v1229
  %v1724 = vpop.f32.mrf.mxu0
  %v1725 = vadd.f32 0.0, %v1724
  %1726 = vdwg.mxu0
  %1727 = vmatpush.msra.mxu0 0.0
  %1728 = vmatpush.msra.mxu0 0.0
  %1729 = vmatpush.msra.mxu0 0.0
  %1730 = vmatpush.msra.mxu0 0.0
  %1731 = vmatpush.msra.mxu0 0.0
  %1732 = vmatpush.msra.mxu0 0.0
  %1733 = vmatpush.msra.mxu0 0.0
  %1734 = vmatpush.msra.mxu0 %v1471
  %1735 = vmatpush.msra.mxu0 %v968
  %1736 = vmatpush.msra.mxu0 %v967
  %1737 = vmatpush.msra.mxu0 %v966
  %1738 = vmatpush.msra.mxu0 %v965
  %1739 = vmatpush.msra.mxu0 %v964
  %1740 = vmatpush.msra.mxu0 %v963
  %1741 = vmatpush.msra.mxu0 %v962
  %1742 = vmatpush.msra.mxu0 %v961
  %1743 = vmatmul.f32.gmra.mxu0 %v1233
  %v1744 = vpop.f32.mrf.mxu0
  %v1745 = vadd.f32 %v1491, %v1744
  %1746 = vmatmul.f32.gmra.mxu0 %v1236
  %v1747 = vpop.f32.mrf.mxu0
  %v1748 = vadd.f32 %v1494, %v1747
  %1749 = vmatmul.f32.gmra.mxu0 %v1239
  %v1750 = vpop.f32.mrf.mxu0
  %v1751 = vadd.f32 %v1497, %v1750
  %1752 = vmatmul.f32.gmra.mxu0 %v1242
  %v1753 = vpop.f32.mrf.mxu0
  %v1754 = vadd.f32 %v1500, %v1753
  %1755 = vmatmul.f32.gmra.mxu0 %v1245
  %v1756 = vpop.f32.mrf.mxu0
  %v1757 = vadd.f32 %v1503, %v1756
  %1758 = vmatmul.f32.gmra.mxu0 %v1248
  %v1759 = vpop.f32.mrf.mxu0
  %v1760 = vadd.f32 %v1506, %v1759
  %1761 = vmatmul.f32.gmra.mxu0 %v1251
  %v1762 = vpop.f32.mrf.mxu0
  %v1763 = vadd.f32 %v1509, %v1762
  %1764 = vmatmul.f32.gmra.mxu0 %v1254
  %v1765 = vpop.f32.mrf.mxu0
  %v1766 = vadd.f32 %v1512, %v1765
  %1767 = vmatmul.f32.gmra.mxu0 %v1257
  %v1768 = vpop.f32.mrf.mxu0
  %v1769 = vadd.f32 %v1515, %v1768
  %1770 = vmatmul.f32.gmra.mxu0 %v1260
  %v1771 = vpop.f32.mrf.mxu0
  %v1772 = vadd.f32 %v1518, %v1771
  %1773 = vmatmul.f32.gmra.mxu0 %v1263
  %v1774 = vpop.f32.mrf.mxu0
  %v1775 = vadd.f32 %v1521, %v1774
  %1776 = vmatmul.f32.gmra.mxu0 %v1266
  %v1777 = vpop.f32.mrf.mxu0
  %v1778 = vadd.f32 %v1524, %v1777
  %1779 = vmatmul.f32.gmra.mxu0 %v1269
  %v1780 = vpop.f32.mrf.mxu0
  %v1781 = vadd.f32 %v1527, %v1780
  %1782 = vmatmul.f32.gmra.mxu0 %v1272
  %v1783 = vpop.f32.mrf.mxu0
  %v1784 = vadd.f32 %v1530, %v1783
  %1785 = vmatmul.f32.gmra.mxu0 %v1275
  %v1786 = vpop.f32.mrf.mxu0
  %v1787 = vadd.f32 %v1533, %v1786
  %1788 = vmatmul.f32.gmra.mxu0 %v1278
  %v1789 = vpop.f32.mrf.mxu0
  %v1790 = vadd.f32 %v1536, %v1789
  %1791 = vmatmul.f32.gmra.mxu0 %v1281
  %v1792 = vpop.f32.mrf.mxu0
  %v1793 = vadd.f32 %v1539, %v1792
  %1794 = vmatmul.f32.gmra.mxu0 %v1284
  %v1795 = vpop.f32.mrf.mxu0
  %v1796 = vadd.f32 %v1542, %v1795
  %1797 = vmatmul.f32.gmra.mxu0 %v1287
  %v1798 = vpop.f32.mrf.mxu0
  %v1799 = vadd.f32 %v1545, %v1798
  %1800 = vmatmul.f32.gmra.mxu0 %v1290
  %v1801 = vpop.f32.mrf.mxu0
  %v1802 = vadd.f32 %v1548, %v1801
  %1803 = vmatmul.f32.gmra.mxu0 %v1293
  %v1804 = vpop.f32.mrf.mxu0
  %v1805 = vadd.f32 %v1551, %v1804
  %1806 = vmatmul.f32.gmra.mxu0 %v1296
  %v1807 = vpop.f32.mrf.mxu0
  %v1808 = vadd.f32 %v1554, %v1807
  %1809 = vmatmul.f32.gmra.mxu0 %v1299
  %v1810 = vpop.f32.mrf.mxu0
  %v1811 = vadd.f32 %v1557, %v1810
  %1812 = vmatmul.f32.gmra.mxu0 %v1302
  %v1813 = vpop.f32.mrf.mxu0
  %v1814 = vadd.f32 %v1560, %v1813
  %1815 = vmatmul.f32.gmra.mxu0 %v1305
  %v1816 = vpop.f32.mrf.mxu0
  %v1817 = vadd.f32 %v1563, %v1816
  %1818 = vmatmul.f32.gmra.mxu0 %v1308
  %v1819 = vpop.f32.mrf.mxu0
  %v1820 = vadd.f32 %v1566, %v1819
  %1821 = vmatmul.f32.gmra.mxu0 %v1311
  %v1822 = vpop.f32.mrf.mxu0
  %v1823 = vadd.f32 %v1569, %v1822
  %1824 = vmatmul.f32.gmra.mxu0 %v1314
  %v1825 = vpop.f32.mrf.mxu0
  %v1826 = vadd.f32 %v1572, %v1825
  %1827 = vmatmul.f32.gmra.mxu0 %v1317
  %v1828 = vpop.f32.mrf.mxu0
  %v1829 = vadd.f32 %v1575, %v1828
  %1830 = vmatmul.f32.gmra.mxu0 %v1320
  %v1831 = vpop.f32.mrf.mxu0
  %v1832 = vadd.f32 %v1578, %v1831
  %1833 = vmatmul.f32.gmra.mxu0 %v1323
  %v1834 = vpop.f32.mrf.mxu0
  %v1835 = vadd.f32 %v1581, %v1834
  %1836 = vmatmul.f32.gmra.mxu0 %v1326
  %v1837 = vpop.f32.mrf.mxu0
  %v1838 = vadd.f32 %v1584, %v1837
  %1839 = vmatmul.f32.gmra.mxu0 %v1329
  %v1840 = vpop.f32.mrf.mxu0
  %v1841 = vadd.f32 %v1587, %v1840
  %1842 = vmatmul.f32.gmra.mxu0 %v1332
  %v1843 = vpop.f32.mrf.mxu0
  %v1844 = vadd.f32 %v1590, %v1843
  %1845 = vmatmul.f32.gmra.mxu0 %v1335
  %v1846 = vpop.f32.mrf.mxu0
  %v1847 = vadd.f32 %v1593, %v1846
  %1848 = vmatmul.f32.gmra.mxu0 %v1338
  %v1849 = vpop.f32.mrf.mxu0
  %v1850 = vadd.f32 %v1596, %v1849
  %1851 = vmatmul.f32.gmra.mxu0 %v1341
  %v1852 = vpop.f32.mrf.mxu0
  %v1853 = vadd.f32 %v1599, %v1852
  %1854 = vmatmul.f32.gmra.mxu0 %v1344
  %v1855 = vpop.f32.mrf.mxu0
  %v1856 = vadd.f32 %v1602, %v1855
  %1857 = vmatmul.f32.gmra.mxu0 %v1347
  %v1858 = vpop.f32.mrf.mxu0
  %v1859 = vadd.f32 %v1605, %v1858
  %1860 = vmatmul.f32.gmra.mxu0 %v1350
  %v1861 = vpop.f32.mrf.mxu0
  %v1862 = vadd.f32 %v1608, %v1861
  %1863 = vmatmul.f32.gmra.mxu0 %v1353
  %v1864 = vpop.f32.mrf.mxu0
  %v1865 = vadd.f32 %v1611, %v1864
  %1866 = vmatmul.f32.gmra.mxu0 %v1356
  %v1867 = vpop.f32.mrf.mxu0
  %v1868 = vadd.f32 %v1614, %v1867
  %1869 = vmatmul.f32.gmra.mxu0 %v1359
  %v1870 = vpop.f32.mrf.mxu0
  %v1871 = vadd.f32 %v1617, %v1870
  %1872 = vmatmul.f32.gmra.mxu0 %v1362
  %v1873 = vpop.f32.mrf.mxu0
  %v1874 = vadd.f32 %v1620, %v1873
  %1875 = vmatmul.f32.gmra.mxu0 %v1365
  %v1876 = vpop.f32.mrf.mxu0
  %v1877 = vadd.f32 %v1623, %v1876
  %1878 = vmatmul.f32.gmra.mxu0 %v1368
  %v1879 = vpop.f32.mrf.mxu0
  %v1880 = vadd.f32 %v1626, %v1879
  %1881 = vmatmul.f32.gmra.mxu0 %v1371
  %v1882 = vpop.f32.mrf.mxu0
  %v1883 = vadd.f32 %v1629, %v1882
  %1884 = vmatmul.f32.gmra.mxu0 %v1374
  %v1885 = vpop.f32.mrf.mxu0
  %v1886 = vadd.f32 %v1632, %v1885
  %1887 = vmatmul.f32.gmra.mxu0 %v1377
  %v1888 = vpop.f32.mrf.mxu0
  %v1889 = vadd.f32 %v1635, %v1888
  %1890 = vmatmul.f32.gmra.mxu0 %v1380
  %v1891 = vpop.f32.mrf.mxu0
  %v1892 = vadd.f32 %v1638, %v1891
  %1893 = vmatmul.f32.gmra.mxu0 %v1383
  %v1894 = vpop.f32.mrf.mxu0
  %v1895 = vadd.f32 %v1641, %v1894
  %1896 = vmatmul.f32.gmra.mxu0 %v1386
  %v1897 = vpop.f32.mrf.mxu0
  %v1898 = vadd.f32 %v1644, %v1897
  %1899 = vmatmul.f32.gmra.mxu0 %v1389
  %v1900 = vpop.f32.mrf.mxu0
  %v1901 = vadd.f32 %v1647, %v1900
  %1902 = vmatmul.f32.gmra.mxu0 %v1392
  %v1903 = vpop.f32.mrf.mxu0
  %v1904 = vadd.f32 %v1650, %v1903
  %1905 = vmatmul.f32.gmra.mxu0 %v1395
  %v1906 = vpop.f32.mrf.mxu0
  %v1907 = vadd.f32 %v1653, %v1906
  %1908 = vmatmul.f32.gmra.mxu0 %v1398
  %v1909 = vpop.f32.mrf.mxu0
  %v1910 = vadd.f32 %v1656, %v1909
  %1911 = vmatmul.f32.gmra.mxu0 %v1401
  %v1912 = vpop.f32.mrf.mxu0
  %v1913 = vadd.f32 %v1659, %v1912
  %1914 = vmatmul.f32.gmra.mxu0 %v1404
  %v1915 = vpop.f32.mrf.mxu0
  %v1916 = vadd.f32 %v1662, %v1915
  %1917 = vmatmul.f32.gmra.mxu0 %v1407
  %v1918 = vpop.f32.mrf.mxu0
  %v1919 = vadd.f32 %v1665, %v1918
  %1920 = vmatmul.f32.gmra.mxu0 %v1410
  %v1921 = vpop.f32.mrf.mxu0
  %v1922 = vadd.f32 %v1668, %v1921
  %1923 = vmatmul.f32.gmra.mxu0 %v1413
  %v1924 = vpop.f32.mrf.mxu0
  %v1925 = vadd.f32 %v1671, %v1924
  %1926 = vmatmul.f32.gmra.mxu0 %v1416
  %v1927 = vpop.f32.mrf.mxu0
  %v1928 = vadd.f32 %v1674, %v1927
  %1929 = vmatmul.f32.gmra.mxu0 %v1419
  %v1930 = vpop.f32.mrf.mxu0
  %v1931 = vadd.f32 %v1677, %v1930
  %1932 = vmatmul.f32.gmra.mxu0 %v1422
  %v1933 = vpop.f32.mrf.mxu0
  %v1934 = vadd.f32 %v1680, %v1933
  %1935 = vmatmul.f32.gmra.mxu0 %v1425
  %v1936 = vpop.f32.mrf.mxu0
  %v1937 = vadd.f32 %v1683, %v1936
  %1938 = vmatmul.f32.gmra.mxu0 %v1428
  %v1939 = vpop.f32.mrf.mxu0
  %v1940 = vadd.f32 %v1686, %v1939
  %1941 = vmatmul.f32.gmra.mxu0 %v1431
  %v1942 = vpop.f32.mrf.mxu0
  %v1943 = vadd.f32 %v1689, %v1942
  %1944 = vmatmul.f32.gmra.mxu0 %v1434
  %v1945 = vpop.f32.mrf.mxu0
  %v1946 = vadd.f32 %v1692, %v1945
  %1947 = vmatmul.f32.gmra.mxu0 %v1437
  %v1948 = vpop.f32.mrf.mxu0
  %v1949 = vadd.f32 %v1695, %v1948
  %1950 = vmatmul.f32.gmra.mxu0 %v1440
  %v1951 = vpop.f32.mrf.mxu0
  %v1952 = vadd.f32 %v1698, %v1951
  %1953 = vmatmul.f32.gmra.mxu0 %v1443
  %v1954 = vpop.f32.mrf.mxu0
  %v1955 = vadd.f32 %v1701, %v1954
  %1956 = vmatmul.f32.gmra.mxu0 %v1446
  %v1957 = vpop.f32.mrf.mxu0
  %v1958 = vadd.f32 %v1704, %v1957
  %1959 = vmatmul.f32.gmra.mxu0 %v1449
  %v1960 = vpop.f32.mrf.mxu0
  %v1961 = vadd.f32 %v1707, %v1960
  %1962 = vmatmul.f32.gmra.mxu0 %v1452
  %v1963 = vpop.f32.mrf.mxu0
  %v1964 = vadd.f32 %v1710, %v1963
  %1965 = vmatmul.f32.gmra.mxu0 %v1455
  %v1966 = vpop.f32.mrf.mxu0
  %v1967 = vadd.f32 %v1713, %v1966
  %1968 = vmatmul.f32.gmra.mxu0 %v1458
  %v1969 = vpop.f32.mrf.mxu0
  %v1970 = vadd.f32 %v1716, %v1969
  %1971 = vmatmul.f32.gmra.mxu0 %v1461
  %v1972 = vpop.f32.mrf.mxu0
  %v1973 = vadd.f32 %v1719, %v1972
  %1974 = vmatmul.f32.gmra.mxu0 %v1464
  %v1975 = vpop.f32.mrf.mxu0
  %v1976 = vadd.f32 %v1722, %v1975
  %1977 = vmatmul.f32.gmra.mxu0 %v1467
  %v1978 = vpop.f32.mrf.mxu0
  %v1979 = vadd.f32 %v1725, %v1978
  %1980 = vdwg.mxu0
  %1981 = vst.msk [vmem:[#allocation2] sm:$0xff] %vm417, %v1745
  %1982 = vst.msk [vmem:[#allocation2 + $0x18] sm:$0xff] %vm417, %v1748
  %1983 = vst.msk [vmem:[#allocation2 + $0x30] sm:$0xff] %vm417, %v1751
  %vm1984 = vcmask 90112
  %1985 = vst.msk [vmem:[#allocation2 + $0x48] sm:$0x1] %vm1984, %v1754
  %vm1990 = vcmask 1046528
  %v1991 = vrot.slane %v1754, 1
  %v1992 = vrot.slane %v1757, 1
  %v1993 = vsel %vm1990, %v1991, %v1992
  %v1994 = vrot.slane %v1760, 1
  %v1995 = vsel %vm1990, %v1992, %v1994
  %v1996 = vrot.slane %v1763, 1
  %v1997 = vsel %vm1990, %v1994, %v1996
  %1998 = vrot.lane.b32.xlu0 %v1993, 12
  %v1999 = vpop.permute.xlu0 %1998
  %2000 = vrot.lane.b32.xlu0 %v1995, 12
  %v2001 = vpop.permute.xlu0 %2000
  %2002 = vrot.lane.b32.xlu0 %v1997, 12
  %v2003 = vpop.permute.xlu0 %2002
  %2004 = vrot.lane.b32.xlu0 %v1996, 12
  %v2005 = vpop.permute.xlu0 %2004
  %vm2010 = vcmask 195680
  %2011 = vst.msk [vmem:[#allocation2] sm:$0xff] %vm2010, %v1999
  %2012 = vst.msk [vmem:[#allocation2 + $0x18] sm:$0xff] %vm2010, %v2001
  %2013 = vst.msk [vmem:[#allocation2 + $0x30] sm:$0xff] %vm2010, %v2003
  %vm2014 = vcmask 188512
  %2015 = vst.msk [vmem:[#allocation2 + $0x48] sm:$0x1] %vm2014, %v2005
  %vm2019 = vcmask 1045504
  %v2020 = vrot.slane %v1763, 2
  %v2021 = vrot.slane %v1766, 2
  %v2022 = vsel %vm2019, %v2020, %v2021
  %v2023 = vrot.slane %v1769, 2
  %v2024 = vsel %vm2019, %v2021, %v2023
  %v2025 = vrot.slane %v1772, 2
  %v2026 = vsel %vm2019, %v2023, %v2025
  %2027 = vrot.lane.b32.xlu0 %v2022, 24
  %v2028 = vpop.permute.xlu0 %2027
  %2029 = vrot.lane.b32.xlu0 %v2024, 24
  %v2030 = vpop.permute.xlu0 %2029
  %2031 = vrot.lane.b32.xlu0 %v2026, 24
  %v2032 = vpop.permute.xlu0 %2031
  %2033 = vrot.lane.b32.xlu0 %v2025, 24
  %v2034 = vpop.permute.xlu0 %2033
  %vm2039 = vcmask 294080
  %2040 = vst.msk [vmem:[#allocation2] sm:$0xff] %vm2039, %v2028
  %2041 = vst.msk [vmem:[#allocation2 + $0x18] sm:$0xff] %vm2039, %v2030
  %2042 = vst.msk [vmem:[#allocation2 + $0x30] sm:$0xff] %vm2039, %v2032
  %vm2043 = vcmask 286912
  %2044 = vst.msk [vmem:[#allocation2 + $0x48] sm:$0x1] %vm2043, %v2034
  %vm2048 = vcmask 1044480
  %v2049 = vrot.slane %v1772, 3
  %v2050 = vrot.slane %v1775, 3
  %v2051 = vsel %vm2048, %v2049, %v2050
  %v2052 = vrot.slane %v1778, 3
  %v2053 = vsel %vm2048, %v2050, %v2052
  %v2054 = vrot.slane %v1781, 3
  %v2055 = vsel %vm2048, %v2052, %v2054
  %2056 = vrot.lane.b32.xlu0 %v2051, 36
  %v2057 = vpop.permute.xlu0 %2056
  %2058 = vrot.lane.b32.xlu0 %v2053, 36
  %v2059 = vpop.permute.xlu0 %2058
  %2060 = vrot.lane.b32.xlu0 %v2055, 36
  %v2061 = vpop.permute.xlu0 %2060
  %2062 = vrot.lane.b32.xlu0 %v2054, 36
  %v2063 = vpop.permute.xlu0 %2062
  %vm2068 = vcmask 392480
  %2069 = vst.msk [vmem:[#allocation2] sm:$0xff] %vm2068, %v2057
  %2070 = vst.msk [vmem:[#allocation2 + $0x18] sm:$0xff] %vm2068, %v2059
  %2071 = vst.msk [vmem:[#allocation2 + $0x30] sm:$0xff] %vm2068, %v2061
  %vm2072 = vcmask 385312
  %2073 = vst.msk [vmem:[#allocation2 + $0x48] sm:$0x1] %vm2072, %v2063
  %v2077 = vrot.slane %v1781, 4
  %v2078 = vrot.slane %v1784, 4
  %v2079 = vsel %vm1469, %v2077, %v2078
  %v2080 = vrot.slane %v1787, 4
  %v2081 = vsel %vm1469, %v2078, %v2080
  %v2082 = vrot.slane %v1790, 4
  %v2083 = vsel %vm1469, %v2080, %v2082
  %2084 = vrot.lane.b32.xlu0 %v2079, 48
  %v2085 = vpop.permute.xlu0 %2084
  %2086 = vrot.lane.b32.xlu0 %v2081, 48
  %v2087 = vpop.permute.xlu0 %2086
  %2088 = vrot.lane.b32.xlu0 %v2083, 48
  %v2089 = vpop.permute.xlu0 %2088
  %2090 = vrot.lane.b32.xlu0 %v2082, 48
  %v2091 = vpop.permute.xlu0 %2090
  %vm2096 = vcmask 490880
  %2097 = vst.msk [vmem:[#allocation2] sm:$0xff] %vm2096, %v2085
  %2098 = vst.msk [vmem:[#allocation2 + $0x18] sm:$0xff] %vm2096, %v2087
  %2099 = vst.msk [vmem:[#allocation2 + $0x30] sm:$0xff] %vm2096, %v2089
  %vm2100 = vcmask 483712
  %2101 = vst.msk [vmem:[#allocation2 + $0x48] sm:$0x1] %vm2100, %v2091
  %v2105 = vrot.slane %v1790, 5
  %v2106 = vrot.slane %v1793, 5
  %v2107 = vsel %vm247, %v2105, %v2106
  %v2108 = vrot.slane %v1796, 5
  %v2109 = vsel %vm247, %v2106, %v2108
  %v2110 = vrot.slane %v1799, 5
  %v2111 = vsel %vm247, %v2108, %v2110
  %2112 = vrot.lane.b32.xlu0 %v2107, 60
  %v2113 = vpop.permute.xlu0 %2112
  %2114 = vrot.lane.b32.xlu0 %v2109, 60
  %v2115 = vpop.permute.xlu0 %2114
  %2116 = vrot.lane.b32.xlu0 %v2111, 60
  %v2117 = vpop.permute.xlu0 %2116
  %2118 = vrot.lane.b32.xlu0 %v2110, 60
  %v2119 = vpop.permute.xlu0 %2118
  %vm2124 = vcmask 589280
  %2125 = vst.msk [vmem:[#allocation2] sm:$0xff] %vm2124, %v2113
  %2126 = vst.msk [vmem:[#allocation2 + $0x18] sm:$0xff] %vm2124, %v2115
  %2127 = vst.msk [vmem:[#allocation2 + $0x30] sm:$0xff] %vm2124, %v2117
  %vm2128 = vcmask 582112
  %2129 = vst.msk [vmem:[#allocation2 + $0x48] sm:$0x1] %vm2128, %v2119
  %vm2133 = vcmask 1041408
  %v2134 = vrot.slane %v1799, 6
  %v2135 = vrot.slane %v1802, 6
  %v2136 = vsel %vm2133, %v2134, %v2135
  %v2137 = vrot.slane %v1805, 6
  %v2138 = vsel %vm2133, %v2135, %v2137
  %v2139 = vrot.slane %v1808, 6
  %v2140 = vsel %vm2133, %v2137, %v2139
  %2141 = vrot.lane.b32.xlu0 %v2136, 72
  %v2142 = vpop.permute.xlu0 %2141
  %2143 = vrot.lane.b32.xlu0 %v2138, 72
  %v2144 = vpop.permute.xlu0 %2143
  %2145 = vrot.lane.b32.xlu0 %v2140, 72
  %v2146 = vpop.permute.xlu0 %2145
  %2147 = vrot.lane.b32.xlu0 %v2139, 72
  %v2148 = vpop.permute.xlu0 %2147
  %vm2153 = vcmask 687680
  %2154 = vst.msk [vmem:[#allocation2] sm:$0xff] %vm2153, %v2142
  %2155 = vst.msk [vmem:[#allocation2 + $0x18] sm:$0xff] %vm2153, %v2144
  %2156 = vst.msk [vmem:[#allocation2 + $0x30] sm:$0xff] %vm2153, %v2146
  %vm2157 = vcmask 680512
  %2158 = vst.msk [vmem:[#allocation2 + $0x48] sm:$0x1] %vm2157, %v2148
  %vm2162 = vcmask 1040384
  %v2163 = vrot.slane %v1808, 7
  %v2164 = vrot.slane %v1811, 7
  %v2165 = vsel %vm2162, %v2163, %v2164
  %v2166 = vrot.slane %v1814, 7
  %v2167 = vsel %vm2162, %v2164, %v2166
  %v2168 = vrot.slane %v1817, 7
  %v2169 = vsel %vm2162, %v2166, %v2168
  %2170 = vrot.lane.b32.xlu0 %v2165, 84
  %v2171 = vpop.permute.xlu0 %2170
  %2172 = vrot.lane.b32.xlu0 %v2167, 84
  %v2173 = vpop.permute.xlu0 %2172
  %2174 = vrot.lane.b32.xlu0 %v2169, 84
  %v2175 = vpop.permute.xlu0 %2174
  %2176 = vrot.lane.b32.xlu0 %v2168, 84
  %v2177 = vpop.permute.xlu0 %2176
  %vm2182 = vcmask 786080
  %2183 = vst.msk [vmem:[#allocation2] sm:$0xff] %vm2182, %v2171
  %2184 = vst.msk [vmem:[#allocation2 + $0x18] sm:$0xff] %vm2182, %v2173
  %2185 = vst.msk [vmem:[#allocation2 + $0x30] sm:$0xff] %vm2182, %v2175
  %vm2186 = vcmask 778912
  %2187 = vst.msk [vmem:[#allocation2 + $0x48] sm:$0x1] %vm2186, %v2177
  %2192 = vrot.lane.b32.xlu0 %v1820, 96
  %v2193 = vpop.permute.xlu0 %2192
  %2194 = vrot.lane.b32.xlu0 %v1823, 96
  %v2195 = vpop.permute.xlu0 %2194
  %2196 = vrot.lane.b32.xlu0 %v1826, 96
  %v2197 = vpop.permute.xlu0 %2196
  %2198 = vrot.lane.b32.xlu0 %v1829, 96
  %v2199 = vpop.permute.xlu0 %2198
  %vm2204 = vcmask 884480
  %2205 = vst.msk [vmem:[#allocation2] sm:$0xff] %vm2204, %v2193
  %2206 = vst.msk [vmem:[#allocation2 + $0x18] sm:$0xff] %vm2204, %v2195
  %2207 = vst.msk [vmem:[#allocation2 + $0x30] sm:$0xff] %vm2204, %v2197
  %vm2208 = vcmask 877312
  %2209 = vst.msk [vmem:[#allocation2 + $0x48] sm:$0x1] %vm2208, %v2199
  %v2213 = vrot.slane %v1829, 1
  %v2214 = vrot.slane %v1832, 1
  %v2215 = vsel %vm1990, %v2213, %v2214
  %v2216 = vrot.slane %v1835, 1
  %v2217 = vsel %vm1990, %v2214, %v2216
  %v2218 = vrot.slane %v1838, 1
  %v2219 = vsel %vm1990, %v2216, %v2218
  %2220 = vrot.lane.b32.xlu0 %v2215, 108
  %v2221 = vpop.permute.xlu0 %2220
  %2222 = vrot.lane.b32.xlu0 %v2217, 108
  %v2223 = vpop.permute.xlu0 %2222
  %2224 = vrot.lane.b32.xlu0 %v2219, 108
  %v2225 = vpop.permute.xlu0 %2224
  %2226 = vrot.lane.b32.xlu0 %v2218, 108
  %v2227 = vpop.permute.xlu0 %2226
  %vm2232 = vcmask 982880
  %2233 = vst.msk [vmem:[#allocation2] sm:$0xff] %vm2232, %v2221
  %2234 = vst.msk [vmem:[#allocation2 + $0x18] sm:$0xff] %vm2232, %v2223
  %2235 = vst.msk [vmem:[#allocation2 + $0x30] sm:$0xff] %vm2232, %v2225
  %vm2236 = vcmask 975712
  %2237 = vst.msk [vmem:[#allocation2 + $0x48] sm:$0x1] %vm2236, %v2227
  %v2241 = vrot.slane %v1838, 2
  %v2242 = vrot.slane %v1841, 2
  %v2243 = vsel %vm2019, %v2241, %v2242
  %v2244 = vrot.slane %v1844, 2
  %v2245 = vsel %vm2019, %v2242, %v2244
  %v2246 = vrot.slane %v1847, 2
  %v2247 = vsel %vm2019, %v2244, %v2246
  %2248 = vrot.lane.b32.xlu0 %v2243, 120
  %v2249 = vpop.permute.xlu0 %2248
  %2250 = vrot.lane.b32.xlu0 %v2245, 120
  %v2251 = vpop.permute.xlu0 %2250
  %2252 = vrot.lane.b32.xlu0 %v2247, 120
  %v2253 = vpop.permute.xlu0 %2252
  %2254 = vrot.lane.b32.xlu0 %v2246, 120
  %v2255 = vpop.permute.xlu0 %2254
  %vm2260 = vcmask 1048512
  %2261 = vst.msk [vmem:[#allocation2] sm:$0xff] %vm2260, %v2249
  %vm2262 = vcmask 31744
  %2263 = vst.msk [vmem:[#allocation2 + $0x8] sm:$0xff] %vm2262, %v2249
  %2264 = vst.msk [vmem:[#allocation2 + $0x18] sm:$0xff] %vm2260, %v2251
  %2265 = vst.msk [vmem:[#allocation2 + $0x20] sm:$0xff] %vm2262, %v2251
  %2266 = vst.msk [vmem:[#allocation2 + $0x30] sm:$0xff] %vm2260, %v2253
  %2267 = vst.msk [vmem:[#allocation2 + $0x38] sm:$0xff] %vm2262, %v2253
  %vm2268 = vcmask 1041344
  %2269 = vst.msk [vmem:[#allocation2 + $0x48] sm:$0x1] %vm2268, %v2255
  %vm2270 = vcmask 24576
  %2271 = vst.msk [vmem:[#allocation2 + $0x50] sm:$0x1] %vm2270, %v2255
  %v2275 = vrot.slane %v1847, 3
  %v2276 = vrot.slane %v1850, 3
  %v2277 = vsel %vm2048, %v2275, %v2276
  %v2278 = vrot.slane %v1853, 3
  %v2279 = vsel %vm2048, %v2276, %v2278
  %v2280 = vrot.slane %v1856, 3
  %v2281 = vsel %vm2048, %v2278, %v2280
  %2282 = vrot.lane.b32.xlu0 %v2277, 4
  %v2283 = vpop.permute.xlu0 %2282
  %2284 = vrot.lane.b32.xlu0 %v2279, 4
  %v2285 = vpop.permute.xlu0 %2284
  %2286 = vrot.lane.b32.xlu0 %v2281, 4
  %v2287 = vpop.permute.xlu0 %2286
  %2288 = vrot.lane.b32.xlu0 %v2280, 4
  %v2289 = vpop.permute.xlu0 %2288
  %vm2294 = vcmask 130080
  %2295 = vst.msk [vmem:[#allocation2 + $0x8] sm:$0xff] %vm2294, %v2283
  %2296 = vst.msk [vmem:[#allocation2 + $0x20] sm:$0xff] %vm2294, %v2285
  %2297 = vst.msk [vmem:[#allocation2 + $0x38] sm:$0xff] %vm2294, %v2287
  %vm2298 = vcmask 122912
  %2299 = vst.msk [vmem:[#allocation2 + $0x50] sm:$0x1] %vm2298, %v2289
  %v2303 = vrot.slane %v1856, 4
  %v2304 = vrot.slane %v1859, 4
  %v2305 = vsel %vm1469, %v2303, %v2304
  %v2306 = vrot.slane %v1862, 4
  %v2307 = vsel %vm1469, %v2304, %v2306
  %v2308 = vrot.slane %v1865, 4
  %v2309 = vsel %vm1469, %v2306, %v2308
  %2310 = vrot.lane.b32.xlu0 %v2305, 16
  %v2311 = vpop.permute.xlu0 %2310
  %2312 = vrot.lane.b32.xlu0 %v2307, 16
  %v2313 = vpop.permute.xlu0 %2312
  %2314 = vrot.lane.b32.xlu0 %v2309, 16
  %v2315 = vpop.permute.xlu0 %2314
  %2316 = vrot.lane.b32.xlu0 %v2308, 16
  %v2317 = vpop.permute.xlu0 %2316
  %vm2322 = vcmask 228480
  %2323 = vst.msk [vmem:[#allocation2 + $0x8] sm:$0xff] %vm2322, %v2311
  %2324 = vst.msk [vmem:[#allocation2 + $0x20] sm:$0xff] %vm2322, %v2313
  %2325 = vst.msk [vmem:[#allocation2 + $0x38] sm:$0xff] %vm2322, %v2315
  %vm2326 = vcmask 221312
  %2327 = vst.msk [vmem:[#allocation2 + $0x50] sm:$0x1] %vm2326, %v2317
  %v2331 = vrot.slane %v1865, 5
  %v2332 = vrot.slane %v1868, 5
  %v2333 = vsel %vm247, %v2331, %v2332
  %v2334 = vrot.slane %v1871, 5
  %v2335 = vsel %vm247, %v2332, %v2334
  %v2336 = vrot.slane %v1874, 5
  %v2337 = vsel %vm247, %v2334, %v2336
  %2338 = vrot.lane.b32.xlu0 %v2333, 28
  %v2339 = vpop.permute.xlu0 %2338
  %2340 = vrot.lane.b32.xlu0 %v2335, 28
  %v2341 = vpop.permute.xlu0 %2340
  %2342 = vrot.lane.b32.xlu0 %v2337, 28
  %v2343 = vpop.permute.xlu0 %2342
  %2344 = vrot.lane.b32.xlu0 %v2336, 28
  %v2345 = vpop.permute.xlu0 %2344
  %vm2350 = vcmask 326880
  %2351 = vst.msk [vmem:[#allocation2 + $0x8] sm:$0xff] %vm2350, %v2339
  %2352 = vst.msk [vmem:[#allocation2 + $0x20] sm:$0xff] %vm2350, %v2341
  %2353 = vst.msk [vmem:[#allocation2 + $0x38] sm:$0xff] %vm2350, %v2343
  %vm2354 = vcmask 319712
  %2355 = vst.msk [vmem:[#allocation2 + $0x50] sm:$0x1] %vm2354, %v2345
  %v2359 = vrot.slane %v1874, 6
  %v2360 = vrot.slane %v1877, 6
  %v2361 = vsel %vm2133, %v2359, %v2360
  %v2362 = vrot.slane %v1880, 6
  %v2363 = vsel %vm2133, %v2360, %v2362
  %v2364 = vrot.slane %v1883, 6
  %v2365 = vsel %vm2133, %v2362, %v2364
  %2366 = vrot.lane.b32.xlu0 %v2361, 40
  %v2367 = vpop.permute.xlu0 %2366
  %2368 = vrot.lane.b32.xlu0 %v2363, 40
  %v2369 = vpop.permute.xlu0 %2368
  %2370 = vrot.lane.b32.xlu0 %v2365, 40
  %v2371 = vpop.permute.xlu0 %2370
  %2372 = vrot.lane.b32.xlu0 %v2364, 40
  %v2373 = vpop.permute.xlu0 %2372
  %vm2378 = vcmask 425280
  %2379 = vst.msk [vmem:[#allocation2 + $0x8] sm:$0xff] %vm2378, %v2367
  %2380 = vst.msk [vmem:[#allocation2 + $0x20] sm:$0xff] %vm2378, %v2369
  %2381 = vst.msk [vmem:[#allocation2 + $0x38] sm:$0xff] %vm2378, %v2371
  %vm2382 = vcmask 418112
  %2383 = vst.msk [vmem:[#allocation2 + $0x50] sm:$0x1] %vm2382, %v2373
  %v2387 = vrot.slane %v1883, 7
  %v2388 = vrot.slane %v1886, 7
  %v2389 = vsel %vm2162, %v2387, %v2388
  %v2390 = vrot.slane %v1889, 7
  %v2391 = vsel %vm2162, %v2388, %v2390
  %v2392 = vrot.slane %v1892, 7
  %v2393 = vsel %vm2162, %v2390, %v2392
  %2394 = vrot.lane.b32.xlu0 %v2389, 52
  %v2395 = vpop.permute.xlu0 %2394
  %2396 = vrot.lane.b32.xlu0 %v2391, 52
  %v2397 = vpop.permute.xlu0 %2396
  %2398 = vrot.lane.b32.xlu0 %v2393, 52
  %v2399 = vpop.permute.xlu0 %2398
  %2400 = vrot.lane.b32.xlu0 %v2392, 52
  %v2401 = vpop.permute.xlu0 %2400
  %vm2406 = vcmask 523680
  %2407 = vst.msk [vmem:[#allocation2 + $0x8] sm:$0xff] %vm2406, %v2395
  %2408 = vst.msk [vmem:[#allocation2 + $0x20] sm:$0xff] %vm2406, %v2397
  %2409 = vst.msk [vmem:[#allocation2 + $0x38] sm:$0xff] %vm2406, %v2399
  %vm2410 = vcmask 516512
  %2411 = vst.msk [vmem:[#allocation2 + $0x50] sm:$0x1] %vm2410, %v2401
  %2416 = vrot.lane.b32.xlu0 %v1895, 64
  %v2417 = vpop.permute.xlu0 %2416
  %2418 = vrot.lane.b32.xlu0 %v1898, 64
  %v2419 = vpop.permute.xlu0 %2418
  %2420 = vrot.lane.b32.xlu0 %v1901, 64
  %v2421 = vpop.permute.xlu0 %2420
  %2422 = vrot.lane.b32.xlu0 %v1904, 64
  %v2423 = vpop.permute.xlu0 %2422
  %vm2428 = vcmask 622080
  %2429 = vst.msk [vmem:[#allocation2 + $0x8] sm:$0xff] %vm2428, %v2417
  %2430 = vst.msk [vmem:[#allocation2 + $0x20] sm:$0xff] %vm2428, %v2419
  %2431 = vst.msk [vmem:[#allocation2 + $0x38] sm:$0xff] %vm2428, %v2421
  %vm2432 = vcmask 614912
  %2433 = vst.msk [vmem:[#allocation2 + $0x50] sm:$0x1] %vm2432, %v2423
  %v2437 = vrot.slane %v1904, 1
  %v2438 = vrot.slane %v1907, 1
  %v2439 = vsel %vm1990, %v2437, %v2438
  %v2440 = vrot.slane %v1910, 1
  %v2441 = vsel %vm1990, %v2438, %v2440
  %v2442 = vrot.slane %v1913, 1
  %v2443 = vsel %vm1990, %v2440, %v2442
  %2444 = vrot.lane.b32.xlu0 %v2439, 76
  %v2445 = vpop.permute.xlu0 %2444
  %2446 = vrot.lane.b32.xlu0 %v2441, 76
  %v2447 = vpop.permute.xlu0 %2446
  %2448 = vrot.lane.b32.xlu0 %v2443, 76
  %v2449 = vpop.permute.xlu0 %2448
  %2450 = vrot.lane.b32.xlu0 %v2442, 76
  %v2451 = vpop.permute.xlu0 %2450
  %vm2456 = vcmask 720480
  %2457 = vst.msk [vmem:[#allocation2 + $0x8] sm:$0xff] %vm2456, %v2445
  %2458 = vst.msk [vmem:[#allocation2 + $0x20] sm:$0xff] %vm2456, %v2447
  %2459 = vst.msk [vmem:[#allocation2 + $0x38] sm:$0xff] %vm2456, %v2449
  %vm2460 = vcmask 713312
  %2461 = vst.msk [vmem:[#allocation2 + $0x50] sm:$0x1] %vm2460, %v2451
  %v2465 = vrot.slane %v1913, 2
  %v2466 = vrot.slane %v1916, 2
  %v2467 = vsel %vm2019, %v2465, %v2466
  %v2468 = vrot.slane %v1919, 2
  %v2469 = vsel %vm2019, %v2466, %v2468
  %v2470 = vrot.slane %v1922, 2
  %v2471 = vsel %vm2019, %v2468, %v2470
  %2472 = vrot.lane.b32.xlu0 %v2467, 88
  %v2473 = vpop.permute.xlu0 %2472
  %2474 = vrot.lane.b32.xlu0 %v2469, 88
  %v2475 = vpop.permute.xlu0 %2474
  %2476 = vrot.lane.b32.xlu0 %v2471, 88
  %v2477 = vpop.permute.xlu0 %2476
  %2478 = vrot.lane.b32.xlu0 %v2470, 88
  %v2479 = vpop.permute.xlu0 %2478
  %vm2484 = vcmask 818880
  %2485 = vst.msk [vmem:[#allocation2 + $0x8] sm:$0xff] %vm2484, %v2473
  %2486 = vst.msk [vmem:[#allocation2 + $0x20] sm:$0xff] %vm2484, %v2475
  %2487 = vst.msk [vmem:[#allocation2 + $0x38] sm:$0xff] %vm2484, %v2477
  %vm2488 = vcmask 811712
  %2489 = vst.msk [vmem:[#allocation2 + $0x50] sm:$0x1] %vm2488, %v2479
  %v2493 = vrot.slane %v1922, 3
  %v2494 = vrot.slane %v1925, 3
  %v2495 = vsel %vm2048, %v2493, %v2494
  %v2496 = vrot.slane %v1928, 3
  %v2497 = vsel %vm2048, %v2494, %v2496
  %v2498 = vrot.slane %v1931, 3
  %v2499 = vsel %vm2048, %v2496, %v2498
  %2500 = vrot.lane.b32.xlu0 %v2495, 100
  %v2501 = vpop.permute.xlu0 %2500
  %2502 = vrot.lane.b32.xlu0 %v2497, 100
  %v2503 = vpop.permute.xlu0 %2502
  %2504 = vrot.lane.b32.xlu0 %v2499, 100
  %v2505 = vpop.permute.xlu0 %2504
  %2506 = vrot.lane.b32.xlu0 %v2498, 100
  %v2507 = vpop.permute.xlu0 %2506
  %vm2512 = vcmask 917280
  %2513 = vst.msk [vmem:[#allocation2 + $0x8] sm:$0xff] %vm2512, %v2501
  %2514 = vst.msk [vmem:[#allocation2 + $0x20] sm:$0xff] %vm2512, %v2503
  %2515 = vst.msk [vmem:[#allocation2 + $0x38] sm:$0xff] %vm2512, %v2505
  %vm2516 = vcmask 910112
  %2517 = vst.msk [vmem:[#allocation2 + $0x50] sm:$0x1] %vm2516, %v2507
  %v2521 = vrot.slane %v1931, 4
  %v2522 = vrot.slane %v1934, 4
  %v2523 = vsel %vm1469, %v2521, %v2522
  %v2524 = vrot.slane %v1937, 4
  %v2525 = vsel %vm1469, %v2522, %v2524
  %v2526 = vrot.slane %v1940, 4
  %v2527 = vsel %vm1469, %v2524, %v2526
  %2528 = vrot.lane.b32.xlu0 %v2523, 112
  %v2529 = vpop.permute.xlu0 %2528
  %2530 = vrot.lane.b32.xlu0 %v2525, 112
  %v2531 = vpop.permute.xlu0 %2530
  %2532 = vrot.lane.b32.xlu0 %v2527, 112
  %v2533 = vpop.permute.xlu0 %2532
  %2534 = vrot.lane.b32.xlu0 %v2526, 112
  %v2535 = vpop.permute.xlu0 %2534
  %vm2540 = vcmask 1015680
  %2541 = vst.msk [vmem:[#allocation2 + $0x8] sm:$0xff] %vm2540, %v2529
  %2542 = vst.msk [vmem:[#allocation2 + $0x20] sm:$0xff] %vm2540, %v2531
  %2543 = vst.msk [vmem:[#allocation2 + $0x38] sm:$0xff] %vm2540, %v2533
  %vm2544 = vcmask 1008512
  %2545 = vst.msk [vmem:[#allocation2 + $0x50] sm:$0x1] %vm2544, %v2535
  %v2549 = vrot.slane %v1940, 5
  %v2550 = vrot.slane %v1943, 5
  %v2551 = vsel %vm247, %v2549, %v2550
  %v2552 = vrot.slane %v1946, 5
  %v2553 = vsel %vm247, %v2550, %v2552
  %v2554 = vrot.slane %v1949, 5
  %v2555 = vsel %vm247, %v2552, %v2554
  %2556 = vrot.lane.b32.xlu0 %v2551, 124
  %v2557 = vpop.permute.xlu0 %2556
  %2558 = vrot.lane.b32.xlu0 %v2553, 124
  %v2559 = vpop.permute.xlu0 %2558
  %2560 = vrot.lane.b32.xlu0 %v2555, 124
  %v2561 = vpop.permute.xlu0 %2560
  %2562 = vrot.lane.b32.xlu0 %v2554, 124
  %v2563 = vpop.permute.xlu0 %2562
  %vm2568 = vcmask 1048544
  %2569 = vst.msk [vmem:[#allocation2 + $0x8] sm:$0xff] %vm2568, %v2557
  %vm2570 = vcmask 64512
  %2571 = vst.msk [vmem:[#allocation2 + $0x10] sm:$0xff] %vm2570, %v2557
  %2572 = vst.msk [vmem:[#allocation2 + $0x20] sm:$0xff] %vm2568, %v2559
  %2573 = vst.msk [vmem:[#allocation2 + $0x28] sm:$0xff] %vm2570, %v2559
  %2574 = vst.msk [vmem:[#allocation2 + $0x38] sm:$0xff] %vm2568, %v2561
  %2575 = vst.msk [vmem:[#allocation2 + $0x40] sm:$0xff] %vm2570, %v2561
  %vm2576 = vcmask 1041376
  %2577 = vst.msk [vmem:[#allocation2 + $0x50] sm:$0x1] %vm2576, %v2563
  %vm2578 = vcmask 57344
  %2579 = vst.msk [vmem:[#allocation2 + $0x58] sm:$0x1] %vm2578, %v2563
  %v2583 = vrot.slane %v1949, 6
  %v2584 = vrot.slane %v1952, 6
  %v2585 = vsel %vm2133, %v2583, %v2584
  %v2586 = vrot.slane %v1955, 6
  %v2587 = vsel %vm2133, %v2584, %v2586
  %v2588 = vrot.slane %v1958, 6
  %v2589 = vsel %vm2133, %v2586, %v2588
  %2590 = vrot.lane.b32.xlu0 %v2585, 8
  %v2591 = vpop.permute.xlu0 %2590
  %2592 = vrot.lane.b32.xlu0 %v2587, 8
  %v2593 = vpop.permute.xlu0 %2592
  %2594 = vrot.lane.b32.xlu0 %v2589, 8
  %v2595 = vpop.permute.xlu0 %2594
  %2596 = vrot.lane.b32.xlu0 %v2588, 8
  %v2597 = vpop.permute.xlu0 %2596
  %vm2602 = vcmask 162880
  %2603 = vst.msk [vmem:[#allocation2 + $0x10] sm:$0xff] %vm2602, %v2591
  %2604 = vst.msk [vmem:[#allocation2 + $0x28] sm:$0xff] %vm2602, %v2593
  %2605 = vst.msk [vmem:[#allocation2 + $0x40] sm:$0xff] %vm2602, %v2595
  %vm2606 = vcmask 155712
  %2607 = vst.msk [vmem:[#allocation2 + $0x58] sm:$0x1] %vm2606, %v2597
  %v2611 = vrot.slane %v1958, 7
  %v2612 = vrot.slane %v1961, 7
  %v2613 = vsel %vm2162, %v2611, %v2612
  %v2614 = vrot.slane %v1964, 7
  %v2615 = vsel %vm2162, %v2612, %v2614
  %v2616 = vrot.slane %v1967, 7
  %v2617 = vsel %vm2162, %v2614, %v2616
  %2618 = vrot.lane.b32.xlu0 %v2613, 20
  %v2619 = vpop.permute.xlu0 %2618
  %2620 = vrot.lane.b32.xlu0 %v2615, 20
  %v2621 = vpop.permute.xlu0 %2620
  %2622 = vrot.lane.b32.xlu0 %v2617, 20
  %v2623 = vpop.permute.xlu0 %2622
  %2624 = vrot.lane.b32.xlu0 %v2616, 20
  %v2625 = vpop.permute.xlu0 %2624
  %vm2630 = vcmask 261280
  %2631 = vst.msk [vmem:[#allocation2 + $0x10] sm:$0xff] %vm2630, %v2619
  %2632 = vst.msk [vmem:[#allocation2 + $0x28] sm:$0xff] %vm2630, %v2621
  %2633 = vst.msk [vmem:[#allocation2 + $0x40] sm:$0xff] %vm2630, %v2623
  %vm2634 = vcmask 254112
  %2635 = vst.msk [vmem:[#allocation2 + $0x58] sm:$0x1] %vm2634, %v2625
  %2640 = vrot.lane.b32.xlu0 %v1970, 32
  %v2641 = vpop.permute.xlu0 %2640
  %2642 = vrot.lane.b32.xlu0 %v1973, 32
  %v2643 = vpop.permute.xlu0 %2642
  %2644 = vrot.lane.b32.xlu0 %v1976, 32
  %v2645 = vpop.permute.xlu0 %2644
  %2646 = vrot.lane.b32.xlu0 %v1979, 32
  %v2647 = vpop.permute.xlu0 %2646
  %vm2652 = vcmask 359680
  %2653 = vst.msk [vmem:[#allocation2 + $0x10] sm:$0xff] %vm2652, %v2641
  %2654 = vst.msk [vmem:[#allocation2 + $0x28] sm:$0xff] %vm2652, %v2643
  %2655 = vst.msk [vmem:[#allocation2 + $0x40] sm:$0xff] %vm2652, %v2645
  %vm2656 = vcmask 352512
  %2657 = vst.msk [vmem:[#allocation2 + $0x58] sm:$0x1] %vm2656, %v2647
  %v2682 = vrot.slane %v969, 4
  %v2683 = vrot.slane %v970, 4
  %v2684 = vsel %vm1469, %v2682, %v2683
  %v2685 = vrot.slane %v971, 4
  %v2686 = vsel %vm1469, %v2683, %v2685
  %v2687 = vrot.slane %v972, 4
  %v2688 = vsel %vm1469, %v2685, %v2687
  %v2689 = vrot.slane %v973, 4
  %v2690 = vsel %vm1469, %v2687, %v2689
  %v2691 = vrot.slane %v974, 4
  %v2692 = vsel %vm1469, %v2689, %v2691
  %v2693 = vrot.slane %v975, 4
  %v2694 = vsel %vm1469, %v2691, %v2693
  %v2695 = vrot.slane %v976, 4
  %v2696 = vsel %vm1469, %v2693, %v2695
  %v2697 = vrot.slane %v977, 4
  %v2698 = vsel %vm1469, %v2695, %v2697
  %v2699 = vrot.slane %v978, 4
  %v2700 = vsel %vm1469, %v2697, %v2699
  %v2701 = vrot.slane %v979, 4
  %v2702 = vsel %vm1469, %v2699, %v2701
  %v2703 = vrot.slane %v980, 4
  %v2704 = vsel %vm1469, %v2701, %v2703
  %v2705 = vrot.slane %v981, 4
  %v2706 = vsel %vm1469, %v2703, %v2705
  %v2707 = vrot.slane %v982, 4
  %v2708 = vsel %vm1469, %v2705, %v2707
  %v2709 = vrot.slane %v983, 4
  %v2710 = vsel %vm1469, %v2707, %v2709
  %v2711 = vrot.slane %v984, 4
  %v2712 = vsel %vm1469, %v2709, %v2711
  %v2713 = vrot.slane %v985, 4
  %v2714 = vsel %vm1469, %v2711, %v2713
  %v2715 = vrot.slane %v986, 4
  %v2716 = vsel %vm1469, %v2713, %v2715
  %v2717 = vrot.slane %v987, 4
  %v2718 = vsel %vm1469, %v2715, %v2717
  %v2719 = vrot.slane %v988, 4
  %v2720 = vsel %vm1469, %v2717, %v2719
  %v2721 = vrot.slane %v989, 4
  %v2722 = vsel %vm1469, %v2719, %v2721
  %v2723 = vrot.slane %v990, 4
  %v2724 = vsel %vm1469, %v2721, %v2723
  %v2725 = vrot.slane %v991, 4
  %v2726 = vsel %vm1469, %v2723, %v2725
  %v2727 = vrot.slane %v992, 4
  %v2728 = vsel %vm1469, %v2725, %v2727
  %v2729 = vrot.slane %v993, 4
  %v2730 = vsel %vm1469, %v2727, %v2729
  %v2755 = vsel %vm1469, %v2729, 0
  %2757 = vmatpush.msra.mxu0 %v2714
  %2758 = vmatpush.msra.mxu0 %v2712
  %2759 = vmatpush.msra.mxu0 %v2710
  %2760 = vmatpush.msra.mxu0 %v2708
  %2761 = vmatpush.msra.mxu0 %v2706
  %2762 = vmatpush.msra.mxu0 %v2704
  %2763 = vmatpush.msra.mxu0 %v2702
  %2764 = vmatpush.msra.mxu0 %v2700
  %2765 = vmatpush.msra.mxu0 %v2698
  %2766 = vmatpush.msra.mxu0 %v2696
  %2767 = vmatpush.msra.mxu0 %v2694
  %2768 = vmatpush.msra.mxu0 %v2692
  %2769 = vmatpush.msra.mxu0 %v2690
  %2770 = vmatpush.msra.mxu0 %v2688
  %2771 = vmatpush.msra.mxu0 %v2686
  %2772 = vmatpush.msra.mxu0 %v2684
  %2773 = vmatmul.f32.gmra.mxu0 %v1073
  %v2774 = vpop.f32.mrf.mxu0
  %v2775 = vadd.f32 0.0, %v2774
  %2776 = vmatmul.f32.gmra.mxu0 %v1075
  %v2777 = vpop.f32.mrf.mxu0
  %v2778 = vadd.f32 0.0, %v2777
  %2779 = vmatmul.f32.gmra.mxu0 %v1077
  %v2780 = vpop.f32.mrf.mxu0
  %v2781 = vadd.f32 0.0, %v2780
  %2782 = vmatmul.f32.gmra.mxu0 %v1079
  %v2783 = vpop.f32.mrf.mxu0
  %v2784 = vadd.f32 0.0, %v2783
  %2785 = vmatmul.f32.gmra.mxu0 %v1081
  %v2786 = vpop.f32.mrf.mxu0
  %v2787 = vadd.f32 0.0, %v2786
  %2788 = vmatmul.f32.gmra.mxu0 %v1083
  %v2789 = vpop.f32.mrf.mxu0
  %v2790 = vadd.f32 0.0, %v2789
  %2791 = vmatmul.f32.gmra.mxu0 %v1085
  %v2792 = vpop.f32.mrf.mxu0
  %v2793 = vadd.f32 0.0, %v2792
  %2794 = vmatmul.f32.gmra.mxu0 %v1087
  %v2795 = vpop.f32.mrf.mxu0
  %v2796 = vadd.f32 0.0, %v2795
  %2797 = vmatmul.f32.gmra.mxu0 %v1089
  %v2798 = vpop.f32.mrf.mxu0
  %v2799 = vadd.f32 0.0, %v2798
  %2800 = vmatmul.f32.gmra.mxu0 %v1091
  %v2801 = vpop.f32.mrf.mxu0
  %v2802 = vadd.f32 0.0, %v2801
  %2803 = vmatmul.f32.gmra.mxu0 %v1093
  %v2804 = vpop.f32.mrf.mxu0
  %v2805 = vadd.f32 0.0, %v2804
  %2806 = vmatmul.f32.gmra.mxu0 %v1095
  %v2807 = vpop.f32.mrf.mxu0
  %v2808 = vadd.f32 0.0, %v2807
  %2809 = vmatmul.f32.gmra.mxu0 %v1097
  %v2810 = vpop.f32.mrf.mxu0
  %v2811 = vadd.f32 0.0, %v2810
  %2812 = vmatmul.f32.gmra.mxu0 %v1099
  %v2813 = vpop.f32.mrf.mxu0
  %v2814 = vadd.f32 0.0, %v2813
  %2815 = vmatmul.f32.gmra.mxu0 %v1101
  %v2816 = vpop.f32.mrf.mxu0
  %v2817 = vadd.f32 0.0, %v2816
  %2818 = vmatmul.f32.gmra.mxu0 %v1103
  %v2819 = vpop.f32.mrf.mxu0
  %v2820 = vadd.f32 0.0, %v2819
  %2821 = vmatmul.f32.gmra.mxu0 %v1105
  %v2822 = vpop.f32.mrf.mxu0
  %v2823 = vadd.f32 0.0, %v2822
  %2824 = vmatmul.f32.gmra.mxu0 %v1107
  %v2825 = vpop.f32.mrf.mxu0
  %v2826 = vadd.f32 0.0, %v2825
  %2827 = vmatmul.f32.gmra.mxu0 %v1109
  %v2828 = vpop.f32.mrf.mxu0
  %v2829 = vadd.f32 0.0, %v2828
  %2830 = vmatmul.f32.gmra.mxu0 %v1111
  %v2831 = vpop.f32.mrf.mxu0
  %v2832 = vadd.f32 0.0, %v2831
  %2833 = vmatmul.f32.gmra.mxu0 %v1113
  %v2834 = vpop.f32.mrf.mxu0
  %v2835 = vadd.f32 0.0, %v2834
  %2836 = vmatmul.f32.gmra.mxu0 %v1115
  %v2837 = vpop.f32.mrf.mxu0
  %v2838 = vadd.f32 0.0, %v2837
  %2839 = vmatmul.f32.gmra.mxu0 %v1117
  %v2840 = vpop.f32.mrf.mxu0
  %v2841 = vadd.f32 0.0, %v2840
  %2842 = vmatmul.f32.gmra.mxu0 %v1119
  %v2843 = vpop.f32.mrf.mxu0
  %v2844 = vadd.f32 0.0, %v2843
  %2845 = vmatmul.f32.gmra.mxu0 %v1121
  %v2846 = vpop.f32.mrf.mxu0
  %v2847 = vadd.f32 0.0, %v2846
  %2848 = vmatmul.f32.gmra.mxu0 %v1123
  %v2849 = vpop.f32.mrf.mxu0
  %v2850 = vadd.f32 0.0, %v2849
  %2851 = vmatmul.f32.gmra.mxu0 %v1125
  %v2852 = vpop.f32.mrf.mxu0
  %v2853 = vadd.f32 0.0, %v2852
  %2854 = vmatmul.f32.gmra.mxu0 %v1127
  %v2855 = vpop.f32.mrf.mxu0
  %v2856 = vadd.f32 0.0, %v2855
  %2857 = vmatmul.f32.gmra.mxu0 %v1129
  %v2858 = vpop.f32.mrf.mxu0
  %v2859 = vadd.f32 0.0, %v2858
  %2860 = vmatmul.f32.gmra.mxu0 %v1131
  %v2861 = vpop.f32.mrf.mxu0
  %v2862 = vadd.f32 0.0, %v2861
  %2863 = vmatmul.f32.gmra.mxu0 %v1133
  %v2864 = vpop.f32.mrf.mxu0
  %v2865 = vadd.f32 0.0, %v2864
  %2866 = vmatmul.f32.gmra.mxu0 %v1135
  %v2867 = vpop.f32.mrf.mxu0
  %v2868 = vadd.f32 0.0, %v2867
  %2869 = vmatmul.f32.gmra.mxu0 %v1137
  %v2870 = vpop.f32.mrf.mxu0
  %v2871 = vadd.f32 0.0, %v2870
  %2872 = vmatmul.f32.gmra.mxu0 %v1139
  %v2873 = vpop.f32.mrf.mxu0
  %v2874 = vadd.f32 0.0, %v2873
  %2875 = vmatmul.f32.gmra.mxu0 %v1141
  %v2876 = vpop.f32.mrf.mxu0
  %v2877 = vadd.f32 0.0, %v2876
  %2878 = vmatmul.f32.gmra.mxu0 %v1143
  %v2879 = vpop.f32.mrf.mxu0
  %v2880 = vadd.f32 0.0, %v2879
  %2881 = vmatmul.f32.gmra.mxu0 %v1145
  %v2882 = vpop.f32.mrf.mxu0
  %v2883 = vadd.f32 0.0, %v2882
  %2884 = vmatmul.f32.gmra.mxu0 %v1147
  %v2885 = vpop.f32.mrf.mxu0
  %v2886 = vadd.f32 0.0, %v2885
  %2887 = vmatmul.f32.gmra.mxu0 %v1149
  %v2888 = vpop.f32.mrf.mxu0
  %v2889 = vadd.f32 0.0, %v2888
  %2890 = vmatmul.f32.gmra.mxu0 %v1151
  %v2891 = vpop.f32.mrf.mxu0
  %v2892 = vadd.f32 0.0, %v2891
  %2893 = vmatmul.f32.gmra.mxu0 %v1153
  %v2894 = vpop.f32.mrf.mxu0
  %v2895 = vadd.f32 0.0, %v2894
  %2896 = vmatmul.f32.gmra.mxu0 %v1155
  %v2897 = vpop.f32.mrf.mxu0
  %v2898 = vadd.f32 0.0, %v2897
  %2899 = vmatmul.f32.gmra.mxu0 %v1157
  %v2900 = vpop.f32.mrf.mxu0
  %v2901 = vadd.f32 0.0, %v2900
  %2902 = vmatmul.f32.gmra.mxu0 %v1159
  %v2903 = vpop.f32.mrf.mxu0
  %v2904 = vadd.f32 0.0, %v2903
  %2905 = vmatmul.f32.gmra.mxu0 %v1161
  %v2906 = vpop.f32.mrf.mxu0
  %v2907 = vadd.f32 0.0, %v2906
  %2908 = vmatmul.f32.gmra.mxu0 %v1163
  %v2909 = vpop.f32.mrf.mxu0
  %v2910 = vadd.f32 0.0, %v2909
  %2911 = vmatmul.f32.gmra.mxu0 %v1165
  %v2912 = vpop.f32.mrf.mxu0
  %v2913 = vadd.f32 0.0, %v2912
  %2914 = vmatmul.f32.gmra.mxu0 %v1167
  %v2915 = vpop.f32.mrf.mxu0
  %v2916 = vadd.f32 0.0, %v2915
  %2917 = vmatmul.f32.gmra.mxu0 %v1169
  %v2918 = vpop.f32.mrf.mxu0
  %v2919 = vadd.f32 0.0, %v2918
  %2920 = vmatmul.f32.gmra.mxu0 %v1171
  %v2921 = vpop.f32.mrf.mxu0
  %v2922 = vadd.f32 0.0, %v2921
  %2923 = vmatmul.f32.gmra.mxu0 %v1173
  %v2924 = vpop.f32.mrf.mxu0
  %v2925 = vadd.f32 0.0, %v2924
  %2926 = vmatmul.f32.gmra.mxu0 %v1175
  %v2927 = vpop.f32.mrf.mxu0
  %v2928 = vadd.f32 0.0, %v2927
  %2929 = vmatmul.f32.gmra.mxu0 %v1177
  %v2930 = vpop.f32.mrf.mxu0
  %v2931 = vadd.f32 0.0, %v2930
  %2932 = vmatmul.f32.gmra.mxu0 %v1179
  %v2933 = vpop.f32.mrf.mxu0
  %v2934 = vadd.f32 0.0, %v2933
  %2935 = vmatmul.f32.gmra.mxu0 %v1181
  %v2936 = vpop.f32.mrf.mxu0
  %v2937 = vadd.f32 0.0, %v2936
  %2938 = vmatmul.f32.gmra.mxu0 %v1183
  %v2939 = vpop.f32.mrf.mxu0
  %v2940 = vadd.f32 0.0, %v2939
  %2941 = vmatmul.f32.gmra.mxu0 %v1185
  %v2942 = vpop.f32.mrf.mxu0
  %v2943 = vadd.f32 0.0, %v2942
  %2944 = vmatmul.f32.gmra.mxu0 %v1187
  %v2945 = vpop.f32.mrf.mxu0
  %v2946 = vadd.f32 0.0, %v2945
  %2947 = vmatmul.f32.gmra.mxu0 %v1189
  %v2948 = vpop.f32.mrf.mxu0
  %v2949 = vadd.f32 0.0, %v2948
  %2950 = vmatmul.f32.gmra.mxu0 %v1191
  %v2951 = vpop.f32.mrf.mxu0
  %v2952 = vadd.f32 0.0, %v2951
  %2953 = vmatmul.f32.gmra.mxu0 %v1193
  %v2954 = vpop.f32.mrf.mxu0
  %v2955 = vadd.f32 0.0, %v2954
  %2956 = vmatmul.f32.gmra.mxu0 %v1195
  %v2957 = vpop.f32.mrf.mxu0
  %v2958 = vadd.f32 0.0, %v2957
  %2959 = vmatmul.f32.gmra.mxu0 %v1197
  %v2960 = vpop.f32.mrf.mxu0
  %v2961 = vadd.f32 0.0, %v2960
  %2962 = vmatmul.f32.gmra.mxu0 %v1199
  %v2963 = vpop.f32.mrf.mxu0
  %v2964 = vadd.f32 0.0, %v2963
  %2965 = vmatmul.f32.gmra.mxu0 %v1201
  %v2966 = vpop.f32.mrf.mxu0
  %v2967 = vadd.f32 0.0, %v2966
  %2968 = vmatmul.f32.gmra.mxu0 %v1203
  %v2969 = vpop.f32.mrf.mxu0
  %v2970 = vadd.f32 0.0, %v2969
  %2971 = vmatmul.f32.gmra.mxu0 %v1205
  %v2972 = vpop.f32.mrf.mxu0
  %v2973 = vadd.f32 0.0, %v2972
  %2974 = vmatmul.f32.gmra.mxu0 %v1207
  %v2975 = vpop.f32.mrf.mxu0
  %v2976 = vadd.f32 0.0, %v2975
  %2977 = vmatmul.f32.gmra.mxu0 %v1209
  %v2978 = vpop.f32.mrf.mxu0
  %v2979 = vadd.f32 0.0, %v2978
  %2980 = vmatmul.f32.gmra.mxu0 %v1211
  %v2981 = vpop.f32.mrf.mxu0
  %v2982 = vadd.f32 0.0, %v2981
  %2983 = vmatmul.f32.gmra.mxu0 %v1213
  %v2984 = vpop.f32.mrf.mxu0
  %v2985 = vadd.f32 0.0, %v2984
  %2986 = vmatmul.f32.gmra.mxu0 %v1215
  %v2987 = vpop.f32.mrf.mxu0
  %v2988 = vadd.f32 0.0, %v2987
  %2989 = vmatmul.f32.gmra.mxu0 %v1217
  %v2990 = vpop.f32.mrf.mxu0
  %v2991 = vadd.f32 0.0, %v2990
  %2992 = vmatmul.f32.gmra.mxu0 %v1219
  %v2993 = vpop.f32.mrf.mxu0
  %v2994 = vadd.f32 0.0, %v2993
  %2995 = vmatmul.f32.gmra.mxu0 %v1221
  %v2996 = vpop.f32.mrf.mxu0
  %v2997 = vadd.f32 0.0, %v2996
  %2998 = vmatmul.f32.gmra.mxu0 %v1223
  %v2999 = vpop.f32.mrf.mxu0
  %v3000 = vadd.f32 0.0, %v2999
  %3001 = vmatmul.f32.gmra.mxu0 %v1225
  %v3002 = vpop.f32.mrf.mxu0
  %v3003 = vadd.f32 0.0, %v3002
  %3004 = vmatmul.f32.gmra.mxu0 %v1227
  %v3005 = vpop.f32.mrf.mxu0
  %v3006 = vadd.f32 0.0, %v3005
  %3007 = vmatmul.f32.gmra.mxu0 %v1229
  %v3008 = vpop.f32.mrf.mxu0
  %v3009 = vadd.f32 0.0, %v3008
  %3010 = vdwg.mxu0
  %3011 = vmatpush.msra.mxu0 0.0
  %3012 = vmatpush.msra.mxu0 0.0
  %3013 = vmatpush.msra.mxu0 0.0
  %3014 = vmatpush.msra.mxu0 0.0
  %3015 = vmatpush.msra.mxu0 0.0
  %3016 = vmatpush.msra.mxu0 0.0
  %3017 = vmatpush.msra.mxu0 0.0
  %3018 = vmatpush.msra.mxu0 %v2755
  %3019 = vmatpush.msra.mxu0 %v2730
  %3020 = vmatpush.msra.mxu0 %v2728
  %3021 = vmatpush.msra.mxu0 %v2726
  %3022 = vmatpush.msra.mxu0 %v2724
  %3023 = vmatpush.msra.mxu0 %v2722
  %3024 = vmatpush.msra.mxu0 %v2720
  %3025 = vmatpush.msra.mxu0 %v2718
  %3026 = vmatpush.msra.mxu0 %v2716
  %3027 = vmatmul.f32.gmra.mxu0 %v1233
  %v3028 = vpop.f32.mrf.mxu0
  %v3029 = vadd.f32 %v2775, %v3028
  %3030 = vmatmul.f32.gmra.mxu0 %v1236
  %v3031 = vpop.f32.mrf.mxu0
  %v3032 = vadd.f32 %v2778, %v3031
  %3033 = vmatmul.f32.gmra.mxu0 %v1239
  %v3034 = vpop.f32.mrf.mxu0
  %v3035 = vadd.f32 %v2781, %v3034
  %3036 = vmatmul.f32.gmra.mxu0 %v1242
  %v3037 = vpop.f32.mrf.mxu0
  %v3038 = vadd.f32 %v2784, %v3037
  %3039 = vmatmul.f32.gmra.mxu0 %v1245
  %v3040 = vpop.f32.mrf.mxu0
  %v3041 = vadd.f32 %v2787, %v3040
  %3042 = vmatmul.f32.gmra.mxu0 %v1248
  %v3043 = vpop.f32.mrf.mxu0
  %v3044 = vadd.f32 %v2790, %v3043
  %3045 = vmatmul.f32.gmra.mxu0 %v1251
  %v3046 = vpop.f32.mrf.mxu0
  %v3047 = vadd.f32 %v2793, %v3046
  %3048 = vmatmul.f32.gmra.mxu0 %v1254
  %v3049 = vpop.f32.mrf.mxu0
  %v3050 = vadd.f32 %v2796, %v3049
  %3051 = vmatmul.f32.gmra.mxu0 %v1257
  %v3052 = vpop.f32.mrf.mxu0
  %v3053 = vadd.f32 %v2799, %v3052
  %3054 = vmatmul.f32.gmra.mxu0 %v1260
  %v3055 = vpop.f32.mrf.mxu0
  %v3056 = vadd.f32 %v2802, %v3055
  %3057 = vmatmul.f32.gmra.mxu0 %v1263
  %v3058 = vpop.f32.mrf.mxu0
  %v3059 = vadd.f32 %v2805, %v3058
  %3060 = vmatmul.f32.gmra.mxu0 %v1266
  %v3061 = vpop.f32.mrf.mxu0
  %v3062 = vadd.f32 %v2808, %v3061
  %3063 = vmatmul.f32.gmra.mxu0 %v1269
  %v3064 = vpop.f32.mrf.mxu0
  %v3065 = vadd.f32 %v2811, %v3064
  %3066 = vmatmul.f32.gmra.mxu0 %v1272
  %v3067 = vpop.f32.mrf.mxu0
  %v3068 = vadd.f32 %v2814, %v3067
  %3069 = vmatmul.f32.gmra.mxu0 %v1275
  %v3070 = vpop.f32.mrf.mxu0
  %v3071 = vadd.f32 %v2817, %v3070
  %3072 = vmatmul.f32.gmra.mxu0 %v1278
  %v3073 = vpop.f32.mrf.mxu0
  %v3074 = vadd.f32 %v2820, %v3073
  %3075 = vmatmul.f32.gmra.mxu0 %v1281
  %v3076 = vpop.f32.mrf.mxu0
  %v3077 = vadd.f32 %v2823, %v3076
  %3078 = vmatmul.f32.gmra.mxu0 %v1284
  %v3079 = vpop.f32.mrf.mxu0
  %v3080 = vadd.f32 %v2826, %v3079
  %3081 = vmatmul.f32.gmra.mxu0 %v1287
  %v3082 = vpop.f32.mrf.mxu0
  %v3083 = vadd.f32 %v2829, %v3082
  %3084 = vmatmul.f32.gmra.mxu0 %v1290
  %v3085 = vpop.f32.mrf.mxu0
  %v3086 = vadd.f32 %v2832, %v3085
  %3087 = vmatmul.f32.gmra.mxu0 %v1293
  %v3088 = vpop.f32.mrf.mxu0
  %v3089 = vadd.f32 %v2835, %v3088
  %3090 = vmatmul.f32.gmra.mxu0 %v1296
  %v3091 = vpop.f32.mrf.mxu0
  %v3092 = vadd.f32 %v2838, %v3091
  %3093 = vmatmul.f32.gmra.mxu0 %v1299
  %v3094 = vpop.f32.mrf.mxu0
  %v3095 = vadd.f32 %v2841, %v3094
  %3096 = vmatmul.f32.gmra.mxu0 %v1302
  %v3097 = vpop.f32.mrf.mxu0
  %v3098 = vadd.f32 %v2844, %v3097
  %3099 = vmatmul.f32.gmra.mxu0 %v1305
  %v3100 = vpop.f32.mrf.mxu0
  %v3101 = vadd.f32 %v2847, %v3100
  %3102 = vmatmul.f32.gmra.mxu0 %v1308
  %v3103 = vpop.f32.mrf.mxu0
  %v3104 = vadd.f32 %v2850, %v3103
  %3105 = vmatmul.f32.gmra.mxu0 %v1311
  %v3106 = vpop.f32.mrf.mxu0
  %v3107 = vadd.f32 %v2853, %v3106
  %3108 = vmatmul.f32.gmra.mxu0 %v1314
  %v3109 = vpop.f32.mrf.mxu0
  %v3110 = vadd.f32 %v2856, %v3109
  %3111 = vmatmul.f32.gmra.mxu0 %v1317
  %v3112 = vpop.f32.mrf.mxu0
  %v3113 = vadd.f32 %v2859, %v3112
  %3114 = vmatmul.f32.gmra.mxu0 %v1320
  %v3115 = vpop.f32.mrf.mxu0
  %v3116 = vadd.f32 %v2862, %v3115
  %3117 = vmatmul.f32.gmra.mxu0 %v1323
  %v3118 = vpop.f32.mrf.mxu0
  %v3119 = vadd.f32 %v2865, %v3118
  %3120 = vmatmul.f32.gmra.mxu0 %v1326
  %v3121 = vpop.f32.mrf.mxu0
  %v3122 = vadd.f32 %v2868, %v3121
  %3123 = vmatmul.f32.gmra.mxu0 %v1329
  %v3124 = vpop.f32.mrf.mxu0
  %v3125 = vadd.f32 %v2871, %v3124
  %3126 = vmatmul.f32.gmra.mxu0 %v1332
  %v3127 = vpop.f32.mrf.mxu0
  %v3128 = vadd.f32 %v2874, %v3127
  %3129 = vmatmul.f32.gmra.mxu0 %v1335
  %v3130 = vpop.f32.mrf.mxu0
  %v3131 = vadd.f32 %v2877, %v3130
  %3132 = vmatmul.f32.gmra.mxu0 %v1338
  %v3133 = vpop.f32.mrf.mxu0
  %v3134 = vadd.f32 %v2880, %v3133
  %3135 = vmatmul.f32.gmra.mxu0 %v1341
  %v3136 = vpop.f32.mrf.mxu0
  %v3137 = vadd.f32 %v2883, %v3136
  %3138 = vmatmul.f32.gmra.mxu0 %v1344
  %v3139 = vpop.f32.mrf.mxu0
  %v3140 = vadd.f32 %v2886, %v3139
  %3141 = vmatmul.f32.gmra.mxu0 %v1347
  %v3142 = vpop.f32.mrf.mxu0
  %v3143 = vadd.f32 %v2889, %v3142
  %3144 = vmatmul.f32.gmra.mxu0 %v1350
  %v3145 = vpop.f32.mrf.mxu0
  %v3146 = vadd.f32 %v2892, %v3145
  %3147 = vmatmul.f32.gmra.mxu0 %v1353
  %v3148 = vpop.f32.mrf.mxu0
  %v3149 = vadd.f32 %v2895, %v3148
  %3150 = vmatmul.f32.gmra.mxu0 %v1356
  %v3151 = vpop.f32.mrf.mxu0
  %v3152 = vadd.f32 %v2898, %v3151
  %3153 = vmatmul.f32.gmra.mxu0 %v1359
  %v3154 = vpop.f32.mrf.mxu0
  %v3155 = vadd.f32 %v2901, %v3154
  %3156 = vmatmul.f32.gmra.mxu0 %v1362
  %v3157 = vpop.f32.mrf.mxu0
  %v3158 = vadd.f32 %v2904, %v3157
  %3159 = vmatmul.f32.gmra.mxu0 %v1365
  %v3160 = vpop.f32.mrf.mxu0
  %v3161 = vadd.f32 %v2907, %v3160
  %3162 = vmatmul.f32.gmra.mxu0 %v1368
  %v3163 = vpop.f32.mrf.mxu0
  %v3164 = vadd.f32 %v2910, %v3163
  %3165 = vmatmul.f32.gmra.mxu0 %v1371
  %v3166 = vpop.f32.mrf.mxu0
  %v3167 = vadd.f32 %v2913, %v3166
  %3168 = vmatmul.f32.gmra.mxu0 %v1374
  %v3169 = vpop.f32.mrf.mxu0
  %v3170 = vadd.f32 %v2916, %v3169
  %3171 = vmatmul.f32.gmra.mxu0 %v1377
  %v3172 = vpop.f32.mrf.mxu0
  %v3173 = vadd.f32 %v2919, %v3172
  %3174 = vmatmul.f32.gmra.mxu0 %v1380
  %v3175 = vpop.f32.mrf.mxu0
  %v3176 = vadd.f32 %v2922, %v3175
  %3177 = vmatmul.f32.gmra.mxu0 %v1383
  %v3178 = vpop.f32.mrf.mxu0
  %v3179 = vadd.f32 %v2925, %v3178
  %3180 = vmatmul.f32.gmra.mxu0 %v1386
  %v3181 = vpop.f32.mrf.mxu0
  %v3182 = vadd.f32 %v2928, %v3181
  %3183 = vmatmul.f32.gmra.mxu0 %v1389
  %v3184 = vpop.f32.mrf.mxu0
  %v3185 = vadd.f32 %v2931, %v3184
  %3186 = vmatmul.f32.gmra.mxu0 %v1392
  %v3187 = vpop.f32.mrf.mxu0
  %v3188 = vadd.f32 %v2934, %v3187
  %3189 = vmatmul.f32.gmra.mxu0 %v1395
  %v3190 = vpop.f32.mrf.mxu0
  %v3191 = vadd.f32 %v2937, %v3190
  %3192 = vmatmul.f32.gmra.mxu0 %v1398
  %v3193 = vpop.f32.mrf.mxu0
  %v3194 = vadd.f32 %v2940, %v3193
  %3195 = vmatmul.f32.gmra.mxu0 %v1401
  %v3196 = vpop.f32.mrf.mxu0
  %v3197 = vadd.f32 %v2943, %v3196
  %3198 = vmatmul.f32.gmra.mxu0 %v1404
  %v3199 = vpop.f32.mrf.mxu0
  %v3200 = vadd.f32 %v2946, %v3199
  %3201 = vmatmul.f32.gmra.mxu0 %v1407
  %v3202 = vpop.f32.mrf.mxu0
  %v3203 = vadd.f32 %v2949, %v3202
  %3204 = vmatmul.f32.gmra.mxu0 %v1410
  %v3205 = vpop.f32.mrf.mxu0
  %v3206 = vadd.f32 %v2952, %v3205
  %3207 = vmatmul.f32.gmra.mxu0 %v1413
  %v3208 = vpop.f32.mrf.mxu0
  %v3209 = vadd.f32 %v2955, %v3208
  %3210 = vmatmul.f32.gmra.mxu0 %v1416
  %v3211 = vpop.f32.mrf.mxu0
  %v3212 = vadd.f32 %v2958, %v3211
  %3213 = vmatmul.f32.gmra.mxu0 %v1419
  %v3214 = vpop.f32.mrf.mxu0
  %v3215 = vadd.f32 %v2961, %v3214
  %3216 = vmatmul.f32.gmra.mxu0 %v1422
  %v3217 = vpop.f32.mrf.mxu0
  %v3218 = vadd.f32 %v2964, %v3217
  %3219 = vmatmul.f32.gmra.mxu0 %v1425
  %v3220 = vpop.f32.mrf.mxu0
  %v3221 = vadd.f32 %v2967, %v3220
  %3222 = vmatmul.f32.gmra.mxu0 %v1428
  %v3223 = vpop.f32.mrf.mxu0
  %v3224 = vadd.f32 %v2970, %v3223
  %3225 = vmatmul.f32.gmra.mxu0 %v1431
  %v3226 = vpop.f32.mrf.mxu0
  %v3227 = vadd.f32 %v2973, %v3226
  %3228 = vmatmul.f32.gmra.mxu0 %v1434
  %v3229 = vpop.f32.mrf.mxu0
  %v3230 = vadd.f32 %v2976, %v3229
  %3231 = vmatmul.f32.gmra.mxu0 %v1437
  %v3232 = vpop.f32.mrf.mxu0
  %v3233 = vadd.f32 %v2979, %v3232
  %3234 = vmatmul.f32.gmra.mxu0 %v1440
  %v3235 = vpop.f32.mrf.mxu0
  %v3236 = vadd.f32 %v2982, %v3235
  %3237 = vmatmul.f32.gmra.mxu0 %v1443
  %v3238 = vpop.f32.mrf.mxu0
  %v3239 = vadd.f32 %v2985, %v3238
  %3240 = vmatmul.f32.gmra.mxu0 %v1446
  %v3241 = vpop.f32.mrf.mxu0
  %v3242 = vadd.f32 %v2988, %v3241
  %3243 = vmatmul.f32.gmra.mxu0 %v1449
  %v3244 = vpop.f32.mrf.mxu0
  %v3245 = vadd.f32 %v2991, %v3244
  %3246 = vmatmul.f32.gmra.mxu0 %v1452
  %v3247 = vpop.f32.mrf.mxu0
  %v3248 = vadd.f32 %v2994, %v3247
  %3249 = vmatmul.f32.gmra.mxu0 %v1455
  %v3250 = vpop.f32.mrf.mxu0
  %v3251 = vadd.f32 %v2997, %v3250
  %3252 = vmatmul.f32.gmra.mxu0 %v1458
  %v3253 = vpop.f32.mrf.mxu0
  %v3254 = vadd.f32 %v3000, %v3253
  %3255 = vmatmul.f32.gmra.mxu0 %v1461
  %v3256 = vpop.f32.mrf.mxu0
  %v3257 = vadd.f32 %v3003, %v3256
  %3258 = vmatmul.f32.gmra.mxu0 %v1464
  %v3259 = vpop.f32.mrf.mxu0
  %v3260 = vadd.f32 %v3006, %v3259
  %3261 = vmatmul.f32.gmra.mxu0 %v1467
  %v3262 = vpop.f32.mrf.mxu0
  %v3263 = vadd.f32 %v3009, %v3262
  %3264 = vdwg.mxu0
  %v3269 = vrot.slane %v3029, 7
  %v3270 = vrot.slane %v3032, 7
  %v3271 = vsel %vm2162, %v3269, %v3270
  %v3272 = vrot.slane %v3035, 7
  %v3273 = vsel %vm2162, %v3270, %v3272
  %v3274 = vrot.slane %v3038, 7
  %v3275 = vsel %vm2162, %v3272, %v3274
  %vm3280 = vcmask 97281
  %3281 = vst.msk [vmem:[#allocation2 + $0x48] sm:$0xfe] %vm3280, %v3269
  %3282 = vst.msk [vmem:[#allocation2 + $0x60] sm:$0xff] %vm417, %v3271
  %3283 = vst.msk [vmem:[#allocation2 + $0x78] sm:$0xff] %vm417, %v3273
  %vm3284 = vcmask 91136
  %3285 = vst.msk [vmem:[#allocation2 + $0x90] sm:$0x3] %vm3284, %v3275
  %3289 = vrot.lane.b32.xlu0 %v3038, 12
  %v3290 = vpop.permute.xlu0 %3289
  %3291 = vrot.lane.b32.xlu0 %v3041, 12
  %v3292 = vpop.permute.xlu0 %3291
  %3293 = vrot.lane.b32.xlu0 %v3044, 12
  %v3294 = vpop.permute.xlu0 %3293
  %3295 = vrot.lane.b32.xlu0 %v3047, 12
  %v3296 = vpop.permute.xlu0 %3295
  %vm3301 = vcmask 195681
  %3302 = vst.msk [vmem:[#allocation2 + $0x48] sm:$0xfe] %vm3301, %v3290
  %3303 = vst.msk [vmem:[#allocation2 + $0x60] sm:$0xff] %vm2010, %v3292
  %3304 = vst.msk [vmem:[#allocation2 + $0x78] sm:$0xff] %vm2010, %v3294
  %vm3305 = vcmask 189536
  %3306 = vst.msk [vmem:[#allocation2 + $0x90] sm:$0x3] %vm3305, %v3296
  %v3310 = vrot.slane %v3047, 1
  %v3311 = vrot.slane %v3050, 1
  %v3312 = vsel %vm1990, %v3310, %v3311
  %v3313 = vrot.slane %v3053, 1
  %v3314 = vsel %vm1990, %v3311, %v3313
  %v3315 = vrot.slane %v3056, 1
  %v3316 = vsel %vm1990, %v3313, %v3315
  %3317 = vrot.lane.b32.xlu0 %v3312, 24
  %v3318 = vpop.permute.xlu0 %3317
  %3319 = vrot.lane.b32.xlu0 %v3314, 24
  %v3320 = vpop.permute.xlu0 %3319
  %3321 = vrot.lane.b32.xlu0 %v3316, 24
  %v3322 = vpop.permute.xlu0 %3321
  %3323 = vrot.lane.b32.xlu0 %v3315, 24
  %v3324 = vpop.permute.xlu0 %3323
  %vm3329 = vcmask 294081
  %3330 = vst.msk [vmem:[#allocation2 + $0x48] sm:$0xfe] %vm3329, %v3318
  %3331 = vst.msk [vmem:[#allocation2 + $0x60] sm:$0xff] %vm2039, %v3320
  %3332 = vst.msk [vmem:[#allocation2 + $0x78] sm:$0xff] %vm2039, %v3322
  %vm3333 = vcmask 287936
  %3334 = vst.msk [vmem:[#allocation2 + $0x90] sm:$0x3] %vm3333, %v3324
  %v3338 = vrot.slane %v3056, 2
  %v3339 = vrot.slane %v3059, 2
  %v3340 = vsel %vm2019, %v3338, %v3339
  %v3341 = vrot.slane %v3062, 2
  %v3342 = vsel %vm2019, %v3339, %v3341
  %v3343 = vrot.slane %v3065, 2
  %v3344 = vsel %vm2019, %v3341, %v3343
  %3345 = vrot.lane.b32.xlu0 %v3340, 36
  %v3346 = vpop.permute.xlu0 %3345
  %3347 = vrot.lane.b32.xlu0 %v3342, 36
  %v3348 = vpop.permute.xlu0 %3347
  %3349 = vrot.lane.b32.xlu0 %v3344, 36
  %v3350 = vpop.permute.xlu0 %3349
  %3351 = vrot.lane.b32.xlu0 %v3343, 36
  %v3352 = vpop.permute.xlu0 %3351
  %vm3357 = vcmask 392481
  %3358 = vst.msk [vmem:[#allocation2 + $0x48] sm:$0xfe] %vm3357, %v3346
  %3359 = vst.msk [vmem:[#allocation2 + $0x60] sm:$0xff] %vm2068, %v3348
  %3360 = vst.msk [vmem:[#allocation2 + $0x78] sm:$0xff] %vm2068, %v3350
  %vm3361 = vcmask 386336
  %3362 = vst.msk [vmem:[#allocation2 + $0x90] sm:$0x3] %vm3361, %v3352
  %v3366 = vrot.slane %v3065, 3
  %v3367 = vrot.slane %v3068, 3
  %v3368 = vsel %vm2048, %v3366, %v3367
  %v3369 = vrot.slane %v3071, 3
  %v3370 = vsel %vm2048, %v3367, %v3369
  %v3371 = vrot.slane %v3074, 3
  %v3372 = vsel %vm2048, %v3369, %v3371
  %3373 = vrot.lane.b32.xlu0 %v3368, 48
  %v3374 = vpop.permute.xlu0 %3373
  %3375 = vrot.lane.b32.xlu0 %v3370, 48
  %v3376 = vpop.permute.xlu0 %3375
  %3377 = vrot.lane.b32.xlu0 %v3372, 48
  %v3378 = vpop.permute.xlu0 %3377
  %3379 = vrot.lane.b32.xlu0 %v3371, 48
  %v3380 = vpop.permute.xlu0 %3379
  %vm3385 = vcmask 490881
  %3386 = vst.msk [vmem:[#allocation2 + $0x48] sm:$0xfe] %vm3385, %v3374
  %3387 = vst.msk [vmem:[#allocation2 + $0x60] sm:$0xff] %vm2096, %v3376
  %3388 = vst.msk [vmem:[#allocation2 + $0x78] sm:$0xff] %vm2096, %v3378
  %vm3389 = vcmask 484736
  %3390 = vst.msk [vmem:[#allocation2 + $0x90] sm:$0x3] %vm3389, %v3380
  %v3394 = vrot.slane %v3074, 4
  %v3395 = vrot.slane %v3077, 4
  %v3396 = vsel %vm1469, %v3394, %v3395
  %v3397 = vrot.slane %v3080, 4
  %v3398 = vsel %vm1469, %v3395, %v3397
  %v3399 = vrot.slane %v3083, 4
  %v3400 = vsel %vm1469, %v3397, %v3399
  %3401 = vrot.lane.b32.xlu0 %v3396, 60
  %v3402 = vpop.permute.xlu0 %3401
  %3403 = vrot.lane.b32.xlu0 %v3398, 60
  %v3404 = vpop.permute.xlu0 %3403
  %3405 = vrot.lane.b32.xlu0 %v3400, 60
  %v3406 = vpop.permute.xlu0 %3405
  %3407 = vrot.lane.b32.xlu0 %v3399, 60
  %v3408 = vpop.permute.xlu0 %3407
  %vm3413 = vcmask 589281
  %3414 = vst.msk [vmem:[#allocation2 + $0x48] sm:$0xfe] %vm3413, %v3402
  %3415 = vst.msk [vmem:[#allocation2 + $0x60] sm:$0xff] %vm2124, %v3404
  %3416 = vst.msk [vmem:[#allocation2 + $0x78] sm:$0xff] %vm2124, %v3406
  %vm3417 = vcmask 583136
  %3418 = vst.msk [vmem:[#allocation2 + $0x90] sm:$0x3] %vm3417, %v3408
  %v3422 = vrot.slane %v3083, 5
  %v3423 = vrot.slane %v3086, 5
  %v3424 = vsel %vm247, %v3422, %v3423
  %v3425 = vrot.slane %v3089, 5
  %v3426 = vsel %vm247, %v3423, %v3425
  %v3427 = vrot.slane %v3092, 5
  %v3428 = vsel %vm247, %v3425, %v3427
  %3429 = vrot.lane.b32.xlu0 %v3424, 72
  %v3430 = vpop.permute.xlu0 %3429
  %3431 = vrot.lane.b32.xlu0 %v3426, 72
  %v3432 = vpop.permute.xlu0 %3431
  %3433 = vrot.lane.b32.xlu0 %v3428, 72
  %v3434 = vpop.permute.xlu0 %3433
  %3435 = vrot.lane.b32.xlu0 %v3427, 72
  %v3436 = vpop.permute.xlu0 %3435
  %vm3441 = vcmask 687681
  %3442 = vst.msk [vmem:[#allocation2 + $0x48] sm:$0xfe] %vm3441, %v3430
  %3443 = vst.msk [vmem:[#allocation2 + $0x60] sm:$0xff] %vm2153, %v3432
  %3444 = vst.msk [vmem:[#allocation2 + $0x78] sm:$0xff] %vm2153, %v3434
  %vm3445 = vcmask 681536
  %3446 = vst.msk [vmem:[#allocation2 + $0x90] sm:$0x3] %vm3445, %v3436
  %v3450 = vrot.slane %v3092, 6
  %v3451 = vrot.slane %v3095, 6
  %v3452 = vsel %vm2133, %v3450, %v3451
  %v3453 = vrot.slane %v3098, 6
  %v3454 = vsel %vm2133, %v3451, %v3453
  %v3455 = vrot.slane %v3101, 6
  %v3456 = vsel %vm2133, %v3453, %v3455
  %3457 = vrot.lane.b32.xlu0 %v3452, 84
  %v3458 = vpop.permute.xlu0 %3457
  %3459 = vrot.lane.b32.xlu0 %v3454, 84
  %v3460 = vpop.permute.xlu0 %3459
  %3461 = vrot.lane.b32.xlu0 %v3456, 84
  %v3462 = vpop.permute.xlu0 %3461
  %3463 = vrot.lane.b32.xlu0 %v3455, 84
  %v3464 = vpop.permute.xlu0 %3463
  %vm3469 = vcmask 786081
  %3470 = vst.msk [vmem:[#allocation2 + $0x48] sm:$0xfe] %vm3469, %v3458
  %3471 = vst.msk [vmem:[#allocation2 + $0x60] sm:$0xff] %vm2182, %v3460
  %3472 = vst.msk [vmem:[#allocation2 + $0x78] sm:$0xff] %vm2182, %v3462
  %vm3473 = vcmask 779936
  %3474 = vst.msk [vmem:[#allocation2 + $0x90] sm:$0x3] %vm3473, %v3464
  %v3479 = vrot.slane %v3104, 7
  %v3480 = vrot.slane %v3107, 7
  %v3481 = vsel %vm2162, %v3479, %v3480
  %v3482 = vrot.slane %v3110, 7
  %v3483 = vsel %vm2162, %v3480, %v3482
  %v3484 = vrot.slane %v3113, 7
  %v3485 = vsel %vm2162, %v3482, %v3484
  %3486 = vrot.lane.b32.xlu0 %v3479, 96
  %v3487 = vpop.permute.xlu0 %3486
  %3488 = vrot.lane.b32.xlu0 %v3481, 96
  %v3489 = vpop.permute.xlu0 %3488
  %3490 = vrot.lane.b32.xlu0 %v3483, 96
  %v3491 = vpop.permute.xlu0 %3490
  %3492 = vrot.lane.b32.xlu0 %v3485, 96
  %v3493 = vpop.permute.xlu0 %3492
  %vm3498 = vcmask 884481
  %3499 = vst.msk [vmem:[#allocation2 + $0x48] sm:$0xfe] %vm3498, %v3487
  %3500 = vst.msk [vmem:[#allocation2 + $0x60] sm:$0xff] %vm2204, %v3489
  %3501 = vst.msk [vmem:[#allocation2 + $0x78] sm:$0xff] %vm2204, %v3491
  %vm3502 = vcmask 878336
  %3503 = vst.msk [vmem:[#allocation2 + $0x90] sm:$0x3] %vm3502, %v3493
  %3507 = vrot.lane.b32.xlu0 %v3113, 108
  %v3508 = vpop.permute.xlu0 %3507
  %3509 = vrot.lane.b32.xlu0 %v3116, 108
  %v3510 = vpop.permute.xlu0 %3509
  %3511 = vrot.lane.b32.xlu0 %v3119, 108
  %v3512 = vpop.permute.xlu0 %3511
  %3513 = vrot.lane.b32.xlu0 %v3122, 108
  %v3514 = vpop.permute.xlu0 %3513
  %vm3519 = vcmask 982881
  %3520 = vst.msk [vmem:[#allocation2 + $0x48] sm:$0xfe] %vm3519, %v3508
  %3521 = vst.msk [vmem:[#allocation2 + $0x60] sm:$0xff] %vm2232, %v3510
  %3522 = vst.msk [vmem:[#allocation2 + $0x78] sm:$0xff] %vm2232, %v3512
  %vm3523 = vcmask 976736
  %3524 = vst.msk [vmem:[#allocation2 + $0x90] sm:$0x3] %vm3523, %v3514
  %v3528 = vrot.slane %v3122, 1
  %v3529 = vrot.slane %v3125, 1
  %v3530 = vsel %vm1990, %v3528, %v3529
  %v3531 = vrot.slane %v3128, 1
  %v3532 = vsel %vm1990, %v3529, %v3531
  %v3533 = vrot.slane %v3131, 1
  %v3534 = vsel %vm1990, %v3531, %v3533
  %3535 = vrot.lane.b32.xlu0 %v3530, 120
  %v3536 = vpop.permute.xlu0 %3535
  %3537 = vrot.lane.b32.xlu0 %v3532, 120
  %v3538 = vpop.permute.xlu0 %3537
  %3539 = vrot.lane.b32.xlu0 %v3534, 120
  %v3540 = vpop.permute.xlu0 %3539
  %3541 = vrot.lane.b32.xlu0 %v3533, 120
  %v3542 = vpop.permute.xlu0 %3541
  %vm3547 = vcmask 1048513
  %3548 = vst.msk [vmem:[#allocation2 + $0x48] sm:$0xfe] %vm3547, %v3536
  %vm3549 = vcmask 31745
  %3550 = vst.msk [vmem:[#allocation2 + $0x50] sm:$0xfe] %vm3549, %v3536
  %3551 = vst.msk [vmem:[#allocation2 + $0x60] sm:$0xff] %vm2260, %v3538
  %3552 = vst.msk [vmem:[#allocation2 + $0x68] sm:$0xff] %vm2262, %v3538
  %3553 = vst.msk [vmem:[#allocation2 + $0x78] sm:$0xff] %vm2260, %v3540
  %3554 = vst.msk [vmem:[#allocation2 + $0x80] sm:$0xff] %vm2262, %v3540
  %vm3555 = vcmask 1042368
  %3556 = vst.msk [vmem:[#allocation2 + $0x90] sm:$0x3] %vm3555, %v3542
  %vm3557 = vcmask 25600
  %3558 = vst.msk [vmem:[#allocation2 + $0x98] sm:$0x3] %vm3557, %v3542
  %v3562 = vrot.slane %v3131, 2
  %v3563 = vrot.slane %v3134, 2
  %v3564 = vsel %vm2019, %v3562, %v3563
  %v3565 = vrot.slane %v3137, 2
  %v3566 = vsel %vm2019, %v3563, %v3565
  %v3567 = vrot.slane %v3140, 2
  %v3568 = vsel %vm2019, %v3565, %v3567
  %3569 = vrot.lane.b32.xlu0 %v3564, 4
  %v3570 = vpop.permute.xlu0 %3569
  %3571 = vrot.lane.b32.xlu0 %v3566, 4
  %v3572 = vpop.permute.xlu0 %3571
  %3573 = vrot.lane.b32.xlu0 %v3568, 4
  %v3574 = vpop.permute.xlu0 %3573
  %3575 = vrot.lane.b32.xlu0 %v3567, 4
  %v3576 = vpop.permute.xlu0 %3575
  %vm3581 = vcmask 130081
  %3582 = vst.msk [vmem:[#allocation2 + $0x50] sm:$0xfe] %vm3581, %v3570
  %3583 = vst.msk [vmem:[#allocation2 + $0x68] sm:$0xff] %vm2294, %v3572
  %3584 = vst.msk [vmem:[#allocation2 + $0x80] sm:$0xff] %vm2294, %v3574
  %vm3585 = vcmask 123936
  %3586 = vst.msk [vmem:[#allocation2 + $0x98] sm:$0x3] %vm3585, %v3576
  %v3590 = vrot.slane %v3140, 3
  %v3591 = vrot.slane %v3143, 3
  %v3592 = vsel %vm2048, %v3590, %v3591
  %v3593 = vrot.slane %v3146, 3
  %v3594 = vsel %vm2048, %v3591, %v3593
  %v3595 = vrot.slane %v3149, 3
  %v3596 = vsel %vm2048, %v3593, %v3595
  %3597 = vrot.lane.b32.xlu0 %v3592, 16
  %v3598 = vpop.permute.xlu0 %3597
  %3599 = vrot.lane.b32.xlu0 %v3594, 16
  %v3600 = vpop.permute.xlu0 %3599
  %3601 = vrot.lane.b32.xlu0 %v3596, 16
  %v3602 = vpop.permute.xlu0 %3601
  %3603 = vrot.lane.b32.xlu0 %v3595, 16
  %v3604 = vpop.permute.xlu0 %3603
  %vm3609 = vcmask 228481
  %3610 = vst.msk [vmem:[#allocation2 + $0x50] sm:$0xfe] %vm3609, %v3598
  %3611 = vst.msk [vmem:[#allocation2 + $0x68] sm:$0xff] %vm2322, %v3600
  %3612 = vst.msk [vmem:[#allocation2 + $0x80] sm:$0xff] %vm2322, %v3602
  %vm3613 = vcmask 222336
  %3614 = vst.msk [vmem:[#allocation2 + $0x98] sm:$0x3] %vm3613, %v3604
  %v3618 = vrot.slane %v3149, 4
  %v3619 = vrot.slane %v3152, 4
  %v3620 = vsel %vm1469, %v3618, %v3619
  %v3621 = vrot.slane %v3155, 4
  %v3622 = vsel %vm1469, %v3619, %v3621
  %v3623 = vrot.slane %v3158, 4
  %v3624 = vsel %vm1469, %v3621, %v3623
  %3625 = vrot.lane.b32.xlu0 %v3620, 28
  %v3626 = vpop.permute.xlu0 %3625
  %3627 = vrot.lane.b32.xlu0 %v3622, 28
  %v3628 = vpop.permute.xlu0 %3627
  %3629 = vrot.lane.b32.xlu0 %v3624, 28
  %v3630 = vpop.permute.xlu0 %3629
  %3631 = vrot.lane.b32.xlu0 %v3623, 28
  %v3632 = vpop.permute.xlu0 %3631
  %vm3637 = vcmask 326881
  %3638 = vst.msk [vmem:[#allocation2 + $0x50] sm:$0xfe] %vm3637, %v3626
  %3639 = vst.msk [vmem:[#allocation2 + $0x68] sm:$0xff] %vm2350, %v3628
  %3640 = vst.msk [vmem:[#allocation2 + $0x80] sm:$0xff] %vm2350, %v3630
  %vm3641 = vcmask 320736
  %3642 = vst.msk [vmem:[#allocation2 + $0x98] sm:$0x3] %vm3641, %v3632
  %v3646 = vrot.slane %v3158, 5
  %v3647 = vrot.slane %v3161, 5
  %v3648 = vsel %vm247, %v3646, %v3647
  %v3649 = vrot.slane %v3164, 5
  %v3650 = vsel %vm247, %v3647, %v3649
  %v3651 = vrot.slane %v3167, 5
  %v3652 = vsel %vm247, %v3649, %v3651
  %3653 = vrot.lane.b32.xlu0 %v3648, 40
  %v3654 = vpop.permute.xlu0 %3653
  %3655 = vrot.lane.b32.xlu0 %v3650, 40
  %v3656 = vpop.permute.xlu0 %3655
  %3657 = vrot.lane.b32.xlu0 %v3652, 40
  %v3658 = vpop.permute.xlu0 %3657
  %3659 = vrot.lane.b32.xlu0 %v3651, 40
  %v3660 = vpop.permute.xlu0 %3659
  %vm3665 = vcmask 425281
  %3666 = vst.msk [vmem:[#allocation2 + $0x50] sm:$0xfe] %vm3665, %v3654
  %3667 = vst.msk [vmem:[#allocation2 + $0x68] sm:$0xff] %vm2378, %v3656
  %3668 = vst.msk [vmem:[#allocation2 + $0x80] sm:$0xff] %vm2378, %v3658
  %vm3669 = vcmask 419136
  %3670 = vst.msk [vmem:[#allocation2 + $0x98] sm:$0x3] %vm3669, %v3660
  %v3674 = vrot.slane %v3167, 6
  %v3675 = vrot.slane %v3170, 6
  %v3676 = vsel %vm2133, %v3674, %v3675
  %v3677 = vrot.slane %v3173, 6
  %v3678 = vsel %vm2133, %v3675, %v3677
  %v3679 = vrot.slane %v3176, 6
  %v3680 = vsel %vm2133, %v3677, %v3679
  %3681 = vrot.lane.b32.xlu0 %v3676, 52
  %v3682 = vpop.permute.xlu0 %3681
  %3683 = vrot.lane.b32.xlu0 %v3678, 52
  %v3684 = vpop.permute.xlu0 %3683
  %3685 = vrot.lane.b32.xlu0 %v3680, 52
  %v3686 = vpop.permute.xlu0 %3685
  %3687 = vrot.lane.b32.xlu0 %v3679, 52
  %v3688 = vpop.permute.xlu0 %3687
  %vm3693 = vcmask 523681
  %3694 = vst.msk [vmem:[#allocation2 + $0x50] sm:$0xfe] %vm3693, %v3682
  %3695 = vst.msk [vmem:[#allocation2 + $0x68] sm:$0xff] %vm2406, %v3684
  %3696 = vst.msk [vmem:[#allocation2 + $0x80] sm:$0xff] %vm2406, %v3686
  %vm3697 = vcmask 517536
  %3698 = vst.msk [vmem:[#allocation2 + $0x98] sm:$0x3] %vm3697, %v3688
  %v3703 = vrot.slane %v3179, 7
  %v3704 = vrot.slane %v3182, 7
  %v3705 = vsel %vm2162, %v3703, %v3704
  %v3706 = vrot.slane %v3185, 7
  %v3707 = vsel %vm2162, %v3704, %v3706
  %v3708 = vrot.slane %v3188, 7
  %v3709 = vsel %vm2162, %v3706, %v3708
  %3710 = vrot.lane.b32.xlu0 %v3703, 64
  %v3711 = vpop.permute.xlu0 %3710
  %3712 = vrot.lane.b32.xlu0 %v3705, 64
  %v3713 = vpop.permute.xlu0 %3712
  %3714 = vrot.lane.b32.xlu0 %v3707, 64
  %v3715 = vpop.permute.xlu0 %3714
  %3716 = vrot.lane.b32.xlu0 %v3709, 64
  %v3717 = vpop.permute.xlu0 %3716
  %vm3722 = vcmask 622081
  %3723 = vst.msk [vmem:[#allocation2 + $0x50] sm:$0xfe] %vm3722, %v3711
  %3724 = vst.msk [vmem:[#allocation2 + $0x68] sm:$0xff] %vm2428, %v3713
  %3725 = vst.msk [vmem:[#allocation2 + $0x80] sm:$0xff] %vm2428, %v3715
  %vm3726 = vcmask 615936
  %3727 = vst.msk [vmem:[#allocation2 + $0x98] sm:$0x3] %vm3726, %v3717
  %3731 = vrot.lane.b32.xlu0 %v3188, 76
  %v3732 = vpop.permute.xlu0 %3731
  %3733 = vrot.lane.b32.xlu0 %v3191, 76
  %v3734 = vpop.permute.xlu0 %3733
  %3735 = vrot.lane.b32.xlu0 %v3194, 76
  %v3736 = vpop.permute.xlu0 %3735
  %3737 = vrot.lane.b32.xlu0 %v3197, 76
  %v3738 = vpop.permute.xlu0 %3737
  %vm3743 = vcmask 720481
  %3744 = vst.msk [vmem:[#allocation2 + $0x50] sm:$0xfe] %vm3743, %v3732
  %3745 = vst.msk [vmem:[#allocation2 + $0x68] sm:$0xff] %vm2456, %v3734
  %3746 = vst.msk [vmem:[#allocation2 + $0x80] sm:$0xff] %vm2456, %v3736
  %vm3747 = vcmask 714336
  %3748 = vst.msk [vmem:[#allocation2 + $0x98] sm:$0x3] %vm3747, %v3738
  %v3752 = vrot.slane %v3197, 1
  %v3753 = vrot.slane %v3200, 1
  %v3754 = vsel %vm1990, %v3752, %v3753
  %v3755 = vrot.slane %v3203, 1
  %v3756 = vsel %vm1990, %v3753, %v3755
  %v3757 = vrot.slane %v3206, 1
  %v3758 = vsel %vm1990, %v3755, %v3757
  %3759 = vrot.lane.b32.xlu0 %v3754, 88
  %v3760 = vpop.permute.xlu0 %3759
  %3761 = vrot.lane.b32.xlu0 %v3756, 88
  %v3762 = vpop.permute.xlu0 %3761
  %3763 = vrot.lane.b32.xlu0 %v3758, 88
  %v3764 = vpop.permute.xlu0 %3763
  %3765 = vrot.lane.b32.xlu0 %v3757, 88
  %v3766 = vpop.permute.xlu0 %3765
  %vm3771 = vcmask 818881
  %3772 = vst.msk [vmem:[#allocation2 + $0x50] sm:$0xfe] %vm3771, %v3760
  %3773 = vst.msk [vmem:[#allocation2 + $0x68] sm:$0xff] %vm2484, %v3762
  %3774 = vst.msk [vmem:[#allocation2 + $0x80] sm:$0xff] %vm2484, %v3764
  %vm3775 = vcmask 812736
  %3776 = vst.msk [vmem:[#allocation2 + $0x98] sm:$0x3] %vm3775, %v3766
  %v3780 = vrot.slane %v3206, 2
  %v3781 = vrot.slane %v3209, 2
  %v3782 = vsel %vm2019, %v3780, %v3781
  %v3783 = vrot.slane %v3212, 2
  %v3784 = vsel %vm2019, %v3781, %v3783
  %v3785 = vrot.slane %v3215, 2
  %v3786 = vsel %vm2019, %v3783, %v3785
  %3787 = vrot.lane.b32.xlu0 %v3782, 100
  %v3788 = vpop.permute.xlu0 %3787
  %3789 = vrot.lane.b32.xlu0 %v3784, 100
  %v3790 = vpop.permute.xlu0 %3789
  %3791 = vrot.lane.b32.xlu0 %v3786, 100
  %v3792 = vpop.permute.xlu0 %3791
  %3793 = vrot.lane.b32.xlu0 %v3785, 100
  %v3794 = vpop.permute.xlu0 %3793
  %vm3799 = vcmask 917281
  %3800 = vst.msk [vmem:[#allocation2 + $0x50] sm:$0xfe] %vm3799, %v3788
  %3801 = vst.msk [vmem:[#allocation2 + $0x68] sm:$0xff] %vm2512, %v3790
  %3802 = vst.msk [vmem:[#allocation2 + $0x80] sm:$0xff] %vm2512, %v3792
  %vm3803 = vcmask 911136
  %3804 = vst.msk [vmem:[#allocation2 + $0x98] sm:$0x3] %vm3803, %v3794
  %v3808 = vrot.slane %v3215, 3
  %v3809 = vrot.slane %v3218, 3
  %v3810 = vsel %vm2048, %v3808, %v3809
  %v3811 = vrot.slane %v3221, 3
  %v3812 = vsel %vm2048, %v3809, %v3811
  %v3813 = vrot.slane %v3224, 3
  %v3814 = vsel %vm2048, %v3811, %v3813
  %3815 = vrot.lane.b32.xlu0 %v3810, 112
  %v3816 = vpop.permute.xlu0 %3815
  %3817 = vrot.lane.b32.xlu0 %v3812, 112
  %v3818 = vpop.permute.xlu0 %3817
  %3819 = vrot.lane.b32.xlu0 %v3814, 112
  %v3820 = vpop.permute.xlu0 %3819
  %3821 = vrot.lane.b32.xlu0 %v3813, 112
  %v3822 = vpop.permute.xlu0 %3821
  %vm3827 = vcmask 1015681
  %3828 = vst.msk [vmem:[#allocation2 + $0x50] sm:$0xfe] %vm3827, %v3816
  %3829 = vst.msk [vmem:[#allocation2 + $0x68] sm:$0xff] %vm2540, %v3818
  %3830 = vst.msk [vmem:[#allocation2 + $0x80] sm:$0xff] %vm2540, %v3820
  %vm3831 = vcmask 1009536
  %3832 = vst.msk [vmem:[#allocation2 + $0x98] sm:$0x3] %vm3831, %v3822
  %v3836 = vrot.slane %v3224, 4
  %v3837 = vrot.slane %v3227, 4
  %v3838 = vsel %vm1469, %v3836, %v3837
  %v3839 = vrot.slane %v3230, 4
  %v3840 = vsel %vm1469, %v3837, %v3839
  %v3841 = vrot.slane %v3233, 4
  %v3842 = vsel %vm1469, %v3839, %v3841
  %3843 = vrot.lane.b32.xlu0 %v3838, 124
  %v3844 = vpop.permute.xlu0 %3843
  %3845 = vrot.lane.b32.xlu0 %v3840, 124
  %v3846 = vpop.permute.xlu0 %3845
  %3847 = vrot.lane.b32.xlu0 %v3842, 124
  %v3848 = vpop.permute.xlu0 %3847
  %3849 = vrot.lane.b32.xlu0 %v3841, 124
  %v3850 = vpop.permute.xlu0 %3849
  %vm3855 = vcmask 1048545
  %3856 = vst.msk [vmem:[#allocation2 + $0x50] sm:$0xfe] %vm3855, %v3844
  %vm3857 = vcmask 64513
  %3858 = vst.msk [vmem:[#allocation2 + $0x58] sm:$0xfe] %vm3857, %v3844
  %3859 = vst.msk [vmem:[#allocation2 + $0x68] sm:$0xff] %vm2568, %v3846
  %3860 = vst.msk [vmem:[#allocation2 + $0x70] sm:$0xff] %vm2570, %v3846
  %3861 = vst.msk [vmem:[#allocation2 + $0x80] sm:$0xff] %vm2568, %v3848
  %3862 = vst.msk [vmem:[#allocation2 + $0x88] sm:$0xff] %vm2570, %v3848
  %vm3863 = vcmask 1042400
  %3864 = vst.msk [vmem:[#allocation2 + $0x98] sm:$0x3] %vm3863, %v3850
  %vm3865 = vcmask 58368
  %3866 = vst.msk [vmem:[#allocation2 + $0xa0] sm:$0x3] %vm3865, %v3850
  %v3870 = vrot.slane %v3233, 5
  %v3871 = vrot.slane %v3236, 5
  %v3872 = vsel %vm247, %v3870, %v3871
  %v3873 = vrot.slane %v3239, 5
  %v3874 = vsel %vm247, %v3871, %v3873
  %v3875 = vrot.slane %v3242, 5
  %v3876 = vsel %vm247, %v3873, %v3875
  %3877 = vrot.lane.b32.xlu0 %v3872, 8
  %v3878 = vpop.permute.xlu0 %3877
  %3879 = vrot.lane.b32.xlu0 %v3874, 8
  %v3880 = vpop.permute.xlu0 %3879
  %3881 = vrot.lane.b32.xlu0 %v3876, 8
  %v3882 = vpop.permute.xlu0 %3881
  %3883 = vrot.lane.b32.xlu0 %v3875, 8
  %v3884 = vpop.permute.xlu0 %3883
  %vm3889 = vcmask 162881
  %3890 = vst.msk [vmem:[#allocation2 + $0x58] sm:$0xfe] %vm3889, %v3878
  %3891 = vst.msk [vmem:[#allocation2 + $0x70] sm:$0xff] %vm2602, %v3880
  %3892 = vst.msk [vmem:[#allocation2 + $0x88] sm:$0xff] %vm2602, %v3882
  %vm3893 = vcmask 156736
  %3894 = vst.msk [vmem:[#allocation2 + $0xa0] sm:$0x3] %vm3893, %v3884
  %v3898 = vrot.slane %v3242, 6
  %v3899 = vrot.slane %v3245, 6
  %v3900 = vsel %vm2133, %v3898, %v3899
  %v3901 = vrot.slane %v3248, 6
  %v3902 = vsel %vm2133, %v3899, %v3901
  %v3903 = vrot.slane %v3251, 6
  %v3904 = vsel %vm2133, %v3901, %v3903
  %3905 = vrot.lane.b32.xlu0 %v3900, 20
  %v3906 = vpop.permute.xlu0 %3905
  %3907 = vrot.lane.b32.xlu0 %v3902, 20
  %v3908 = vpop.permute.xlu0 %3907
  %3909 = vrot.lane.b32.xlu0 %v3904, 20
  %v3910 = vpop.permute.xlu0 %3909
  %3911 = vrot.lane.b32.xlu0 %v3903, 20
  %v3912 = vpop.permute.xlu0 %3911
  %vm3917 = vcmask 261281
  %3918 = vst.msk [vmem:[#allocation2 + $0x58] sm:$0xfe] %vm3917, %v3906
  %3919 = vst.msk [vmem:[#allocation2 + $0x70] sm:$0xff] %vm2630, %v3908
  %3920 = vst.msk [vmem:[#allocation2 + $0x88] sm:$0xff] %vm2630, %v3910
  %vm3921 = vcmask 255136
  %3922 = vst.msk [vmem:[#allocation2 + $0xa0] sm:$0x3] %vm3921, %v3912
  %v3927 = vrot.slane %v3254, 7
  %v3928 = vrot.slane %v3257, 7
  %v3929 = vsel %vm2162, %v3927, %v3928
  %v3930 = vrot.slane %v3260, 7
  %v3931 = vsel %vm2162, %v3928, %v3930
  %v3932 = vrot.slane %v3263, 7
  %v3933 = vsel %vm2162, %v3930, %v3932
  %3934 = vrot.lane.b32.xlu0 %v3927, 32
  %v3935 = vpop.permute.xlu0 %3934
  %3936 = vrot.lane.b32.xlu0 %v3929, 32
  %v3937 = vpop.permute.xlu0 %3936
  %3938 = vrot.lane.b32.xlu0 %v3931, 32
  %v3939 = vpop.permute.xlu0 %3938
  %3940 = vrot.lane.b32.xlu0 %v3933, 32
  %v3941 = vpop.permute.xlu0 %3940
  %vm3946 = vcmask 359681
  %3947 = vst.msk [vmem:[#allocation2 + $0x58] sm:$0xfe] %vm3946, %v3935
  %3948 = vst.msk [vmem:[#allocation2 + $0x70] sm:$0xff] %vm2652, %v3937
  %3949 = vst.msk [vmem:[#allocation2 + $0x88] sm:$0xff] %vm2652, %v3939
  %vm3950 = vcmask 353536
  %3951 = vst.msk [vmem:[#allocation2 + $0xa0] sm:$0x3] %vm3950, %v3941
  %v3952 = vld [vmem:[#allocation2] sm:$0xff]
  %v3953 = vld [vmem:[#allocation2 + $0x8] sm:$0xff]
  %v3954 = vld [vmem:[#allocation2 + $0x10] sm:$0xff]
  %v3955 = vld [vmem:[#allocation2 + $0x18] sm:$0xff]
  %v3956 = vld [vmem:[#allocation2 + $0x20] sm:$0xff]
  %v3957 = vld [vmem:[#allocation2 + $0x28] sm:$0xff]
  %v3958 = vld [vmem:[#allocation2 + $0x30] sm:$0xff]
  %v3959 = vld [vmem:[#allocation2 + $0x38] sm:$0xff]
  %v3960 = vld [vmem:[#allocation2 + $0x40] sm:$0xff]
  %v3961 = vld [vmem:[#allocation2 + $0x48] sm:$0xff]
  %v3962 = vld [vmem:[#allocation2 + $0x50] sm:$0xff]
  %v3963 = vld [vmem:[#allocation2 + $0x58] sm:$0xff]
  %v3964 = vld [vmem:[#allocation2 + $0x60] sm:$0xff]
  %v3965 = vld [vmem:[#allocation2 + $0x68] sm:$0xff]
  %v3966 = vld [vmem:[#allocation2 + $0x70] sm:$0xff]
  %v3967 = vld [vmem:[#allocation2 + $0x78] sm:$0xff]
  %v3968 = vld [vmem:[#allocation2 + $0x80] sm:$0xff]
  %v3969 = vld [vmem:[#allocation2 + $0x88] sm:$0xff]
  %v3970 = vld [vmem:[#allocation2 + $0x90] sm:$0x3]
  %v3971 = vld [vmem:[#allocation2 + $0x98] sm:$0x3]
  %v3972 = vld [vmem:[#allocation2 + $0xa0] sm:$0x3]
  %v3973 = vld [vmem:[%s5] sm:$0xff]
  %v3974 = vld [vmem:[%s5 + $0x8] sm:$0xff]
  %v3975 = vld [vmem:[%s5 + $0x10] sm:$0xff]
  %v3976 = vld [vmem:[%s5 + $0x18] sm:$0xff]
  %v3977 = vld [vmem:[%s5 + $0x20] sm:$0xff]
  %v3978 = vld [vmem:[%s5 + $0x28] sm:$0xff]
  %v3979 = vld [vmem:[%s5 + $0x30] sm:$0xff]
  %v3980 = vld [vmem:[%s5 + $0x38] sm:$0xff]
  %v3981 = vld [vmem:[%s5 + $0x40] sm:$0xff]
  %v3982 = vld [vmem:[%s5 + $0x48] sm:$0xff]
  %v3983 = vld [vmem:[%s5 + $0x50] sm:$0xff]
  %v3984 = vld [vmem:[%s5 + $0x58] sm:$0xff]
  %v3985 = vld [vmem:[%s5 + $0x60] sm:$0xff]
  %v3986 = vld [vmem:[%s5 + $0x68] sm:$0xff]
  %v3987 = vld [vmem:[%s5 + $0x70] sm:$0xff]
  %v3988 = vld [vmem:[%s5 + $0x78] sm:$0xff]
  %v3989 = vld [vmem:[%s5 + $0x80] sm:$0xff]
  %v3990 = vld [vmem:[%s5 + $0x88] sm:$0xff]
  %v3991 = vld [vmem:[%s5 + $0x90] sm:$0xff]
  %v3992 = vld [vmem:[%s5 + $0x98] sm:$0xff]
  %v3993 = vld [vmem:[%s5 + $0xa0] sm:$0xff]
  %v3994 = vld [vmem:[%s5 + $0xa8] sm:$0xff]
  %v3995 = vld [vmem:[%s5 + $0xb0] sm:$0xff]
  %v3996 = vld [vmem:[%s5 + $0xb8] sm:$0xff]
  %v3997 = vld [vmem:[%s5 + $0xc0] sm:$0xff]
  %v3998 = vld [vmem:[%s5 + $0xc8] sm:$0xff]
  %v3999 = vld [vmem:[%s5 + $0xd0] sm:$0xff]
  %v4000 = vld [vmem:[%s5 + $0xd8] sm:$0xff]
  %v4001 = vld [vmem:[%s5 + $0xe0] sm:$0xff]
  %v4002 = vld [vmem:[%s5 + $0xe8] sm:$0xff]
  %v4003 = vld [vmem:[%s5 + $0xf0] sm:$0xff]
  %v4004 = vld [vmem:[%s5 + $0xf8] sm:$0xff]
  %v4005 = vld [vmem:[%s5 + $0x100] sm:$0xff]
  %v4006 = vld [vmem:[%s5 + $0x108] sm:$0xff]
  %v4007 = vld [vmem:[%s5 + $0x110] sm:$0xff]
  %v4008 = vld [vmem:[%s5 + $0x118] sm:$0xff]
  %v4009 = vld [vmem:[%s5 + $0x120] sm:$0xff]
  %v4010 = vld [vmem:[%s5 + $0x128] sm:$0xf]
  %vm4011 = vcmask 359424
  %v4013 = vsel %vm4011, %v3954, 0
  %v4016 = vsel %vm4011, %v3957, 0
  %v4019 = vsel %vm4011, %v3960, 0
  %v4022 = vsel %vm4011, %v3963, 0
  %v4025 = vsel %vm4011, %v3966, 0
  %v4028 = vsel %vm4011, %v3969, 0
  %v4031 = vsel %vm4011, %v3972, 0
  %v4034 = vsel %vm1469, %v4010, 0
  %4036 = vmatpush.msra.mxu0 %v3988
  %4037 = vmatpush.msra.mxu0 %v3987
  %4038 = vmatpush.msra.mxu0 %v3986
  %4039 = vmatpush.msra.mxu0 %v3985
  %4040 = vmatpush.msra.mxu0 %v3984
  %4041 = vmatpush.msra.mxu0 %v3983
  %4042 = vmatpush.msra.mxu0 %v3982
  %4043 = vmatpush.msra.mxu0 %v3981
  %4044 = vmatpush.msra.mxu0 %v3980
  %4045 = vmatpush.msra.mxu0 %v3979
  %4046 = vmatpush.msra.mxu0 %v3978
  %4047 = vmatpush.msra.mxu0 %v3977
  %4048 = vmatpush.msra.mxu0 %v3976
  %4049 = vmatpush.msra.mxu0 %v3975
  %4050 = vmatpush.msra.mxu0 %v3974
  %4051 = vmatpush.msra.mxu0 %v3973
  %4052 = vmatmul.f32.gmra.mxu0 %v3952
  %v4053 = vpop.f32.mrf.mxu0
  %v4054 = vadd.f32 0.0, %v4053
  %4055 = vmatmul.f32.gmra.mxu0 %v3955
  %v4056 = vpop.f32.mrf.mxu0
  %v4057 = vadd.f32 0.0, %v4056
  %4058 = vmatmul.f32.gmra.mxu0 %v3958
  %v4059 = vpop.f32.mrf.mxu0
  %v4060 = vadd.f32 0.0, %v4059
  %4061 = vmatmul.f32.gmra.mxu0 %v3961
  %v4062 = vpop.f32.mrf.mxu0
  %v4063 = vadd.f32 0.0, %v4062
  %4064 = vmatmul.f32.gmra.mxu0 %v3964
  %v4065 = vpop.f32.mrf.mxu0
  %v4066 = vadd.f32 0.0, %v4065
  %4067 = vmatmul.f32.gmra.mxu0 %v3967
  %v4068 = vpop.f32.mrf.mxu0
  %v4069 = vadd.f32 0.0, %v4068
  %4070 = vmatmul.f32.gmra.mxu0 %v3970
  %v4071 = vpop.f32.mrf.mxu0
  %v4072 = vadd.f32 0.0, %v4071
  %4073 = vdwg.mxu0
  %4074 = vmatpush.msra.mxu0 %v4004
  %4075 = vmatpush.msra.mxu0 %v4003
  %4076 = vmatpush.msra.mxu0 %v4002
  %4077 = vmatpush.msra.mxu0 %v4001
  %4078 = vmatpush.msra.mxu0 %v4000
  %4079 = vmatpush.msra.mxu0 %v3999
  %4080 = vmatpush.msra.mxu0 %v3998
  %4081 = vmatpush.msra.mxu0 %v3997
  %4082 = vmatpush.msra.mxu0 %v3996
  %4083 = vmatpush.msra.mxu0 %v3995
  %4084 = vmatpush.msra.mxu0 %v3994
  %4085 = vmatpush.msra.mxu0 %v3993
  %4086 = vmatpush.msra.mxu0 %v3992
  %4087 = vmatpush.msra.mxu0 %v3991
  %4088 = vmatpush.msra.mxu0 %v3990
  %4089 = vmatpush.msra.mxu0 %v3989
  %4090 = vmatmul.f32.gmra.mxu0 %v3953
  %v4091 = vpop.f32.mrf.mxu0
  %v4092 = vadd.f32 %v4054, %v4091
  %4093 = vmatmul.f32.gmra.mxu0 %v3956
  %v4094 = vpop.f32.mrf.mxu0
  %v4095 = vadd.f32 %v4057, %v4094
  %4096 = vmatmul.f32.gmra.mxu0 %v3959
  %v4097 = vpop.f32.mrf.mxu0
  %v4098 = vadd.f32 %v4060, %v4097
  %4099 = vmatmul.f32.gmra.mxu0 %v3962
  %v4100 = vpop.f32.mrf.mxu0
  %v4101 = vadd.f32 %v4063, %v4100
  %4102 = vmatmul.f32.gmra.mxu0 %v3965
  %v4103 = vpop.f32.mrf.mxu0
  %v4104 = vadd.f32 %v4066, %v4103
  %4105 = vmatmul.f32.gmra.mxu0 %v3968
  %v4106 = vpop.f32.mrf.mxu0
  %v4107 = vadd.f32 %v4069, %v4106
  %4108 = vmatmul.f32.gmra.mxu0 %v3971
  %v4109 = vpop.f32.mrf.mxu0
  %v4110 = vadd.f32 %v4072, %v4109
  %4111 = vdwg.mxu0
  %4112 = vmatpush.msra.mxu0 0.0
  %4113 = vmatpush.msra.mxu0 0.0
  %4114 = vmatpush.msra.mxu0 0.0
  %4115 = vmatpush.msra.mxu0 0.0
  %4116 = vmatpush.msra.mxu0 0.0
  %4117 = vmatpush.msra.mxu0 0.0
  %4118 = vmatpush.msra.mxu0 0.0
  %4119 = vmatpush.msra.mxu0 0.0
  %4120 = vmatpush.msra.mxu0 0.0
  %4121 = vmatpush.msra.mxu0 0.0
  %4122 = vmatpush.msra.mxu0 %v4034
  %4123 = vmatpush.msra.mxu0 %v4009
  %4124 = vmatpush.msra.mxu0 %v4008
  %4125 = vmatpush.msra.mxu0 %v4007
  %4126 = vmatpush.msra.mxu0 %v4006
  %4127 = vmatpush.msra.mxu0 %v4005
  %4128 = vmatmul.f32.gmra.mxu0 %v4013
  %v4129 = vpop.f32.mrf.mxu0
  %v4130 = vadd.f32 %v4092, %v4129
  %4131 = vmatmul.f32.gmra.mxu0 %v4016
  %v4132 = vpop.f32.mrf.mxu0
  %v4133 = vadd.f32 %v4095, %v4132
  %4134 = vmatmul.f32.gmra.mxu0 %v4019
  %v4135 = vpop.f32.mrf.mxu0
  %v4136 = vadd.f32 %v4098, %v4135
  %4137 = vmatmul.f32.gmra.mxu0 %v4022
  %v4138 = vpop.f32.mrf.mxu0
  %v4139 = vadd.f32 %v4101, %v4138
  %4140 = vmatmul.f32.gmra.mxu0 %v4025
  %v4141 = vpop.f32.mrf.mxu0
  %v4142 = vadd.f32 %v4104, %v4141
  %4143 = vmatmul.f32.gmra.mxu0 %v4028
  %v4144 = vpop.f32.mrf.mxu0
  %v4145 = vadd.f32 %v4107, %v4144
  %4146 = vmatmul.f32.gmra.mxu0 %v4031
  %v4147 = vpop.f32.mrf.mxu0
  %v4148 = vadd.f32 %v4110, %v4147
  %4149 = vdwg.mxu0
  %v4150 = vld [vmem:[%s6] sm:$0x1]
  %v4151 = vld [vmem:[%s7] sm:$0x1]
  %vm4152 = vcmask 195584
  %v4153 = vsel %vm4152, %v4130, 0.0
  %v4154 = vsel %vm4152, %v4133, 0.0
  %v4155 = vadd.f32 %v4153, %v4154
  %v4156 = vsel %vm4152, %v4136, 0.0
  %v4157 = vadd.f32 %v4155, %v4156
  %v4158 = vsel %vm4152, %v4139, 0.0
  %v4159 = vadd.f32 %v4157, %v4158
  %v4160 = vsel %vm4152, %v4142, 0.0
  %v4161 = vadd.f32 %v4159, %v4160
  %v4162 = vsel %vm4152, %v4145, 0.0
  %v4163 = vadd.f32 %v4161, %v4162
  %vm4164 = vcmask 189440
  %v4165 = vsel %vm4164, %v4148, 0.0
  %v4166 = vadd.f32 %v4163, %v4165
  %v4167 = vrot.slane %v4166, 4
  %v4168 = vadd.f32 %v4166, %v4167
  %v4169 = vrot.slane %v4168, 2
  %v4170 = vadd.f32 %v4168, %v4169
  %v4171 = vrot.slane %v4170, 1
  %v4172 = vadd.f32 %v4170, %v4171
  %v4173 = vrcp.pop 50.0
  %v4174 = vmul.f32 50.0, %v4173
  %v4175 = vsub.f32 1.0, %v4174
  %v4176 = vmul.f32 %v4173, %v4175
  %v4177 = vadd.f32 %v4173, %v4176
  %vm4178 = vweird.f32 %v4173
  %v4179 = vsel %vm4178, %v4173, %v4177
  %v4180 = vmul.f32 %v4172, %v4179
  %v4181 = vsub.f32 %v4130, %v4180
  %v4182 = vsub.f32 %v4133, %v4180
  %v4183 = vsub.f32 %v4136, %v4180
  %v4184 = vsub.f32 %v4139, %v4180
  %v4185 = vsub.f32 %v4142, %v4180
  %v4186 = vsub.f32 %v4145, %v4180
  %v4187 = vsub.f32 %v4148, %v4180
  %v4188 = vmul.f32 %v4181, %v4181
  %v4189 = vmul.f32 %v4182, %v4182
  %v4190 = vmul.f32 %v4183, %v4183
  %v4191 = vmul.f32 %v4184, %v4184
  %v4192 = vmul.f32 %v4185, %v4185
  %v4193 = vmul.f32 %v4186, %v4186
  %v4194 = vmul.f32 %v4187, %v4187
  %v4195 = vsel %vm4152, %v4188, 0.0
  %v4196 = vsel %vm4152, %v4189, 0.0
  %v4197 = vadd.f32 %v4195, %v4196
  %v4198 = vsel %vm4152, %v4190, 0.0
  %v4199 = vadd.f32 %v4197, %v4198
  %v4200 = vsel %vm4152, %v4191, 0.0
  %v4201 = vadd.f32 %v4199, %v4200
  %v4202 = vsel %vm4152, %v4192, 0.0
  %v4203 = vadd.f32 %v4201, %v4202
  %v4204 = vsel %vm4152, %v4193, 0.0
  %v4205 = vadd.f32 %v4203, %v4204
  %v4206 = vsel %vm4164, %v4194, 0.0
  %v4207 = vadd.f32 %v4205, %v4206
  %v4208 = vrot.slane %v4207, 4
  %v4209 = vadd.f32 %v4207, %v4208
  %v4210 = vrot.slane %v4209, 2
  %v4211 = vadd.f32 %v4209, %v4210
  %v4212 = vrot.slane %v4211, 1
  %v4213 = vadd.f32 %v4211, %v4212
  %v4214 = vmul.f32 %v4213, %v4179
  %v4215 = vadd.f32 %v4214, 1e-05
  %v4216 = vrsqrt.pop %v4215
  %v4217 = vmul.f32 %v4216, %v4215
  %v4218 = vmul.f32 %v4217, %v4216
  %v4219 = vmul.f32 0.5, %v4218
  %v4220 = vsub.f32 1.5, %v4219
  %v4221 = vmul.f32 %v4216, %v4220
  %vm4222 = vweird.f32 %v4215
  %vm4223 = vweird.f32 %v4216
  %vm4224 = vmor %vm4222, %vm4223
  %v4225 = vsel %vm4224, %v4216, %v4221
  %v4226 = vmul.f32 %v4150, %v4225
  %v4228 = vperm.slane %v4226, 0
  %v4230 = vmul.f32 %v4181, %v4228
  %v4231 = vmul.f32 %v4182, %v4228
  %v4232 = vmul.f32 %v4183, %v4228
  %v4233 = vmul.f32 %v4184, %v4228
  %v4234 = vmul.f32 %v4185, %v4228
  %v4235 = vmul.f32 %v4186, %v4228
  %v4236 = vmul.f32 %v4187, %v4228
  %v4238 = vperm.slane %v4151, 0
  %v4240 = vadd.f32 %v4230, %v4238
  %v4241 = vadd.f32 %v4231, %v4238
  %v4242 = vadd.f32 %v4232, %v4238
  %v4243 = vadd.f32 %v4233, %v4238
  %v4244 = vadd.f32 %v4234, %v4238
  %v4245 = vadd.f32 %v4235, %v4238
  %v4246 = vadd.f32 %v4236, %v4238
  %vm4247 = vcmp.gt.f32.partialorder %v4240, 0.0
  %vm4248 = vcmp.gt.f32.partialorder %v4241, 0.0
  %vm4249 = vcmp.gt.f32.partialorder %v4242, 0.0
  %vm4250 = vcmp.gt.f32.partialorder %v4243, 0.0
  %vm4251 = vcmp.gt.f32.partialorder %v4244, 0.0
  %vm4252 = vcmp.gt.f32.partialorder %v4245, 0.0
  %vm4253 = vcmp.gt.f32.partialorder %v4246, 0.0
  %v4254 = vmul.f32 %v4240, 0.2
  %v4255 = vmul.f32 %v4241, 0.2
  %v4256 = vmul.f32 %v4242, 0.2
  %v4257 = vmul.f32 %v4243, 0.2
  %v4258 = vmul.f32 %v4244, 0.2
  %v4259 = vmul.f32 %v4245, 0.2
  %v4260 = vmul.f32 %v4246, 0.2
  %v4261 = vsel %vm4247, %v4240, %v4254
  %v4262 = vsel %vm4248, %v4241, %v4255
  %v4263 = vsel %vm4249, %v4242, %v4256
  %v4264 = vsel %vm4250, %v4243, %v4257
  %v4265 = vsel %vm4251, %v4244, %v4258
  %v4266 = vsel %vm4252, %v4245, %v4259
  %v4267 = vsel %vm4253, %v4246, %v4260
  %vm4268 = vcmask 188416
  %4269 = vst.msk [vmem:[#allocation3] sm:$0x1] %vm4268, %v4261
  %v4271 = vrot.slane %v4261, 7
  %v4272 = vrot.slane %v4271, 2
  %4273 = vrot.lane.b32.xlu0 %v4272, 24
  %v4274 = vpop.permute.xlu0 %4273
  %vm4276 = vcmask 385216
  %4277 = vst.msk [vmem:[#allocation3] sm:$0x1] %vm4276, %v4274
  %4278 = vst.sshfl [vmem:[#allocation1] sm:$0xff pattern:$0x73625140] %v4261
  %s4279 = scalar_lea.vmem [#allocation1], 1
  %v4280 = vld [vmem:[%s4279] ss:$4 sm:$0xff]
  %4281 = vrot.lane.b32.xlu0 %v4280, 48
  %v4282 = vpop.permute.xlu0 %4281
  %vm4284 = vcmask 582016
  %4285 = vst.msk [vmem:[#allocation3] sm:$0x1] %vm4284, %v4282
  %4286 = vst.sshfl [vmem:[#allocation1] sm:$0xff pattern:$0x73625140] %v4261
  %s4287 = scalar_lea.vmem [#allocation1], 1
  %v4288 = vld [vmem:[%s4287] ss:$4 sm:$0xff]
  %v4289 = vrot.slane %v4288, 7
  %v4290 = vrot.slane %v4289, 2
  %4291 = vrot.lane.b32.xlu0 %v4290, 72
  %v4292 = vpop.permute.xlu0 %4291
  %vm4294 = vcmask 778816
  %4295 = vst.msk [vmem:[#allocation3] sm:$0x1] %vm4294, %v4292
  %4296 = vst.sshfl [vmem:[#allocation1] sm:$0xff pattern:$0x73625140] %v4261
  %s4297 = scalar_lea.vmem [#allocation1], 2
  %v4298 = vld [vmem:[%s4297] ss:$4 sm:$0xff]
  %4299 = vrot.lane.b32.xlu0 %v4298, 96
  %v4300 = vpop.permute.xlu0 %4299
  %vm4302 = vcmask 975616
  %4303 = vst.msk [vmem:[#allocation3] sm:$0x1] %vm4302, %v4300
  %4304 = vst.sshfl [vmem:[#allocation1] sm:$0xff pattern:$0x73625140] %v4261
  %s4305 = scalar_lea.vmem [#allocation1], 2
  %v4306 = vld [vmem:[%s4305] ss:$4 sm:$0xff]
  %v4307 = vrot.slane %v4306, 7
  %v4308 = vrot.slane %v4307, 2
  %4309 = vrot.lane.b32.xlu0 %v4308, 120
  %v4310 = vpop.permute.xlu0 %4309
  %v4311 = vrot.slane %v4310, 6
  %vm4312 = vcmask 982016
  %v4313 = vsel %vm4312, %v4311, %v4310
  %vm4315 = vcmask 124930
  %vm4316 = vmor %vm4315, %vm2268
  %4317 = vst.msk [vmem:[#allocation3] sm:$0x5] %vm4316, %v4313
  %4318 = vst.sshfl [vmem:[#allocation1] sm:$0xff pattern:$0x73625140] %v4261
  %s4319 = scalar_lea.vmem [#allocation1], 3
  %v4320 = vld [vmem:[%s4319] ss:$4 sm:$0xff]
  %4321 = vrot.lane.b32.xlu0 %v4320, 16
  %v4322 = vpop.permute.xlu0 %4321
  %vm4324 = vcmask 319616
  %4325 = vst.msk [vmem:[#allocation3 + $0x2] sm:$0x1] %vm4324, %v4322
  %4326 = vst.sshfl [vmem:[#allocation1] sm:$0xff pattern:$0x73625140] %v4261
  %s4327 = scalar_lea.vmem [#allocation1], 3
  %v4328 = vld [vmem:[%s4327] ss:$4 sm:$0xff]
  %v4329 = vrot.slane %v4328, 7
  %v4330 = vrot.slane %v4329, 2
  %4331 = vrot.lane.b32.xlu0 %v4330, 40
  %v4332 = vpop.permute.xlu0 %4331
  %vm4334 = vcmask 516416
  %4335 = vst.msk [vmem:[#allocation3 + $0x2] sm:$0x1] %vm4334, %v4332
  %4337 = vrot.lane.b32.xlu0 %v4262, 64
  %v4338 = vpop.permute.xlu0 %4337
  %vm4340 = vcmask 713216
  %4341 = vst.msk [vmem:[#allocation3 + $0x2] sm:$0x1] %vm4340, %v4338
  %v4342 = vrot.slane %v4262, 7
  %v4343 = vrot.slane %v4342, 2
  %4344 = vrot.lane.b32.xlu0 %v4343, 88
  %v4345 = vpop.permute.xlu0 %4344
  %vm4347 = vcmask 910016
  %4348 = vst.msk [vmem:[#allocation3 + $0x2] sm:$0x1] %vm4347, %v4345
  %4349 = vst.sshfl [vmem:[#allocation1] sm:$0xff pattern:$0x73625140] %v4262
  %s4350 = scalar_lea.vmem [#allocation1], 1
  %v4351 = vld [vmem:[%s4350] ss:$4 sm:$0xff]
  %4352 = vrot.lane.b32.xlu0 %v4351, 112
  %v4353 = vpop.permute.xlu0 %4352
  %v4354 = vrot.slane %v4353, 6
  %vm4355 = vcmask 916480
  %v4356 = vsel %vm4355, %v4354, %v4353
  %vm4358 = vcmask 1041280
  %vm4359 = vcmask 59394
  %vm4360 = vmor %vm4359, %vm4358
  %4361 = vst.msk [vmem:[#allocation3 + $0x2] sm:$0x5] %vm4360, %v4356
  %4362 = vst.sshfl [vmem:[#allocation1] sm:$0xff pattern:$0x73625140] %v4262
  %s4363 = scalar_lea.vmem [#allocation1], 1
  %v4364 = vld [vmem:[%s4363] ss:$4 sm:$0xff]
  %v4365 = vrot.slane %v4364, 7
  %v4366 = vrot.slane %v4365, 2
  %4367 = vrot.lane.b32.xlu0 %v4366, 8
  %v4368 = vpop.permute.xlu0 %4367
  %vm4370 = vcmask 254016
  %4371 = vst.msk [vmem:[#allocation3 + $0x4] sm:$0x1] %vm4370, %v4368
  %4372 = vst.sshfl [vmem:[#allocation1] sm:$0xff pattern:$0x73625140] %v4262
  %s4373 = scalar_lea.vmem [#allocation1], 2
  %v4374 = vld [vmem:[%s4373] ss:$4 sm:$0xff]
  %4375 = vrot.lane.b32.xlu0 %v4374, 32
  %v4376 = vpop.permute.xlu0 %4375
  %vm4378 = vcmask 450816
  %4379 = vst.msk [vmem:[#allocation3 + $0x4] sm:$0x1] %vm4378, %v4376
  %4380 = vst.sshfl [vmem:[#allocation1] sm:$0xff pattern:$0x73625140] %v4262
  %s4381 = scalar_lea.vmem [#allocation1], 2
  %v4382 = vld [vmem:[%s4381] ss:$4 sm:$0xff]
  %v4383 = vrot.slane %v4382, 7
  %v4384 = vrot.slane %v4383, 2
  %4385 = vrot.lane.b32.xlu0 %v4384, 56
  %v4386 = vpop.permute.xlu0 %4385
  %vm4388 = vcmask 647616
  %4389 = vst.msk [vmem:[#allocation3 + $0x4] sm:$0x1] %vm4388, %v4386
  %4390 = vst.sshfl [vmem:[#allocation1] sm:$0xff pattern:$0x73625140] %v4262
  %s4391 = scalar_lea.vmem [#allocation1], 3
  %v4392 = vld [vmem:[%s4391] ss:$4 sm:$0xff]
  %4393 = vrot.lane.b32.xlu0 %v4392, 80
  %v4394 = vpop.permute.xlu0 %4393
  %vm4396 = vcmask 844416
  %4397 = vst.msk [vmem:[#allocation3 + $0x4] sm:$0x1] %vm4396, %v4394
  %4398 = vst.sshfl [vmem:[#allocation1] sm:$0xff pattern:$0x73625140] %v4262
  %s4399 = scalar_lea.vmem [#allocation1], 3
  %v4400 = vld [vmem:[%s4399] ss:$4 sm:$0xff]
  %v4401 = vrot.slane %v4400, 7
  %v4402 = vrot.slane %v4401, 2
  %4403 = vrot.lane.b32.xlu0 %v4402, 104
  %v4404 = vpop.permute.xlu0 %4403
  %vm4406 = vcmask 1041216
  %4407 = vst.msk [vmem:[#allocation3 + $0x4] sm:$0x1] %vm4406, %v4404
  %4408 = vst.msk [vmem:[#allocation3 + $0x6] sm:$0x1] %vm4268, %v4263
  %v4410 = vrot.slane %v4263, 7
  %v4411 = vrot.slane %v4410, 2
  %4412 = vrot.lane.b32.xlu0 %v4411, 24
  %v4413 = vpop.permute.xlu0 %4412
  %4415 = vst.msk [vmem:[#allocation3 + $0x6] sm:$0x1] %vm4276, %v4413
  %4416 = vst.sshfl [vmem:[#allocation1] sm:$0xff pattern:$0x73625140] %v4263
  %s4417 = scalar_lea.vmem [#allocation1], 1
  %v4418 = vld [vmem:[%s4417] ss:$4 sm:$0xff]
  %4419 = vrot.lane.b32.xlu0 %v4418, 48
  %v4420 = vpop.permute.xlu0 %4419
  %4422 = vst.msk [vmem:[#allocation3 + $0x6] sm:$0x1] %vm4284, %v4420
  %4423 = vst.sshfl [vmem:[#allocation1] sm:$0xff pattern:$0x73625140] %v4263
  %s4424 = scalar_lea.vmem [#allocation1], 1
  %v4425 = vld [vmem:[%s4424] ss:$4 sm:$0xff]
  %v4426 = vrot.slane %v4425, 7
  %v4427 = vrot.slane %v4426, 2
  %4428 = vrot.lane.b32.xlu0 %v4427, 72
  %v4429 = vpop.permute.xlu0 %4428
  %4431 = vst.msk [vmem:[#allocation3 + $0x6] sm:$0x1] %vm4294, %v4429
  %4432 = vst.sshfl [vmem:[#allocation1] sm:$0xff pattern:$0x73625140] %v4263
  %s4433 = scalar_lea.vmem [#allocation1], 2
  %v4434 = vld [vmem:[%s4433] ss:$4 sm:$0xff]
  %4435 = vrot.lane.b32.xlu0 %v4434, 96
  %v4436 = vpop.permute.xlu0 %4435
  %4438 = vst.msk [vmem:[#allocation3 + $0x6] sm:$0x1] %vm4302, %v4436
  %4439 = vst.sshfl [vmem:[#allocation1] sm:$0xff pattern:$0x73625140] %v4263
  %s4440 = scalar_lea.vmem [#allocation1], 2
  %v4441 = vld [vmem:[%s4440] ss:$4 sm:$0xff]
  %v4442 = vrot.slane %v4441, 7
  %v4443 = vrot.slane %v4442, 2
  %4444 = vrot.lane.b32.xlu0 %v4443, 120
  %v4445 = vpop.permute.xlu0 %4444
  %v4446 = vrot.slane %v4445, 6
  %v4447 = vsel %vm4312, %v4446, %v4445
  %4449 = vst.msk [vmem:[#allocation3 + $0x6] sm:$0x5] %vm4316, %v4447
  %4450 = vst.sshfl [vmem:[#allocation1] sm:$0xff pattern:$0x73625140] %v4263
  %s4451 = scalar_lea.vmem [#allocation1], 3
  %v4452 = vld [vmem:[%s4451] ss:$4 sm:$0xff]
  %4453 = vrot.lane.b32.xlu0 %v4452, 16
  %v4454 = vpop.permute.xlu0 %4453
  %4456 = vst.msk [vmem:[#allocation3 + $0x8] sm:$0x1] %vm4324, %v4454
  %4457 = vst.sshfl [vmem:[#allocation1] sm:$0xff pattern:$0x73625140] %v4263
  %s4458 = scalar_lea.vmem [#allocation1], 3
  %v4459 = vld [vmem:[%s4458] ss:$4 sm:$0xff]
  %v4460 = vrot.slane %v4459, 7
  %v4461 = vrot.slane %v4460, 2
  %4462 = vrot.lane.b32.xlu0 %v4461, 40
  %v4463 = vpop.permute.xlu0 %4462
  %4465 = vst.msk [vmem:[#allocation3 + $0x8] sm:$0x1] %vm4334, %v4463
  %4467 = vrot.lane.b32.xlu0 %v4264, 64
  %v4468 = vpop.permute.xlu0 %4467
  %4470 = vst.msk [vmem:[#allocation3 + $0x8] sm:$0x1] %vm4340, %v4468
  %v4471 = vrot.slane %v4264, 7
  %v4472 = vrot.slane %v4471, 2
  %4474 = vst.msk [vmem:[#allocation3 + $0x1] sm:$0x1] %vm4268, %v4472
  %4475 = vst.sshfl [vmem:[#allocation1] sm:$0xff pattern:$0x73625140] %v4264
  %s4476 = scalar_lea.vmem [#allocation1], 1
  %v4477 = vld [vmem:[%s4476] ss:$4 sm:$0xff]
  %4478 = vrot.lane.b32.xlu0 %v4477, 24
  %v4479 = vpop.permute.xlu0 %4478
  %4481 = vst.msk [vmem:[#allocation3 + $0x1] sm:$0x1] %vm4276, %v4479
  %4482 = vst.sshfl [vmem:[#allocation1] sm:$0xff pattern:$0x73625140] %v4264
  %s4483 = scalar_lea.vmem [#allocation1], 1
  %v4484 = vld [vmem:[%s4483] ss:$4 sm:$0xff]
  %v4485 = vrot.slane %v4484, 7
  %v4486 = vrot.slane %v4485, 2
  %4487 = vrot.lane.b32.xlu0 %v4486, 48
  %v4488 = vpop.permute.xlu0 %4487
  %4490 = vst.msk [vmem:[#allocation3 + $0x1] sm:$0x1] %vm4284, %v4488
  %4491 = vst.sshfl [vmem:[#allocation1] sm:$0xff pattern:$0x73625140] %v4264
  %s4492 = scalar_lea.vmem [#allocation1], 2
  %v4493 = vld [vmem:[%s4492] ss:$4 sm:$0xff]
  %4494 = vrot.lane.b32.xlu0 %v4493, 72
  %v4495 = vpop.permute.xlu0 %4494
  %4497 = vst.msk [vmem:[#allocation3 + $0x1] sm:$0x1] %vm4294, %v4495
  %4498 = vst.sshfl [vmem:[#allocation1] sm:$0xff pattern:$0x73625140] %v4264
  %s4499 = scalar_lea.vmem [#allocation1], 2
  %v4500 = vld [vmem:[%s4499] ss:$4 sm:$0xff]
  %v4501 = vrot.slane %v4500, 7
  %v4502 = vrot.slane %v4501, 2
  %4503 = vrot.lane.b32.xlu0 %v4502, 96
  %v4504 = vpop.permute.xlu0 %4503
  %4506 = vst.msk [vmem:[#allocation3 + $0x1] sm:$0x1] %vm4302, %v4504
  %4507 = vst.sshfl [vmem:[#allocation1] sm:$0xff pattern:$0x73625140] %v4264
  %s4508 = scalar_lea.vmem [#allocation1], 3
  %v4509 = vld [vmem:[%s4508] ss:$4 sm:$0xff]
  %4510 = vrot.lane.b32.xlu0 %v4509, 120
  %v4511 = vpop.permute.xlu0 %4510
  %v4512 = vrot.slane %v4511, 6
  %v4513 = vsel %vm4312, %v4512, %v4511
  %4515 = vst.msk [vmem:[#allocation3 + $0x1] sm:$0x5] %vm4316, %v4513
  %4516 = vst.sshfl [vmem:[#allocation1] sm:$0xff pattern:$0x73625140] %v4264
  %s4517 = scalar_lea.vmem [#allocation1], 3
  %v4518 = vld [vmem:[%s4517] ss:$4 sm:$0xff]
  %v4519 = vrot.slane %v4518, 7
  %v4520 = vrot.slane %v4519, 2
  %4521 = vrot.lane.b32.xlu0 %v4520, 16
  %v4522 = vpop.permute.xlu0 %4521
  %4524 = vst.msk [vmem:[#allocation3 + $0x3] sm:$0x1] %vm4324, %v4522
  %4526 = vrot.lane.b32.xlu0 %v4265, 40
  %v4527 = vpop.permute.xlu0 %4526
  %4529 = vst.msk [vmem:[#allocation3 + $0x3] sm:$0x1] %vm4334, %v4527
  %v4530 = vrot.slane %v4265, 7
  %v4531 = vrot.slane %v4530, 2
  %4532 = vrot.lane.b32.xlu0 %v4531, 64
  %v4533 = vpop.permute.xlu0 %4532
  %4535 = vst.msk [vmem:[#allocation3 + $0x3] sm:$0x1] %vm4340, %v4533
  %4536 = vst.sshfl [vmem:[#allocation1] sm:$0xff pattern:$0x73625140] %v4265
  %s4537 = scalar_lea.vmem [#allocation1], 1
  %v4538 = vld [vmem:[%s4537] ss:$4 sm:$0xff]
  %4539 = vrot.lane.b32.xlu0 %v4538, 88
  %v4540 = vpop.permute.xlu0 %4539
  %4542 = vst.msk [vmem:[#allocation3 + $0x3] sm:$0x1] %vm4347, %v4540
  %4543 = vst.sshfl [vmem:[#allocation1] sm:$0xff pattern:$0x73625140] %v4265
  %s4544 = scalar_lea.vmem [#allocation1], 1
  %v4545 = vld [vmem:[%s4544] ss:$4 sm:$0xff]
  %v4546 = vrot.slane %v4545, 7
  %v4547 = vrot.slane %v4546, 2
  %4548 = vrot.lane.b32.xlu0 %v4547, 112
  %v4549 = vpop.permute.xlu0 %4548
  %v4550 = vrot.slane %v4549, 6
  %v4551 = vsel %vm4355, %v4550, %v4549
  %4553 = vst.msk [vmem:[#allocation3 + $0x3] sm:$0x5] %vm4360, %v4551
  %4554 = vst.sshfl [vmem:[#allocation1] sm:$0xff pattern:$0x73625140] %v4265
  %s4555 = scalar_lea.vmem [#allocation1], 2
  %v4556 = vld [vmem:[%s4555] ss:$4 sm:$0xff]
  %4557 = vrot.lane.b32.xlu0 %v4556, 8
  %v4558 = vpop.permute.xlu0 %4557
  %4560 = vst.msk [vmem:[#allocation3 + $0x5] sm:$0x1] %vm4370, %v4558
  %4561 = vst.sshfl [vmem:[#allocation1] sm:$0xff pattern:$0x73625140] %v4265
  %s4562 = scalar_lea.vmem [#allocation1], 2
  %v4563 = vld [vmem:[%s4562] ss:$4 sm:$0xff]
  %v4564 = vrot.slane %v4563, 7
  %v4565 = vrot.slane %v4564, 2
  %4566 = vrot.lane.b32.xlu0 %v4565, 32
  %v4567 = vpop.permute.xlu0 %4566
  %4569 = vst.msk [vmem:[#allocation3 + $0x5] sm:$0x1] %vm4378, %v4567
  %4570 = vst.sshfl [vmem:[#allocation1] sm:$0xff pattern:$0x73625140] %v4265
  %s4571 = scalar_lea.vmem [#allocation1], 3
  %v4572 = vld [vmem:[%s4571] ss:$4 sm:$0xff]
  %4573 = vrot.lane.b32.xlu0 %v4572, 56
  %v4574 = vpop.permute.xlu0 %4573
  %4576 = vst.msk [vmem:[#allocation3 + $0x5] sm:$0x1] %vm4388, %v4574
  %4577 = vst.sshfl [vmem:[#allocation1] sm:$0xff pattern:$0x73625140] %v4265
  %s4578 = scalar_lea.vmem [#allocation1], 3
  %v4579 = vld [vmem:[%s4578] ss:$4 sm:$0xff]
  %v4580 = vrot.slane %v4579, 7
  %v4581 = vrot.slane %v4580, 2
  %4582 = vrot.lane.b32.xlu0 %v4581, 80
  %v4583 = vpop.permute.xlu0 %4582
  %4585 = vst.msk [vmem:[#allocation3 + $0x5] sm:$0x1] %vm4396, %v4583
  %4587 = vrot.lane.b32.xlu0 %v4266, 104
  %v4588 = vpop.permute.xlu0 %4587
  %4590 = vst.msk [vmem:[#allocation3 + $0x5] sm:$0x1] %vm4406, %v4588
  %v4591 = vrot.slane %v4266, 7
  %v4592 = vrot.slane %v4591, 2
  %4594 = vst.msk [vmem:[#allocation3 + $0x7] sm:$0x1] %vm4268, %v4592
  %4595 = vst.sshfl [vmem:[#allocation1] sm:$0xff pattern:$0x73625140] %v4266
  %s4596 = scalar_lea.vmem [#allocation1], 1
  %v4597 = vld [vmem:[%s4596] ss:$4 sm:$0xff]
  %4598 = vrot.lane.b32.xlu0 %v4597, 24
  %v4599 = vpop.permute.xlu0 %4598
  %4601 = vst.msk [vmem:[#allocation3 + $0x7] sm:$0x1] %vm4276, %v4599
  %4602 = vst.sshfl [vmem:[#allocation1] sm:$0xff pattern:$0x73625140] %v4266
  %s4603 = scalar_lea.vmem [#allocation1], 1
  %v4604 = vld [vmem:[%s4603] ss:$4 sm:$0xff]
  %v4605 = vrot.slane %v4604, 7
  %v4606 = vrot.slane %v4605, 2
  %4607 = vrot.lane.b32.xlu0 %v4606, 48
  %v4608 = vpop.permute.xlu0 %4607
  %4610 = vst.msk [vmem:[#allocation3 + $0x7] sm:$0x1] %vm4284, %v4608
  %4611 = vst.sshfl [vmem:[#allocation1] sm:$0xff pattern:$0x73625140] %v4266
  %s4612 = scalar_lea.vmem [#allocation1], 2
  %v4613 = vld [vmem:[%s4612] ss:$4 sm:$0xff]
  %4614 = vrot.lane.b32.xlu0 %v4613, 72
  %v4615 = vpop.permute.xlu0 %4614
  %4617 = vst.msk [vmem:[#allocation3 + $0x7] sm:$0x1] %vm4294, %v4615
  %4618 = vst.sshfl [vmem:[#allocation1] sm:$0xff pattern:$0x73625140] %v4266
  %s4619 = scalar_lea.vmem [#allocation1], 2
  %v4620 = vld [vmem:[%s4619] ss:$4 sm:$0xff]
  %v4621 = vrot.slane %v4620, 7
  %v4622 = vrot.slane %v4621, 2
  %4623 = vrot.lane.b32.xlu0 %v4622, 96
  %v4624 = vpop.permute.xlu0 %4623
  %4626 = vst.msk [vmem:[#allocation3 + $0x7] sm:$0x1] %vm4302, %v4624
  %4627 = vst.sshfl [vmem:[#allocation1] sm:$0xff pattern:$0x73625140] %v4266
  %s4628 = scalar_lea.vmem [#allocation1], 3
  %v4629 = vld [vmem:[%s4628] ss:$4 sm:$0xff]
  %4630 = vrot.lane.b32.xlu0 %v4629, 120
  %v4631 = vpop.permute.xlu0 %4630
  %v4632 = vrot.slane %v4631, 6
  %v4633 = vsel %vm4312, %v4632, %v4631
  %4635 = vst.msk [vmem:[#allocation3 + $0x7] sm:$0x5] %vm4316, %v4633
  %4636 = vst.sshfl [vmem:[#allocation1] sm:$0xff pattern:$0x73625140] %v4266
  %s4637 = scalar_lea.vmem [#allocation1], 3
  %v4638 = vld [vmem:[%s4637] ss:$4 sm:$0xff]
  %v4639 = vrot.slane %v4638, 7
  %v4640 = vrot.slane %v4639, 2
  %4641 = vrot.lane.b32.xlu0 %v4640, 16
  %v4642 = vpop.permute.xlu0 %4641
  %4644 = vst.msk [vmem:[#allocation3 + $0x9] sm:$0x1] %vm4324, %v4642
  %4646 = vrot.lane.b32.xlu0 %v4267, 40
  %v4647 = vpop.permute.xlu0 %4646
  %4649 = vst.msk [vmem:[#allocation3 + $0x9] sm:$0x1] %vm4334, %v4647
  %v4650 = vrot.slane %v4267, 7
  %v4651 = vrot.slane %v4650, 2
  %4652 = vrot.lane.b32.xlu0 %v4651, 64
  %v4653 = vpop.permute.xlu0 %4652
  %4655 = vst.msk [vmem:[#allocation3 + $0x9] sm:$0x1] %vm4340, %v4653
  %v4656 = vld [vmem:[#allocation3] sm:$0xff]
  %v4657 = vld [vmem:[#allocation3 + $0x8] sm:$0x3]
  %v4658 = vld [vmem:[%s8] sm:$0xff]
  %v4659 = vld [vmem:[%s8 + $0x8] sm:$0xff]
  %v4660 = vld [vmem:[%s8 + $0x10] sm:$0xff]
  %v4661 = vld [vmem:[%s8 + $0x18] sm:$0xff]
  %v4662 = vld [vmem:[%s8 + $0x20] sm:$0xff]
  %v4663 = vld [vmem:[%s8 + $0x28] sm:$0xff]
  %v4664 = vld [vmem:[%s8 + $0x30] sm:$0xff]
  %v4665 = vld [vmem:[%s8 + $0x38] sm:$0xff]
  %v4666 = vld [vmem:[%s8 + $0x40] sm:$0xff]
  %v4667 = vld [vmem:[%s8 + $0x48] sm:$0xff]
  %v4668 = vld [vmem:[%s8 + $0x50] sm:$0xff]
  %v4669 = vld [vmem:[%s8 + $0x58] sm:$0xff]
  %v4670 = vld [vmem:[%s8 + $0x60] sm:$0xff]
  %v4671 = vld [vmem:[%s8 + $0x68] sm:$0xff]
  %v4672 = vld [vmem:[%s8 + $0x70] sm:$0xff]
  %v4673 = vld [vmem:[%s8 + $0x78] sm:$0xff]
  %v4674 = vld [vmem:[%s8 + $0x80] sm:$0xff]
  %v4675 = vld [vmem:[%s8 + $0x88] sm:$0xff]
  %v4676 = vld [vmem:[%s8 + $0x90] sm:$0xff]
  %v4677 = vld [vmem:[%s8 + $0x98] sm:$0xff]
  %v4678 = vld [vmem:[%s8 + $0xa0] sm:$0xff]
  %v4679 = vld [vmem:[%s8 + $0xa8] sm:$0xff]
  %v4680 = vld [vmem:[%s8 + $0xb0] sm:$0xff]
  %v4681 = vld [vmem:[%s8 + $0xb8] sm:$0xff]
  %v4682 = vld [vmem:[%s8 + $0xc0] sm:$0xff]
  %v4683 = vld [vmem:[%s8 + $0xc8] sm:$0xff]
  %v4684 = vld [vmem:[%s8 + $0xd0] sm:$0xff]
  %v4685 = vld [vmem:[%s8 + $0xd8] sm:$0xff]
  %v4686 = vld [vmem:[%s8 + $0xe0] sm:$0xff]
  %v4687 = vld [vmem:[%s8 + $0xe8] sm:$0xff]
  %v4688 = vld [vmem:[%s8 + $0xf0] sm:$0xff]
  %v4689 = vld [vmem:[%s8 + $0xf8] sm:$0xff]
  %v4690 = vld [vmem:[%s8 + $0x100] sm:$0xff]
  %v4691 = vld [vmem:[%s8 + $0x108] sm:$0xff]
  %v4692 = vld [vmem:[%s8 + $0x110] sm:$0xff]
  %v4693 = vld [vmem:[%s8 + $0x118] sm:$0xff]
  %v4694 = vld [vmem:[%s8 + $0x120] sm:$0xff]
  %v4695 = vld [vmem:[%s8 + $0x128] sm:$0xff]
  %v4696 = vld [vmem:[%s8 + $0x130] sm:$0xff]
  %v4697 = vld [vmem:[%s8 + $0x138] sm:$0xff]
  %v4698 = vld [vmem:[%s8 + $0x140] sm:$0xff]
  %v4699 = vld [vmem:[%s8 + $0x148] sm:$0xff]
  %v4700 = vld [vmem:[%s8 + $0x150] sm:$0xff]
  %v4701 = vld [vmem:[%s8 + $0x158] sm:$0xff]
  %v4702 = vld [vmem:[%s8 + $0x160] sm:$0xff]
  %v4703 = vld [vmem:[%s8 + $0x168] sm:$0xff]
  %v4704 = vld [vmem:[%s8 + $0x170] sm:$0xff]
  %v4705 = vld [vmem:[%s8 + $0x178] sm:$0xff]
  %v4706 = vld [vmem:[%s8 + $0x180] sm:$0xff]
  %v4707 = vld [vmem:[%s8 + $0x188] sm:$0xff]
  %v4708 = vld [vmem:[%s8 + $0x190] sm:$0xff]
  %v4709 = vld [vmem:[%s8 + $0x198] sm:$0xff]
  %v4710 = vld [vmem:[%s8 + $0x1a0] sm:$0xff]
  %v4711 = vld [vmem:[%s8 + $0x1a8] sm:$0xff]
  %v4712 = vld [vmem:[%s8 + $0x1b0] sm:$0xff]
  %v4713 = vld [vmem:[%s8 + $0x1b8] sm:$0xff]
  %v4714 = vld [vmem:[%s8 + $0x1c0] sm:$0xff]
  %v4715 = vld [vmem:[%s8 + $0x1c8] sm:$0xff]
  %v4716 = vld [vmem:[%s8 + $0x1d0] sm:$0xff]
  %v4717 = vld [vmem:[%s8 + $0x1d8] sm:$0xff]
  %v4718 = vld [vmem:[%s8 + $0x1e0] sm:$0xff]
  %v4719 = vld [vmem:[%s8 + $0x1e8] sm:$0xff]
  %v4720 = vld [vmem:[%s8 + $0x1f0] sm:$0xff]
  %v4721 = vld [vmem:[%s8 + $0x1f8] sm:$0xff]
  %v4722 = vld [vmem:[%s8 + $0x200] sm:$0xff]
  %v4723 = vld [vmem:[%s8 + $0x208] sm:$0xff]
  %v4724 = vld [vmem:[%s8 + $0x210] sm:$0xff]
  %v4725 = vld [vmem:[%s8 + $0x218] sm:$0xff]
  %v4726 = vld [vmem:[%s8 + $0x220] sm:$0xff]
  %v4727 = vld [vmem:[%s8 + $0x228] sm:$0xff]
  %v4728 = vld [vmem:[%s8 + $0x230] sm:$0xff]
  %v4729 = vld [vmem:[%s8 + $0x238] sm:$0xff]
  %v4730 = vld [vmem:[%s8 + $0x240] sm:$0xff]
  %v4731 = vld [vmem:[%s8 + $0x248] sm:$0xff]
  %v4732 = vld [vmem:[%s8 + $0x250] sm:$0xff]
  %4735 = vst [vmem:[#allocation1] ss:$4 sm:$0xff] %v4656
  %s4736 = scalar_lea.vmem [#allocation1], 32
  %4737 = vst [vmem:[%s4736] ss:$4 sm:$0xff] %v4657
  %v4738 = vld.sshfl [vmem:[#allocation1] sm:$0xff pattern:$0x73625140]
  %v4739 = vld.sshfl [vmem:[#allocation1 + $0x8] sm:$0xff pattern:$0x73625140]
  %v4740 = vld.sshfl [vmem:[#allocation1 + $0x10] sm:$0xff pattern:$0x73625140]
  %v4741 = vld.sshfl [vmem:[#allocation1 + $0x18] sm:$0xff pattern:$0x73625140]
  %v4742 = vld.sshfl [vmem:[#allocation1 + $0x20] sm:$0xff pattern:$0x73625140]
  %vm4747 = vcmask 719872
  %v4748 = vsel %vm4747, %v4742, 0
  %4750 = vmatpush.msra.mxu0 %v4673
  %4751 = vmatpush.msra.mxu0 %v4672
  %4752 = vmatpush.msra.mxu0 %v4671
  %4753 = vmatpush.msra.mxu0 %v4670
  %4754 = vmatpush.msra.mxu0 %v4669
  %4755 = vmatpush.msra.mxu0 %v4668
  %4756 = vmatpush.msra.mxu0 %v4667
  %4757 = vmatpush.msra.mxu0 %v4666
  %4758 = vmatpush.msra.mxu0 %v4665
  %4759 = vmatpush.msra.mxu0 %v4664
  %4760 = vmatpush.msra.mxu0 %v4663
  %4761 = vmatpush.msra.mxu0 %v4662
  %4762 = vmatpush.msra.mxu0 %v4661
  %4763 = vmatpush.msra.mxu0 %v4660
  %4764 = vmatpush.msra.mxu0 %v4659
  %4765 = vmatpush.msra.mxu0 %v4658
  %4766 = vmatmul.f32.gmra.mxu0 %v4738
  %v4767 = vpop.f32.mrf.mxu0
  %v4768 = vadd.f32 0.0, %v4767
  %4769 = vdwg.mxu0
  %4770 = vmatpush.msra.mxu0 %v4689
  %4771 = vmatpush.msra.mxu0 %v4688
  %4772 = vmatpush.msra.mxu0 %v4687
  %4773 = vmatpush.msra.mxu0 %v4686
  %4774 = vmatpush.msra.mxu0 %v4685
  %4775 = vmatpush.msra.mxu0 %v4684
  %4776 = vmatpush.msra.mxu0 %v4683
  %4777 = vmatpush.msra.mxu0 %v4682
  %4778 = vmatpush.msra.mxu0 %v4681
  %4779 = vmatpush.msra.mxu0 %v4680
  %4780 = vmatpush.msra.mxu0 %v4679
  %4781 = vmatpush.msra.mxu0 %v4678
  %4782 = vmatpush.msra.mxu0 %v4677
  %4783 = vmatpush.msra.mxu0 %v4676
  %4784 = vmatpush.msra.mxu0 %v4675
  %4785 = vmatpush.msra.mxu0 %v4674
  %4786 = vmatmul.f32.gmra.mxu0 %v4739
  %v4787 = vpop.f32.mrf.mxu0
  %v4788 = vadd.f32 %v4768, %v4787
  %4789 = vdwg.mxu0
  %4790 = vmatpush.msra.mxu0 %v4705
  %4791 = vmatpush.msra.mxu0 %v4704
  %4792 = vmatpush.msra.mxu0 %v4703
  %4793 = vmatpush.msra.mxu0 %v4702
  %4794 = vmatpush.msra.mxu0 %v4701
  %4795 = vmatpush.msra.mxu0 %v4700
  %4796 = vmatpush.msra.mxu0 %v4699
  %4797 = vmatpush.msra.mxu0 %v4698
  %4798 = vmatpush.msra.mxu0 %v4697
  %4799 = vmatpush.msra.mxu0 %v4696
  %4800 = vmatpush.msra.mxu0 %v4695
  %4801 = vmatpush.msra.mxu0 %v4694
  %4802 = vmatpush.msra.mxu0 %v4693
  %4803 = vmatpush.msra.mxu0 %v4692
  %4804 = vmatpush.msra.mxu0 %v4691
  %4805 = vmatpush.msra.mxu0 %v4690
  %4806 = vmatmul.f32.gmra.mxu0 %v4740
  %v4807 = vpop.f32.mrf.mxu0
  %v4808 = vadd.f32 %v4788, %v4807
  %4809 = vdwg.mxu0
  %4810 = vmatpush.msra.mxu0 %v4721
  %4811 = vmatpush.msra.mxu0 %v4720
  %4812 = vmatpush.msra.mxu0 %v4719
  %4813 = vmatpush.msra.mxu0 %v4718
  %4814 = vmatpush.msra.mxu0 %v4717
  %4815 = vmatpush.msra.mxu0 %v4716
  %4816 = vmatpush.msra.mxu0 %v4715
  %4817 = vmatpush.msra.mxu0 %v4714
  %4818 = vmatpush.msra.mxu0 %v4713
  %4819 = vmatpush.msra.mxu0 %v4712
  %4820 = vmatpush.msra.mxu0 %v4711
  %4821 = vmatpush.msra.mxu0 %v4710
  %4822 = vmatpush.msra.mxu0 %v4709
  %4823 = vmatpush.msra.mxu0 %v4708
  %4824 = vmatpush.msra.mxu0 %v4707
  %4825 = vmatpush.msra.mxu0 %v4706
  %4826 = vmatmul.f32.gmra.mxu0 %v4741
  %v4827 = vpop.f32.mrf.mxu0
  %v4828 = vadd.f32 %v4808, %v4827
  %4829 = vdwg.mxu0
  %4830 = vmatpush.msra.mxu0 0.0
  %4831 = vmatpush.msra.mxu0 0.0
  %4832 = vmatpush.msra.mxu0 0.0
  %4833 = vmatpush.msra.mxu0 0.0
  %4834 = vmatpush.msra.mxu0 0.0
  %4835 = vmatpush.msra.mxu0 %v4732
  %4836 = vmatpush.msra.mxu0 %v4731
  %4837 = vmatpush.msra.mxu0 %v4730
  %4838 = vmatpush.msra.mxu0 %v4729
  %4839 = vmatpush.msra.mxu0 %v4728
  %4840 = vmatpush.msra.mxu0 %v4727
  %4841 = vmatpush.msra.mxu0 %v4726
  %4842 = vmatpush.msra.mxu0 %v4725
  %4843 = vmatpush.msra.mxu0 %v4724
  %4844 = vmatpush.msra.mxu0 %v4723
  %4845 = vmatpush.msra.mxu0 %v4722
  %4846 = vmatmul.f32.gmra.mxu0 %v4748
  %v4847 = vpop.f32.mrf.mxu0
  %v4848 = vadd.f32 %v4828, %v4847
  %4849 = vdwg.mxu0
  %v4850 = vtanh.pop %v4848
  %v4851 = vld [vmem:[%s9] sm:$0xff]
  %v4852 = vld [vmem:[%s9 + $0x8] sm:$0xff]
  %v4853 = vld [vmem:[%s9 + $0x10] sm:$0xff]
  %v4854 = vld [vmem:[%s9 + $0x18] sm:$0xff]
  %v4855 = vld [vmem:[%s9 + $0x20] sm:$0xff]
  %v4856 = vld [vmem:[%s9 + $0x28] sm:$0xff]
  %v4857 = vld [vmem:[#allocation4] sm:$0x1]
  %v4859 = vperm.slane %v4857, 0
  %vm4861 = vcmask 392192
  %v4863 = vsel %vm4861, %v4850, 0
  %4865 = vmatpush.msra.mxu0 0.0
  %4866 = vmatpush.msra.mxu0 0.0
  %4867 = vmatpush.msra.mxu0 0.0
  %4868 = vmatpush.msra.mxu0 0.0
  %4869 = vmatpush.msra.mxu0 0.0
  %4870 = vmatpush.msra.mxu0 0.0
  %4871 = vmatpush.msra.mxu0 0.0
  %4872 = vmatpush.msra.mxu0 0.0
  %4873 = vmatpush.msra.mxu0 0.0
  %4874 = vmatpush.msra.mxu0 0.0
  %4875 = vmatpush.msra.mxu0 %v4856
  %4876 = vmatpush.msra.mxu0 %v4855
  %4877 = vmatpush.msra.mxu0 %v4854
  %4878 = vmatpush.msra.mxu0 %v4853
  %4879 = vmatpush.msra.mxu0 %v4852
  %4880 = vmatpush.msra.mxu0 %v4851
  %4881 = vmatmul.f32.gmra.mxu0 %v4863
  %v4882 = vpop.f32.mrf.mxu0
  %v4883 = vadd.f32 %v4859, %v4882
  %4884 = vdwg.mxu0
  %v4885 = vxor.u32 %v4883, 2147483648
  %v4886 = vmul.f32 %v4885, 1.442695
  %v4887 = vpow.pop %v4886
  %v4888 = vadd.f32 %v4887, 1.0
  %v4889 = vrcp.pop %v4888
  %v4890 = vmul.f32 %v4888, %v4889
  %v4891 = vsub.f32 1.0, %v4890
  %v4892 = vmul.f32 %v4889, %v4891
  %v4893 = vadd.f32 %v4889, %v4892
  %vm4894 = vweird.f32 %v4888
  %vm4895 = vweird.f32 %v4889
  %vm4896 = vmor %vm4894, %vm4895
  %v4897 = vsel %vm4896, %v4889, %v4893
  %v4898 = vand.u32 2147483647, %v4888
  %vm4899 = vcmp.eq.f32.partialorder %v4898, 8.507059e+37
  %v4900 = vand.u32 %v4888, 2147483648
  %v4901 = vor.u32 1.1754944e-38, %v4900
  %v4902 = vsel %vm4899, %v4901, %v4897
  %v4903 = vmul.f32 1.0, %v4902
  %vm4904 = vcmask 1024
  %4905 = vst.msk [vmem:[%s11] sm:$0x3] %vm4904, %v4903
  // Predicated region
  $region46: #{dv_forward.1} parent=0 // pred_check
    _
  $region47: #{dv_forward.1} parent=0 // pred_check_branch
    %4907 = sbr.rel (0) target = $region49
  $region48: #{dv_forward.1} parent=0 // pred_region
    _
  $region49: #{dv_forward.1} parent=0 // pred_fallthru
    _
  // Predicated region
  $region50: #{dv_forward.1} parent=0 // pred_check
    _
  $region51: #{dv_forward.1} parent=0 // pred_check_branch
    %4909 = sbr.rel (0) target = $region53
  $region52: #{dv_forward.1} parent=0 // pred_region
    _
  $region53: #{dv_forward.1} parent=0 // pred_fallthru
    _

</llo_original>
